<compile_context>
chip_gen: v6e
topology: v6e:2x2x1
jax: 0.10.0
libtpu: 0.0.40
codegen_flags: <defaults>
</compile_context>

<pallas_src>
import math
from functools import partial

import numpy as np
import jax
import jax.numpy as jnp
from jax.experimental import pallas as pl
from jax.experimental.pallas import tpu as pltpu


# ------------------------------ fused kernel --------------------------------

def _disc_fwd_kernel(xf_ref, bpe_ref, w_in_ref,
                     wqkv_ref, bqkv_ref, wo_ref, bo_ref,
                     ln1g_ref, ln1b_ref, w1_ref, b1_ref, w2_ref, b2_ref,
                     ln2g_ref, ln2b_ref, wh_ref,
                     out_ref, ctx_scr,
                     *, batch_block, seq_len, nr_heads, eps):
    """Whole Discriminator forward for `batch_block` batch elements, VMEM-resident.

    Rows are (batch, seq) flattened: all non-attention matmuls are single wide
    2-D MXU ops; only the score/context step is per-(batch, head).
    """
    Bb, S, H = batch_block, seq_len, nr_heads
    D = w_in_ref.shape[1]
    dh = D // H
    L = wqkv_ref.shape[0]

    # --- linear_input + (bias + positional encoding) additive table ---
    x = (jnp.dot(xf_ref[...], w_in_ref[...], preferred_element_type=jnp.float32)
         + bpe_ref[...])                                                   # (Bb*S, D)

    def layer_norm(y, g, b):
        mu = jnp.mean(y, axis=-1, keepdims=True)
        var = jnp.mean((y - mu) ** 2, axis=-1, keepdims=True)             # biased, like nn.LayerNorm
        return (y - mu) * jax.lax.rsqrt(var + eps) * g + b

    # --- encoder stack (static unroll; weights stay resident in VMEM) ---
    for l in range(L):
        # Single packed QKV projection: one MXU push with 3*D output lanes.
        # (1/sqrt(dh) already folded into the Q columns and bias at pack time.)
        qkv = (jnp.dot(x, wqkv_ref[l], preferred_element_type=jnp.float32)
               + bqkv_ref[l])                                              # (Bb*S, 3D)

        # Per-(batch, head) attention; contexts written head-major into scratch
        # so the output projection is ONE (Bb*S, D) @ (D, D) matmul (no concat,
        # no per-head matmul + cross-head sum).
        for b in range(Bb):
            r0 = b * S
            for h in range(H):
                c0 = h * dh
                q = qkv[r0:r0 + S, c0:c0 + dh]                             # (S, dh)
                k = qkv[r0:r0 + S, D + c0:D + c0 + dh]                     # (S, dh)
                v = qkv[r0:r0 + S, 2 * D + c0:2 * D + c0 + dh]             # (S, dh)
                # q @ k^T expressed as a transposed-contraction dot_general
                # (k stationary) to avoid an explicit XLU transpose of k.
                s = jax.lax.dot_general(q, k, (((1,), (1,)), ((), ())),
                                        preferred_element_type=jnp.float32)  # (S, S)
                s = s - jnp.max(s, axis=-1, keepdims=True)
                p = jnp.exp(s)
                p = p / jnp.sum(p, axis=-1, keepdims=True)                 # exact softmax (f32 fidelity)
                ctx_scr[r0:r0 + S, c0:c0 + dh] = jnp.dot(
                    p, v, preferred_element_type=jnp.float32)              # (S, dh)

        attn = (jnp.dot(ctx_scr[...], wo_ref[l], preferred_element_type=jnp.float32)
                + bo_ref[l])                                               # (Bb*S, D)
        x = layer_norm(x + attn, ln1g_ref[l], ln1b_ref[l])

        hdn = jnp.dot(x, w1_ref[l], preferred_element_type=jnp.float32) + b1_ref[l]
        hdn = jnp.maximum(hdn, 0.0)                                        # ReLU
        ff = jnp.dot(hdn, w2_ref[l], preferred_element_type=jnp.float32) + b2_ref[l]
        x = layer_norm(x + ff, ln2g_ref[l], ln2b_ref[l])

    # --- fused output heads: one lane-paired (Bb*S, 2) store, no biases here.
    # [:, 0] = raw frames score, [:, 1] = raw diff-head score; the frame diff,
    # both biases and the reshape happen in the (cheap) JAX wrapper.
    out_ref[...] = jnp.dot(x, wh_ref[...], preferred_element_type=jnp.float32)


# --------------------------- model glue / wrapper ----------------------------

def positional_encoding_np(seq_len, d_model):
    pos = np.arange(seq_len, dtype=np.float32)[:, None]
    i = np.arange(0, d_model, 2, dtype=np.float32)[None, :]
    div = np.exp(-i * (math.log(10000.0) / d_model))
    pe = np.zeros((seq_len, d_model), dtype=np.float32)
    pe[:, 0::2] = np.sin(pos * div)
    pe[:, 1::2] = np.cos(pos * div)
    return pe


def discriminator_forward(params, input_seq, input_skeleton, *, nr_heads,
                          batch_block=None):
    """batch_block=None (default): fold the whole batch into one grid step
    (best on single-TensorCore v5e/v6e, and at these tiny shapes usually on v7x
    too).  batch_block=1: grid=(B,) with 'parallel' semantics so v7x's two
    TensorCores each take one batch element."""
    assert input_seq.ndim == 3
    del input_skeleton  # only NaN/Inf-checked by the PyTorch forward; unused in compute
    B, S, Di = input_seq.shape
    D = params["linear_input_w"].shape[1]
    H = nr_heads
    dh = D // H
    layers = params["encoder"]
    L = len(layers)
    Dh = layers[0]["w1"].shape[1]

    if batch_block is None:
        batch_block = B
    Bb = batch_block
    assert B % Bb == 0
    n_steps = B // Bb
    scale = 1.0 / math.sqrt(dh)

    # ---- pack weights (cheap XLA-side reshapes/concats, done once per call) ----
    # QKV packed as (D, 3D) columns [q | k | v]; attention scale folded into q.
    wqkv = jnp.stack([jnp.concatenate([l["wq"] * scale, l["wk"], l["wv"]], axis=1)
                      for l in layers])                                     # (L, D, 3D)
    bqkv = jnp.stack([jnp.concatenate([l["bq"] * scale, l["bk"], l["bv"]]).reshape(1, 3 * D)
                      for l in layers])                                     # (L, 1, 3D)
    wo = jnp.stack([l["wo"] for l in layers])                               # (L, D, D)
    bo = jnp.stack([l["bo"].reshape(1, D) for l in layers])                 # (L, 1, D)
    ln1g = jnp.stack([l["ln1_g"].reshape(1, D) for l in layers])
    ln1b = jnp.stack([l["ln1_b"].reshape(1, D) for l in layers])
    w1 = jnp.stack([l["w1"] for l in layers])                               # (L, D, Dh)
    b1 = jnp.stack([l["b1"].reshape(1, Dh) for l in layers])
    w2 = jnp.stack([l["w2"] for l in layers])                               # (L, Dh, D)
    b2 = jnp.stack([l["b2"].reshape(1, D) for l in layers])
    ln2g = jnp.stack([l["ln2_g"].reshape(1, D) for l in layers])
    ln2b = jnp.stack([l["ln2_b"].reshape(1, D) for l in layers])
    wh = jnp.concatenate([params["frames_w"], params["diff_frames_w"]], axis=-1)  # (D, 2)

    # (linear_input bias + positional encoding) as one additive table, tiled to
    # cover the Bb batch elements processed per grid step.
    pe = jnp.asarray(positional_encoding_np(S, D))                          # compile-time constant
    bpe = jnp.tile(pe + params["linear_input_b"][None, :], (Bb, 1))         # (Bb*S, D)

    xf = input_seq.reshape(B * S, Di)                                       # rows = (batch, seq)

    c2 = lambda i: (0, 0)
    c3 = lambda i: (0, 0, 0)

    raw = pl.pallas_call(
        partial(_disc_fwd_kernel, batch_block=Bb, seq_len=S, nr_heads=H, eps=1e-5),
        out_shape=jax.ShapeDtypeStruct((B * S, 2), jnp.float32),
        grid=(n_steps,),
        in_specs=[
            pl.BlockSpec((Bb * S, Di), lambda i: (i, 0)),                   # input rows
            pl.BlockSpec((Bb * S, D), c2),                                  # bias + pos-enc table
            pl.BlockSpec((Di, D), c2),                                      # linear_input w
            pl.BlockSpec((L, D, 3 * D), c3),                                # packed QKV w
            pl.BlockSpec((L, 1, 3 * D), c3),                                # packed QKV b
            pl.BlockSpec((L, D, D), c3), pl.BlockSpec((L, 1, D), c3),       # attn out proj w, b
            pl.BlockSpec((L, 1, D), c3), pl.BlockSpec((L, 1, D), c3),       # LN1 gamma, beta
            pl.BlockSpec((L, D, Dh), c3), pl.BlockSpec((L, 1, Dh), c3),     # FFN w1, b1
            pl.BlockSpec((L, Dh, D), c3), pl.BlockSpec((L, 1, D), c3),      # FFN w2, b2
            pl.BlockSpec((L, 1, D), c3), pl.BlockSpec((L, 1, D), c3),       # LN2 gamma, beta
            pl.BlockSpec((D, 2), c2),                                       # fused output heads
        ],
        out_specs=pl.BlockSpec((Bb * S, 2), lambda i: (i, 0)),
        scratch_shapes=[pltpu.VMEM((Bb * S, D), jnp.float32)],              # concat(heads) context
        compiler_params=pltpu.CompilerParams(
            dimension_semantics=("parallel",),     # only matters when batch_block < B (v7x)
            vmem_limit_bytes=32 * 1024 * 1024),
    )(xf, bpe, params["linear_input_w"],
      wqkv, bqkv, wo, bo, ln1g, ln1b, w1, b1, w2, b2, ln2g, ln2b, wh)

    # Frame diff via linearity: (x[1:]-x[:-1]) @ w + b == (x @ w)[1:] - (x @ w)[:-1] + b.
    scores = raw.reshape(B, S, 2)
    out_frames = scores[..., 0] + params["frames_b"][0]                     # (B, S)
    d = scores[..., 1]
    out_diff = d[:, 1:] - d[:, :-1] + params["diff_frames_b"][0]            # (B, S-1)
    # Note: torch's .squeeze() would additionally drop the batch dim if B == 1;
    # we keep the stable (B, S)/(B, S-1) shapes (identical for B >= 2).
    return out_frames, out_diff


# ------------------------------- parameters ----------------------------------

def init_params(key, nr_layers, dim_input, dim_model, dim_inter):
    def dense(k, fan_in, fan_out):
        kw, kb = jax.random.split(k)
        bound = 1.0 / math.sqrt(fan_in)
        w = jax.random.uniform(kw, (fan_in, fan_out), jnp.float32, -bound, bound)
        b = jax.random.uniform(kb, (fan_out,), jnp.float32, -bound, bound)
        return w, b

    keys = jax.random.split(key, 3 + nr_layers)
    params = {}
    params["linear_input_w"], params["linear_input_b"] = dense(keys[0], dim_input, dim_model)
    params["frames_w"], params["frames_b"] = dense(keys[1], dim_model, 1)
    params["diff_frames_w"], params["diff_frames_b"] = dense(keys[2], dim_model, 1)

    layers = []
    for l in range(nr_layers):
        lk = jax.random.split(keys[3 + l], 6)
        layer = {}
        layer["wq"], layer["bq"] = dense(lk[0], dim_model, dim_model)
        layer["wk"], layer["bk"] = dense(lk[1], dim_model, dim_model)
        layer["wv"], layer["bv"] = dense(lk[2], dim_model, dim_model)
        layer["wo"], layer["bo"] = dense(lk[3], dim_model, dim_model)
        layer["w1"], layer["b1"] = dense(lk[4], dim_model, dim_inter)
        layer["w2"], layer["b2"] = dense(lk[5], dim_inter, dim_model)
        layer["ln1_g"] = jnp.ones((dim_model,), jnp.float32)
        layer["ln1_b"] = jnp.zeros((dim_model,), jnp.float32)
        layer["ln2_g"] = jnp.ones((dim_model,), jnp.float32)
        layer["ln2_b"] = jnp.zeros((dim_model,), jnp.float32)
        layers.append(layer)
    params["encoder"] = layers
    return params


# ----------------------------------- main ------------------------------------

if __name__ == "__main__":
    # Module hyperparameters (small, consistent with the PyTorch __init__).
    nr_layers = 2
    dim_input = 6
    dim_model = 32
    seq_len = 8
    dim_skeleton = 10
    nr_heads = 4
    nr_classes = 2  # unused in forward
    dim_inter = 64
    batch = 2

    key = jax.random.PRNGKey(0)
    k_params, k_seq, k_skel = jax.random.split(key, 3)

    params = init_params(k_params, nr_layers, dim_input, dim_model, dim_inter)
    input_seq = jax.random.normal(k_seq, (batch, seq_len, dim_input), jnp.float32)
    input_skeleton = jax.random.normal(k_skel, (batch, dim_skeleton), jnp.float32)

    # Host-side equivalents of the PyTorch NaN/Inf assertions.
    assert not bool(jnp.any(jnp.isnan(input_seq)))
    assert not bool(jnp.any(jnp.isnan(input_skeleton)))
    assert not bool(jnp.any(jnp.isinf(input_seq)))
    assert not bool(jnp.any(jnp.isinf(input_skeleton)))

    fwd = jax.jit(partial(discriminator_forward, nr_heads=nr_heads))
    out_frames, out_diff_frames = fwd(params, input_seq, input_skeleton)
    jax.block_until_ready((out_frames, out_diff_frames))

    assert out_frames.shape == (batch, seq_len)
    assert out_diff_frames.shape == (batch, seq_len - 1)
    assert not bool(jnp.any(jnp.isnan(out_frames)))
    assert not bool(jnp.any(jnp.isnan(out_diff_frames)))
    print("KERNEL_OK")
</pallas_src>

<mosaic_0001>
module attributes {stable_mosaic.version = 11 : i64} {
  func.func @_disc_fwd_kernel(%arg0: i32, %arg1: memref<16x6xf32, #tpu.memory_space<vmem>>, %arg2: memref<16x32xf32, #tpu.memory_space<vmem>>, %arg3: memref<6x32xf32, #tpu.memory_space<vmem>>, %arg4: memref<2x32x96xf32, #tpu.memory_space<vmem>>, %arg5: memref<2x1x96xf32, #tpu.memory_space<vmem>>, %arg6: memref<2x32x32xf32, #tpu.memory_space<vmem>>, %arg7: memref<2x1x32xf32, #tpu.memory_space<vmem>>, %arg8: memref<2x1x32xf32, #tpu.memory_space<vmem>>, %arg9: memref<2x1x32xf32, #tpu.memory_space<vmem>>, %arg10: memref<2x32x64xf32, #tpu.memory_space<vmem>>, %arg11: memref<2x1x64xf32, #tpu.memory_space<vmem>>, %arg12: memref<2x64x32xf32, #tpu.memory_space<vmem>>, %arg13: memref<2x1x32xf32, #tpu.memory_space<vmem>>, %arg14: memref<2x1x32xf32, #tpu.memory_space<vmem>>, %arg15: memref<2x1x32xf32, #tpu.memory_space<vmem>>, %arg16: memref<32x2xf32, #tpu.memory_space<vmem>>, %arg17: memref<16x2xf32, #tpu.memory_space<vmem>>, %arg18: memref<16x32xf32, #tpu.memory_space<vmem>>) attributes {dimension_semantics = [#tpu.dimension_semantics<parallel>], iteration_bounds = array<i64: 1>, scalar_prefetch = 0 : i64, scratch_operands = 1 : i64, tpu.core_type = #tpu.core_type<tc>, window_params = [{transform_indices = @transform_0, window_bounds = array<i64: 16, 6>}, {pipeline_mode = #tpu.pipeline_mode<synchronous>, transform_indices = @transform_1, window_bounds = array<i64: 16, 32>}, {pipeline_mode = #tpu.pipeline_mode<synchronous>, transform_indices = @transform_2, window_bounds = array<i64: 6, 32>}, {pipeline_mode = #tpu.pipeline_mode<synchronous>, transform_indices = @transform_3, window_bounds = array<i64: 2, 32, 96>}, {pipeline_mode = #tpu.pipeline_mode<synchronous>, transform_indices = @transform_4, window_bounds = array<i64: 2, 1, 96>}, {pipeline_mode = #tpu.pipeline_mode<synchronous>, transform_indices = @transform_5, window_bounds = array<i64: 2, 32, 32>}, {pipeline_mode = #tpu.pipeline_mode<synchronous>, transform_indices = @transform_6, window_bounds = array<i64: 2, 1, 32>}, {pipeline_mode = #tpu.pipeline_mode<synchronous>, transform_indices = @transform_7, window_bounds = array<i64: 2, 1, 32>}, {pipeline_mode = #tpu.pipeline_mode<synchronous>, transform_indices = @transform_8, window_bounds = array<i64: 2, 1, 32>}, {pipeline_mode = #tpu.pipeline_mode<synchronous>, transform_indices = @transform_9, window_bounds = array<i64: 2, 32, 64>}, {pipeline_mode = #tpu.pipeline_mode<synchronous>, transform_indices = @transform_10, window_bounds = array<i64: 2, 1, 64>}, {pipeline_mode = #tpu.pipeline_mode<synchronous>, transform_indices = @transform_11, window_bounds = array<i64: 2, 64, 32>}, {pipeline_mode = #tpu.pipeline_mode<synchronous>, transform_indices = @transform_12, window_bounds = array<i64: 2, 1, 32>}, {pipeline_mode = #tpu.pipeline_mode<synchronous>, transform_indices = @transform_13, window_bounds = array<i64: 2, 1, 32>}, {pipeline_mode = #tpu.pipeline_mode<synchronous>, transform_indices = @transform_14, window_bounds = array<i64: 2, 1, 32>}, {pipeline_mode = #tpu.pipeline_mode<synchronous>, transform_indices = @transform_15, window_bounds = array<i64: 32, 2>}, {transform_indices = @transform_16, window_bounds = array<i64: 16, 2>}]} {
    %c0 = arith.constant 0 : index
    %c0_0 = arith.constant 0 : index
    %0 = vector.load %arg1[%c0, %c0_0] : memref<16x6xf32, #tpu.memory_space<vmem>>, vector<16x6xf32>
    %c0_1 = arith.constant 0 : index
    %c0_2 = arith.constant 0 : index
    %1 = vector.load %arg3[%c0_1, %c0_2] : memref<6x32xf32, #tpu.memory_space<vmem>>, vector<6x32xf32>
    %cst = arith.constant dense<0.000000e+00> : vector<16x32xf32>
    %2 = tpu.matmul %0, %1, %cst {dimension_numbers = #tpu.dot_dimension_numbers<[1], [0], [0], [1], [0, 0, 1, 1], [], []>} : vector<16x6xf32>, vector<6x32xf32>, vector<16x32xf32> -> vector<16x32xf32>
    %c0_3 = arith.constant 0 : index
    %c0_4 = arith.constant 0 : index
    %3 = vector.load %arg2[%c0_3, %c0_4] : memref<16x32xf32, #tpu.memory_space<vmem>>, vector<16x32xf32>
    %4 = arith.addf %2, %3 : vector<16x32xf32>
    %c0_5 = arith.constant 0 : index
    %c0_6 = arith.constant 0 : index
    %c0_7 = arith.constant 0 : index
    %5 = vector.load %arg4[%c0_5, %c0_6, %c0_7] : memref<2x32x96xf32, #tpu.memory_space<vmem>>, vector<1x32x96xf32>
    %6 = vector.shape_cast %5 : vector<1x32x96xf32> to vector<32x96xf32>
    %cst_8 = arith.constant dense<0.000000e+00> : vector<16x96xf32>
    %7 = tpu.matmul %4, %6, %cst_8 {dimension_numbers = #tpu.dot_dimension_numbers<[1], [0], [0], [1], [0, 0, 1, 1], [], []>} : vector<16x32xf32>, vector<32x96xf32>, vector<16x96xf32> -> vector<16x96xf32>
    %c0_9 = arith.constant 0 : index
    %c0_10 = arith.constant 0 : index
    %c0_11 = arith.constant 0 : index
    %8 = vector.load %arg5[%c0_9, %c0_10, %c0_11] : memref<2x1x96xf32, #tpu.memory_space<vmem>>, vector<1x1x96xf32>
    %9 = vector.shape_cast %8 : vector<1x1x96xf32> to vector<1x96xf32>
    %10 = vector.broadcast %9 : vector<1x96xf32> to vector<16x96xf32>
    %11 = arith.addf %7, %10 : vector<16x96xf32>
    %12 = vector.extract_strided_slice %11 {offsets = [0, 0], sizes = [8, 8], strides = [1, 1]} : vector<16x96xf32> to vector<8x8xf32>
    %13 = vector.extract_strided_slice %11 {offsets = [0, 32], sizes = [8, 8], strides = [1, 1]} : vector<16x96xf32> to vector<8x8xf32>
    %14 = vector.extract_strided_slice %11 {offsets = [0, 64], sizes = [8, 8], strides = [1, 1]} : vector<16x96xf32> to vector<8x8xf32>
    %cst_12 = arith.constant dense<0.000000e+00> : vector<8x8xf32>
    %15 = tpu.matmul %12, %13, %cst_12 {dimension_numbers = #tpu.dot_dimension_numbers<[1], [1], [0], [0], [0, 0, 1, 0], [], []>} : vector<8x8xf32>, vector<8x8xf32>, vector<8x8xf32> -> vector<8x8xf32>
    %cst_13 = arith.constant dense<0xFF800000> : vector<8xf32>
    %16 = vector.multi_reduction <maximumf>, %15, %cst_13 [1] : vector<8x8xf32> to vector<8xf32>
    %17 = vector.shape_cast %16 : vector<8xf32> to vector<8x1xf32>
    %18 = vector.broadcast %17 : vector<8x1xf32> to vector<8x8xf32>
    %19 = arith.subf %15, %18 : vector<8x8xf32>
    %20 = math.exp %19 : vector<8x8xf32>
    %cst_14 = arith.constant dense<0.000000e+00> : vector<8xf32>
    %21 = vector.multi_reduction <add>, %20, %cst_14 [1] : vector<8x8xf32> to vector<8xf32>
    %22 = vector.shape_cast %21 : vector<8xf32> to vector<8x1xf32>
    %23 = vector.broadcast %22 : vector<8x1xf32> to vector<8x8xf32>
    %24 = arith.divf %20, %23 : vector<8x8xf32>
    %cst_15 = arith.constant dense<0.000000e+00> : vector<8x8xf32>
    %25 = tpu.matmul %24, %14, %cst_15 {dimension_numbers = #tpu.dot_dimension_numbers<[1], [0], [0], [1], [0, 0, 1, 1], [], []>} : vector<8x8xf32>, vector<8x8xf32>, vector<8x8xf32> -> vector<8x8xf32>
    %c0_16 = arith.constant 0 : index
    %c0_17 = arith.constant 0 : index
    %26 = vector.load %arg18[%c0_16, %c0_17] : memref<16x32xf32, #tpu.memory_space<vmem>>, vector<8x8xf32>
    tpu.vector_store %arg18[%c0_16, %c0_17], %25 {strides = array<i32>} : memref<16x32xf32, #tpu.memory_space<vmem>>, vector<8x8xf32>,
    %27 = vector.extract_strided_slice %11 {offsets = [0, 8], sizes = [8, 8], strides = [1, 1]} : vector<16x96xf32> to vector<8x8xf32>
    %28 = vector.extract_strided_slice %11 {offsets = [0, 40], sizes = [8, 8], strides = [1, 1]} : vector<16x96xf32> to vector<8x8xf32>
    %29 = vector.extract_strided_slice %11 {offsets = [0, 72], sizes = [8, 8], strides = [1, 1]} : vector<16x96xf32> to vector<8x8xf32>
    %cst_18 = arith.constant dense<0.000000e+00> : vector<8x8xf32>
    %30 = tpu.matmul %27, %28, %cst_18 {dimension_numbers = #tpu.dot_dimension_numbers<[1], [1], [0], [0], [0, 0, 1, 0], [], []>} : vector<8x8xf32>, vector<8x8xf32>, vector<8x8xf32> -> vector<8x8xf32>
    %cst_19 = arith.constant dense<0xFF800000> : vector<8xf32>
    %31 = vector.multi_reduction <maximumf>, %30, %cst_19 [1] : vector<8x8xf32> to vector<8xf32>
    %32 = vector.shape_cast %31 : vector<8xf32> to vector<8x1xf32>
    %33 = vector.broadcast %32 : vector<8x1xf32> to vector<8x8xf32>
    %34 = arith.subf %30, %33 : vector<8x8xf32>
    %35 = math.exp %34 : vector<8x8xf32>
    %cst_20 = arith.constant dense<0.000000e+00> : vector<8xf32>
    %36 = vector.multi_reduction <add>, %35, %cst_20 [1] : vector<8x8xf32> to vector<8xf32>
    %37 = vector.shape_cast %36 : vector<8xf32> to vector<8x1xf32>
    %38 = vector.broadcast %37 : vector<8x1xf32> to vector<8x8xf32>
    %39 = arith.divf %35, %38 : vector<8x8xf32>
    %cst_21 = arith.constant dense<0.000000e+00> : vector<8x8xf32>
    %40 = tpu.matmul %39, %29, %cst_21 {dimension_numbers = #tpu.dot_dimension_numbers<[1], [0], [0], [1], [0, 0, 1, 1], [], []>} : vector<8x8xf32>, vector<8x8xf32>, vector<8x8xf32> -> vector<8x8xf32>
    %c0_22 = arith.constant 0 : index
    %c8 = arith.constant 8 : index
    %41 = vector.load %arg18[%c0_22, %c8] : memref<16x32xf32, #tpu.memory_space<vmem>>, vector<8x8xf32>
    tpu.vector_store %arg18[%c0_22, %c8], %40 {strides = array<i32>} : memref<16x32xf32, #tpu.memory_space<vmem>>, vector<8x8xf32>,
    %42 = vector.extract_strided_slice %11 {offsets = [0, 16], sizes = [8, 8], strides = [1, 1]} : vector<16x96xf32> to vector<8x8xf32>
    %43 = vector.extract_strided_slice %11 {offsets = [0, 48], sizes = [8, 8], strides = [1, 1]} : vector<16x96xf32> to vector<8x8xf32>
    %44 = vector.extract_strided_slice %11 {offsets = [0, 80], sizes = [8, 8], strides = [1, 1]} : vector<16x96xf32> to vector<8x8xf32>
    %cst_23 = arith.constant dense<0.000000e+00> : vector<8x8xf32>
    %45 = tpu.matmul %42, %43, %cst_23 {dimension_numbers = #tpu.dot_dimension_numbers<[1], [1], [0], [0], [0, 0, 1, 0], [], []>} : vector<8x8xf32>, vector<8x8xf32>, vector<8x8xf32> -> vector<8x8xf32>
    %cst_24 = arith.constant dense<0xFF800000> : vector<8xf32>
    %46 = vector.multi_reduction <maximumf>, %45, %cst_24 [1] : vector<8x8xf32> to vector<8xf32>
    %47 = vector.shape_cast %46 : vector<8xf32> to vector<8x1xf32>
    %48 = vector.broadcast %47 : vector<8x1xf32> to vector<8x8xf32>
    %49 = arith.subf %45, %48 : vector<8x8xf32>
    %50 = math.exp %49 : vector<8x8xf32>
    %cst_25 = arith.constant dense<0.000000e+00> : vector<8xf32>
    %51 = vector.multi_reduction <add>, %50, %cst_25 [1] : vector<8x8xf32> to vector<8xf32>
    %52 = vector.shape_cast %51 : vector<8xf32> to vector<8x1xf32>
    %53 = vector.broadcast %52 : vector<8x1xf32> to vector<8x8xf32>
    %54 = arith.divf %50, %53 : vector<8x8xf32>
    %cst_26 = arith.constant dense<0.000000e+00> : vector<8x8xf32>
    %55 = tpu.matmul %54, %44, %cst_26 {dimension_numbers = #tpu.dot_dimension_numbers<[1], [0], [0], [1], [0, 0, 1, 1], [], []>} : vector<8x8xf32>, vector<8x8xf32>, vector<8x8xf32> -> vector<8x8xf32>
    %c0_27 = arith.constant 0 : index
    %c16 = arith.constant 16 : index
    %56 = vector.load %arg18[%c0_27, %c16] : memref<16x32xf32, #tpu.memory_space<vmem>>, vector<8x8xf32>
    tpu.vector_store %arg18[%c0_27, %c16], %55 {strides = array<i32>} : memref<16x32xf32, #tpu.memory_space<vmem>>, vector<8x8xf32>,
    %57 = vector.extract_strided_slice %11 {offsets = [0, 24], sizes = [8, 8], strides = [1, 1]} : vector<16x96xf32> to vector<8x8xf32>
    %58 = vector.extract_strided_slice %11 {offsets = [0, 56], sizes = [8, 8], strides = [1, 1]} : vector<16x96xf32> to vector<8x8xf32>
    %59 = vector.extract_strided_slice %11 {offsets = [0, 88], sizes = [8, 8], strides = [1, 1]} : vector<16x96xf32> to vector<8x8xf32>
    %cst_28 = arith.constant dense<0.000000e+00> : vector<8x8xf32>
    %60 = tpu.matmul %57, %58, %cst_28 {dimension_numbers = #tpu.dot_dimension_numbers<[1], [1], [0], [0], [0, 0, 1, 0], [], []>} : vector<8x8xf32>, vector<8x8xf32>, vector<8x8xf32> -> vector<8x8xf32>
    %cst_29 = arith.constant dense<0xFF800000> : vector<8xf32>
    %61 = vector.multi_reduction <maximumf>, %60, %cst_29 [1] : vector<8x8xf32> to vector<8xf32>
    %62 = vector.shape_cast %61 : vector<8xf32> to vector<8x1xf32>
    %63 = vector.broadcast %62 : vector<8x1xf32> to vector<8x8xf32>
    %64 = arith.subf %60, %63 : vector<8x8xf32>
    %65 = math.exp %64 : vector<8x8xf32>
    %cst_30 = arith.constant dense<0.000000e+00> : vector<8xf32>
    %66 = vector.multi_reduction <add>, %65, %cst_30 [1] : vector<8x8xf32> to vector<8xf32>
    %67 = vector.shape_cast %66 : vector<8xf32> to vector<8x1xf32>
    %68 = vector.broadcast %67 : vector<8x1xf32> to vector<8x8xf32>
    %69 = arith.divf %65, %68 : vector<8x8xf32>
    %cst_31 = arith.constant dense<0.000000e+00> : vector<8x8xf32>
    %70 = tpu.matmul %69, %59, %cst_31 {dimension_numbers = #tpu.dot_dimension_numbers<[1], [0], [0], [1], [0, 0, 1, 1], [], []>} : vector<8x8xf32>, vector<8x8xf32>, vector<8x8xf32> -> vector<8x8xf32>
    %c0_32 = arith.constant 0 : index
    %c24 = arith.constant 24 : index
    %71 = vector.load %arg18[%c0_32, %c24] : memref<16x32xf32, #tpu.memory_space<vmem>>, vector<8x8xf32>
    tpu.vector_store %arg18[%c0_32, %c24], %70 {strides = array<i32>} : memref<16x32xf32, #tpu.memory_space<vmem>>, vector<8x8xf32>,
    %72 = vector.extract_strided_slice %11 {offsets = [8, 0], sizes = [8, 8], strides = [1, 1]} : vector<16x96xf32> to vector<8x8xf32>
    %73 = vector.extract_strided_slice %11 {offsets = [8, 32], sizes = [8, 8], strides = [1, 1]} : vector<16x96xf32> to vector<8x8xf32>
    %74 = vector.extract_strided_slice %11 {offsets = [8, 64], sizes = [8, 8], strides = [1, 1]} : vector<16x96xf32> to vector<8x8xf32>
    %cst_33 = arith.constant dense<0.000000e+00> : vector<8x8xf32>
    %75 = tpu.matmul %72, %73, %cst_33 {dimension_numbers = #tpu.dot_dimension_numbers<[1], [1], [0], [0], [0, 0, 1, 0], [], []>} : vector<8x8xf32>, vector<8x8xf32>, vector<8x8xf32> -> vector<8x8xf32>
    %cst_34 = arith.constant dense<0xFF800000> : vector<8xf32>
    %76 = vector.multi_reduction <maximumf>, %75, %cst_34 [1] : vector<8x8xf32> to vector<8xf32>
    %77 = vector.shape_cast %76 : vector<8xf32> to vector<8x1xf32>
    %78 = vector.broadcast %77 : vector<8x1xf32> to vector<8x8xf32>
    %79 = arith.subf %75, %78 : vector<8x8xf32>
    %80 = math.exp %79 : vector<8x8xf32>
    %cst_35 = arith.constant dense<0.000000e+00> : vector<8xf32>
    %81 = vector.multi_reduction <add>, %80, %cst_35 [1] : vector<8x8xf32> to vector<8xf32>
    %82 = vector.shape_cast %81 : vector<8xf32> to vector<8x1xf32>
    %83 = vector.broadcast %82 : vector<8x1xf32> to vector<8x8xf32>
    %84 = arith.divf %80, %83 : vector<8x8xf32>
    %cst_36 = arith.constant dense<0.000000e+00> : vector<8x8xf32>
    %85 = tpu.matmul %84, %74, %cst_36 {dimension_numbers = #tpu.dot_dimension_numbers<[1], [0], [0], [1], [0, 0, 1, 1], [], []>} : vector<8x8xf32>, vector<8x8xf32>, vector<8x8xf32> -> vector<8x8xf32>
    %c8_37 = arith.constant 8 : index
    %c0_38 = arith.constant 0 : index
    %86 = vector.load %arg18[%c8_37, %c0_38] : memref<16x32xf32, #tpu.memory_space<vmem>>, vector<8x8xf32>
    tpu.vector_store %arg18[%c8_37, %c0_38], %85 {strides = array<i32>} : memref<16x32xf32, #tpu.memory_space<vmem>>, vector<8x8xf32>,
    %87 = vector.extract_strided_slice %11 {offsets = [8, 8], sizes = [8, 8], strides = [1, 1]} : vector<16x96xf32> to vector<8x8xf32>
    %88 = vector.extract_strided_slice %11 {offsets = [8, 40], sizes = [8, 8], strides = [1, 1]} : vector<16x96xf32> to vector<8x8xf32>
    %89 = vector.extract_strided_slice %11 {offsets = [8, 72], sizes = [8, 8], strides = [1, 1]} : vector<16x96xf32> to vector<8x8xf32>
    %cst_39 = arith.constant dense<0.000000e+00> : vector<8x8xf32>
    %90 = tpu.matmul %87, %88, %cst_39 {dimension_numbers = #tpu.dot_dimension_numbers<[1], [1], [0], [0], [0, 0, 1, 0], [], []>} : vector<8x8xf32>, vector<8x8xf32>, vector<8x8xf32> -> vector<8x8xf32>
    %cst_40 = arith.constant dense<0xFF800000> : vector<8xf32>
    %91 = vector.multi_reduction <maximumf>, %90, %cst_40 [1] : vector<8x8xf32> to vector<8xf32>
    %92 = vector.shape_cast %91 : vector<8xf32> to vector<8x1xf32>
    %93 = vector.broadcast %92 : vector<8x1xf32> to vector<8x8xf32>
    %94 = arith.subf %90, %93 : vector<8x8xf32>
    %95 = math.exp %94 : vector<8x8xf32>
    %cst_41 = arith.constant dense<0.000000e+00> : vector<8xf32>
    %96 = vector.multi_reduction <add>, %95, %cst_41 [1] : vector<8x8xf32> to vector<8xf32>
    %97 = vector.shape_cast %96 : vector<8xf32> to vector<8x1xf32>
    %98 = vector.broadcast %97 : vector<8x1xf32> to vector<8x8xf32>
    %99 = arith.divf %95, %98 : vector<8x8xf32>
    %cst_42 = arith.constant dense<0.000000e+00> : vector<8x8xf32>
    %100 = tpu.matmul %99, %89, %cst_42 {dimension_numbers = #tpu.dot_dimension_numbers<[1], [0], [0], [1], [0, 0, 1, 1], [], []>} : vector<8x8xf32>, vector<8x8xf32>, vector<8x8xf32> -> vector<8x8xf32>
    %c8_43 = arith.constant 8 : index
    %c8_44 = arith.constant 8 : index
    %101 = vector.load %arg18[%c8_43, %c8_44] : memref<16x32xf32, #tpu.memory_space<vmem>>, vector<8x8xf32>
    tpu.vector_store %arg18[%c8_43, %c8_44], %100 {strides = array<i32>} : memref<16x32xf32, #tpu.memory_space<vmem>>, vector<8x8xf32>,
    %102 = vector.extract_strided_slice %11 {offsets = [8, 16], sizes = [8, 8], strides = [1, 1]} : vector<16x96xf32> to vector<8x8xf32>
    %103 = vector.extract_strided_slice %11 {offsets = [8, 48], sizes = [8, 8], strides = [1, 1]} : vector<16x96xf32> to vector<8x8xf32>
    %104 = vector.extract_strided_slice %11 {offsets = [8, 80], sizes = [8, 8], strides = [1, 1]} : vector<16x96xf32> to vector<8x8xf32>
    %cst_45 = arith.constant dense<0.000000e+00> : vector<8x8xf32>
    %105 = tpu.matmul %102, %103, %cst_45 {dimension_numbers = #tpu.dot_dimension_numbers<[1], [1], [0], [0], [0, 0, 1, 0], [], []>} : vector<8x8xf32>, vector<8x8xf32>, vector<8x8xf32> -> vector<8x8xf32>
    %cst_46 = arith.constant dense<0xFF800000> : vector<8xf32>
    %106 = vector.multi_reduction <maximumf>, %105, %cst_46 [1] : vector<8x8xf32> to vector<8xf32>
    %107 = vector.shape_cast %106 : vector<8xf32> to vector<8x1xf32>
    %108 = vector.broadcast %107 : vector<8x1xf32> to vector<8x8xf32>
    %109 = arith.subf %105, %108 : vector<8x8xf32>
    %110 = math.exp %109 : vector<8x8xf32>
    %cst_47 = arith.constant dense<0.000000e+00> : vector<8xf32>
    %111 = vector.multi_reduction <add>, %110, %cst_47 [1] : vector<8x8xf32> to vector<8xf32>
    %112 = vector.shape_cast %111 : vector<8xf32> to vector<8x1xf32>
    %113 = vector.broadcast %112 : vector<8x1xf32> to vector<8x8xf32>
    %114 = arith.divf %110, %113 : vector<8x8xf32>
    %cst_48 = arith.constant dense<0.000000e+00> : vector<8x8xf32>
    %115 = tpu.matmul %114, %104, %cst_48 {dimension_numbers = #tpu.dot_dimension_numbers<[1], [0], [0], [1], [0, 0, 1, 1], [], []>} : vector<8x8xf32>, vector<8x8xf32>, vector<8x8xf32> -> vector<8x8xf32>
    %c8_49 = arith.constant 8 : index
    %c16_50 = arith.constant 16 : index
    %116 = vector.load %arg18[%c8_49, %c16_50] : memref<16x32xf32, #tpu.memory_space<vmem>>, vector<8x8xf32>
    tpu.vector_store %arg18[%c8_49, %c16_50], %115 {strides = array<i32>} : memref<16x32xf32, #tpu.memory_space<vmem>>, vector<8x8xf32>,
    %117 = vector.extract_strided_slice %11 {offsets = [8, 24], sizes = [8, 8], strides = [1, 1]} : vector<16x96xf32> to vector<8x8xf32>
    %118 = vector.extract_strided_slice %11 {offsets = [8, 56], sizes = [8, 8], strides = [1, 1]} : vector<16x96xf32> to vector<8x8xf32>
    %119 = vector.extract_strided_slice %11 {offsets = [8, 88], sizes = [8, 8], strides = [1, 1]} : vector<16x96xf32> to vector<8x8xf32>
    %cst_51 = arith.constant dense<0.000000e+00> : vector<8x8xf32>
    %120 = tpu.matmul %117, %118, %cst_51 {dimension_numbers = #tpu.dot_dimension_numbers<[1], [1], [0], [0], [0, 0, 1, 0], [], []>} : vector<8x8xf32>, vector<8x8xf32>, vector<8x8xf32> -> vector<8x8xf32>
    %cst_52 = arith.constant dense<0xFF800000> : vector<8xf32>
    %121 = vector.multi_reduction <maximumf>, %120, %cst_52 [1] : vector<8x8xf32> to vector<8xf32>
    %122 = vector.shape_cast %121 : vector<8xf32> to vector<8x1xf32>
    %123 = vector.broadcast %122 : vector<8x1xf32> to vector<8x8xf32>
    %124 = arith.subf %120, %123 : vector<8x8xf32>
    %125 = math.exp %124 : vector<8x8xf32>
    %cst_53 = arith.constant dense<0.000000e+00> : vector<8xf32>
    %126 = vector.multi_reduction <add>, %125, %cst_53 [1] : vector<8x8xf32> to vector<8xf32>
    %127 = vector.shape_cast %126 : vector<8xf32> to vector<8x1xf32>
    %128 = vector.broadcast %127 : vector<8x1xf32> to vector<8x8xf32>
    %129 = arith.divf %125, %128 : vector<8x8xf32>
    %cst_54 = arith.constant dense<0.000000e+00> : vector<8x8xf32>
    %130 = tpu.matmul %129, %119, %cst_54 {dimension_numbers = #tpu.dot_dimension_numbers<[1], [0], [0], [1], [0, 0, 1, 1], [], []>} : vector<8x8xf32>, vector<8x8xf32>, vector<8x8xf32> -> vector<8x8xf32>
    %c8_55 = arith.constant 8 : index
    %c24_56 = arith.constant 24 : index
    %131 = vector.load %arg18[%c8_55, %c24_56] : memref<16x32xf32, #tpu.memory_space<vmem>>, vector<8x8xf32>
    tpu.vector_store %arg18[%c8_55, %c24_56], %130 {strides = array<i32>} : memref<16x32xf32, #tpu.memory_space<vmem>>, vector<8x8xf32>,
    %c0_57 = arith.constant 0 : index
    %c0_58 = arith.constant 0 : index
    %132 = vector.load %arg18[%c0_57, %c0_58] : memref<16x32xf32, #tpu.memory_space<vmem>>, vector<16x32xf32>
    %c0_59 = arith.constant 0 : index
    %c0_60 = arith.constant 0 : index
    %c0_61 = arith.constant 0 : index
    %133 = vector.load %arg6[%c0_59, %c0_60, %c0_61] : memref<2x32x32xf32, #tpu.memory_space<vmem>>, vector<1x32x32xf32>
    %134 = vector.shape_cast %133 : vector<1x32x32xf32> to vector<32x32xf32>
    %cst_62 = arith.constant dense<0.000000e+00> : vector<16x32xf32>
    %135 = tpu.matmul %132, %134, %cst_62 {dimension_numbers = #tpu.dot_dimension_numbers<[1], [0], [0], [1], [0, 0, 1, 1], [], []>} : vector<16x32xf32>, vector<32x32xf32>, vector<16x32xf32> -> vector<16x32xf32>
    %c0_63 = arith.constant 0 : index
    %c0_64 = arith.constant 0 : index
    %c0_65 = arith.constant 0 : index
    %136 = vector.load %arg7[%c0_63, %c0_64, %c0_65] : memref<2x1x32xf32, #tpu.memory_space<vmem>>, vector<1x1x32xf32>
    %137 = vector.shape_cast %136 : vector<1x1x32xf32> to vector<1x32xf32>
    %138 = vector.broadcast %137 : vector<1x32xf32> to vector<16x32xf32>
    %139 = arith.addf %135, %138 : vector<16x32xf32>
    %140 = arith.addf %4, %139 : vector<16x32xf32>
    %c0_66 = arith.constant 0 : index
    %c0_67 = arith.constant 0 : index
    %c0_68 = arith.constant 0 : index
    %141 = vector.load %arg8[%c0_66, %c0_67, %c0_68] : memref<2x1x32xf32, #tpu.memory_space<vmem>>, vector<1x1x32xf32>
    %142 = vector.shape_cast %141 : vector<1x1x32xf32> to vector<1x32xf32>
    %c0_69 = arith.constant 0 : index
    %c0_70 = arith.constant 0 : index
    %c0_71 = arith.constant 0 : index
    %143 = vector.load %arg9[%c0_69, %c0_70, %c0_71] : memref<2x1x32xf32, #tpu.memory_space<vmem>>, vector<1x1x32xf32>
    %144 = vector.shape_cast %143 : vector<1x1x32xf32> to vector<1x32xf32>
    %cst_72 = arith.constant dense<0.000000e+00> : vector<16xf32>
    %145 = vector.multi_reduction <add>, %140, %cst_72 [1] : vector<16x32xf32> to vector<16xf32>
    %146 = vector.shape_cast %145 : vector<16xf32> to vector<16x1xf32>
    %cst_73 = arith.constant 3.200000e+01 : f32
    %147 = vector.broadcast %cst_73 : f32 to vector<16x1xf32>
    %148 = arith.divf %146, %147 : vector<16x1xf32>
    %149 = vector.broadcast %148 : vector<16x1xf32> to vector<16x32xf32>
    %150 = arith.subf %140, %149 : vector<16x32xf32>
    %151 = arith.mulf %150, %150 : vector<16x32xf32>
    %cst_74 = arith.constant dense<0.000000e+00> : vector<16xf32>
    %152 = vector.multi_reduction <add>, %151, %cst_74 [1] : vector<16x32xf32> to vector<16xf32>
    %153 = vector.shape_cast %152 : vector<16xf32> to vector<16x1xf32>
    %cst_75 = arith.constant 3.200000e+01 : f32
    %154 = vector.broadcast %cst_75 : f32 to vector<16x1xf32>
    %155 = arith.divf %153, %154 : vector<16x1xf32>
    %156 = vector.broadcast %148 : vector<16x1xf32> to vector<16x32xf32>
    %157 = arith.subf %140, %156 : vector<16x32xf32>
    %cst_76 = arith.constant 9.99999974E-6 : f32
    %158 = vector.broadcast %cst_76 : f32 to vector<16x1xf32>
    %159 = arith.addf %155, %158 : vector<16x1xf32>
    %160 = math.rsqrt %159 : vector<16x1xf32>
    %161 = vector.broadcast %160 : vector<16x1xf32> to vector<16x32xf32>
    %162 = arith.mulf %157, %161 : vector<16x32xf32>
    %163 = vector.broadcast %142 : vector<1x32xf32> to vector<16x32xf32>
    %164 = arith.mulf %162, %163 : vector<16x32xf32>
    %165 = vector.broadcast %144 : vector<1x32xf32> to vector<16x32xf32>
    %166 = arith.addf %164, %165 : vector<16x32xf32>
    %c0_77 = arith.constant 0 : index
    %c0_78 = arith.constant 0 : index
    %c0_79 = arith.constant 0 : index
    %167 = vector.load %arg10[%c0_77, %c0_78, %c0_79] : memref<2x32x64xf32, #tpu.memory_space<vmem>>, vector<1x32x64xf32>
    %168 = vector.shape_cast %167 : vector<1x32x64xf32> to vector<32x64xf32>
    %cst_80 = arith.constant dense<0.000000e+00> : vector<16x64xf32>
    %169 = tpu.matmul %166, %168, %cst_80 {dimension_numbers = #tpu.dot_dimension_numbers<[1], [0], [0], [1], [0, 0, 1, 1], [], []>} : vector<16x32xf32>, vector<32x64xf32>, vector<16x64xf32> -> vector<16x64xf32>
    %c0_81 = arith.constant 0 : index
    %c0_82 = arith.constant 0 : index
    %c0_83 = arith.constant 0 : index
    %170 = vector.load %arg11[%c0_81, %c0_82, %c0_83] : memref<2x1x64xf32, #tpu.memory_space<vmem>>, vector<1x1x64xf32>
    %171 = vector.shape_cast %170 : vector<1x1x64xf32> to vector<1x64xf32>
    %172 = vector.broadcast %171 : vector<1x64xf32> to vector<16x64xf32>
    %173 = arith.addf %169, %172 : vector<16x64xf32>
    %cst_84 = arith.constant 0.000000e+00 : f32
    %174 = vector.broadcast %cst_84 : f32 to vector<16x64xf32>
    %175 = arith.maximumf %173, %174 : vector<16x64xf32>
    %c0_85 = arith.constant 0 : index
    %c0_86 = arith.constant 0 : index
    %c0_87 = arith.constant 0 : index
    %176 = vector.load %arg12[%c0_85, %c0_86, %c0_87] : memref<2x64x32xf32, #tpu.memory_space<vmem>>, vector<1x64x32xf32>
    %177 = vector.shape_cast %176 : vector<1x64x32xf32> to vector<64x32xf32>
    %cst_88 = arith.constant dense<0.000000e+00> : vector<16x32xf32>
    %178 = tpu.matmul %175, %177, %cst_88 {dimension_numbers = #tpu.dot_dimension_numbers<[1], [0], [0], [1], [0, 0, 1, 1], [], []>} : vector<16x64xf32>, vector<64x32xf32>, vector<16x32xf32> -> vector<16x32xf32>
    %c0_89 = arith.constant 0 : index
    %c0_90 = arith.constant 0 : index
    %c0_91 = arith.constant 0 : index
    %179 = vector.load %arg13[%c0_89, %c0_90, %c0_91] : memref<2x1x32xf32, #tpu.memory_space<vmem>>, vector<1x1x32xf32>
    %180 = vector.shape_cast %179 : vector<1x1x32xf32> to vector<1x32xf32>
    %181 = vector.broadcast %180 : vector<1x32xf32> to vector<16x32xf32>
    %182 = arith.addf %178, %181 : vector<16x32xf32>
    %183 = arith.addf %166, %182 : vector<16x32xf32>
    %c0_92 = arith.constant 0 : index
    %c0_93 = arith.constant 0 : index
    %c0_94 = arith.constant 0 : index
    %184 = vector.load %arg14[%c0_92, %c0_93, %c0_94] : memref<2x1x32xf32, #tpu.memory_space<vmem>>, vector<1x1x32xf32>
    %185 = vector.shape_cast %184 : vector<1x1x32xf32> to vector<1x32xf32>
    %c0_95 = arith.constant 0 : index
    %c0_96 = arith.constant 0 : index
    %c0_97 = arith.constant 0 : index
    %186 = vector.load %arg15[%c0_95, %c0_96, %c0_97] : memref<2x1x32xf32, #tpu.memory_space<vmem>>, vector<1x1x32xf32>
    %187 = vector.shape_cast %186 : vector<1x1x32xf32> to vector<1x32xf32>
    %cst_98 = arith.constant dense<0.000000e+00> : vector<16xf32>
    %188 = vector.multi_reduction <add>, %183, %cst_98 [1] : vector<16x32xf32> to vector<16xf32>
    %189 = vector.shape_cast %188 : vector<16xf32> to vector<16x1xf32>
    %cst_99 = arith.constant 3.200000e+01 : f32
    %190 = vector.broadcast %cst_99 : f32 to vector<16x1xf32>
    %191 = arith.divf %189, %190 : vector<16x1xf32>
    %192 = vector.broadcast %191 : vector<16x1xf32> to vector<16x32xf32>
    %193 = arith.subf %183, %192 : vector<16x32xf32>
    %194 = arith.mulf %193, %193 : vector<16x32xf32>
    %cst_100 = arith.constant dense<0.000000e+00> : vector<16xf32>
    %195 = vector.multi_reduction <add>, %194, %cst_100 [1] : vector<16x32xf32> to vector<16xf32>
    %196 = vector.shape_cast %195 : vector<16xf32> to vector<16x1xf32>
    %cst_101 = arith.constant 3.200000e+01 : f32
    %197 = vector.broadcast %cst_101 : f32 to vector<16x1xf32>
    %198 = arith.divf %196, %197 : vector<16x1xf32>
    %199 = vector.broadcast %191 : vector<16x1xf32> to vector<16x32xf32>
    %200 = arith.subf %183, %199 : vector<16x32xf32>
    %cst_102 = arith.constant 9.99999974E-6 : f32
    %201 = vector.broadcast %cst_102 : f32 to vector<16x1xf32>
    %202 = arith.addf %198, %201 : vector<16x1xf32>
    %203 = math.rsqrt %202 : vector<16x1xf32>
    %204 = vector.broadcast %203 : vector<16x1xf32> to vector<16x32xf32>
    %205 = arith.mulf %200, %204 : vector<16x32xf32>
    %206 = vector.broadcast %185 : vector<1x32xf32> to vector<16x32xf32>
    %207 = arith.mulf %205, %206 : vector<16x32xf32>
    %208 = vector.broadcast %187 : vector<1x32xf32> to vector<16x32xf32>
    %209 = arith.addf %207, %208 : vector<16x32xf32>
    %c1 = arith.constant 1 : index
    %c0_103 = arith.constant 0 : index
    %c0_104 = arith.constant 0 : index
    %210 = vector.load %arg4[%c1, %c0_103, %c0_104] : memref<2x32x96xf32, #tpu.memory_space<vmem>>, vector<1x32x96xf32>
    %211 = vector.shape_cast %210 : vector<1x32x96xf32> to vector<32x96xf32>
    %cst_105 = arith.constant dense<0.000000e+00> : vector<16x96xf32>
    %212 = tpu.matmul %209, %211, %cst_105 {dimension_numbers = #tpu.dot_dimension_numbers<[1], [0], [0], [1], [0, 0, 1, 1], [], []>} : vector<16x32xf32>, vector<32x96xf32>, vector<16x96xf32> -> vector<16x96xf32>
    %c1_106 = arith.constant 1 : index
    %c0_107 = arith.constant 0 : index
    %c0_108 = arith.constant 0 : index
    %213 = vector.load %arg5[%c1_106, %c0_107, %c0_108] : memref<2x1x96xf32, #tpu.memory_space<vmem>>, vector<1x1x96xf32>
    %214 = vector.shape_cast %213 : vector<1x1x96xf32> to vector<1x96xf32>
    %215 = vector.broadcast %214 : vector<1x96xf32> to vector<16x96xf32>
    %216 = arith.addf %212, %215 : vector<16x96xf32>
    %217 = vector.extract_strided_slice %216 {offsets = [0, 0], sizes = [8, 8], strides = [1, 1]} : vector<16x96xf32> to vector<8x8xf32>
    %218 = vector.extract_strided_slice %216 {offsets = [0, 32], sizes = [8, 8], strides = [1, 1]} : vector<16x96xf32> to vector<8x8xf32>
    %219 = vector.extract_strided_slice %216 {offsets = [0, 64], sizes = [8, 8], strides = [1, 1]} : vector<16x96xf32> to vector<8x8xf32>
    %cst_109 = arith.constant dense<0.000000e+00> : vector<8x8xf32>
    %220 = tpu.matmul %217, %218, %cst_109 {dimension_numbers = #tpu.dot_dimension_numbers<[1], [1], [0], [0], [0, 0, 1, 0], [], []>} : vector<8x8xf32>, vector<8x8xf32>, vector<8x8xf32> -> vector<8x8xf32>
    %cst_110 = arith.constant dense<0xFF800000> : vector<8xf32>
    %221 = vector.multi_reduction <maximumf>, %220, %cst_110 [1] : vector<8x8xf32> to vector<8xf32>
    %222 = vector.shape_cast %221 : vector<8xf32> to vector<8x1xf32>
    %223 = vector.broadcast %222 : vector<8x1xf32> to vector<8x8xf32>
    %224 = arith.subf %220, %223 : vector<8x8xf32>
    %225 = math.exp %224 : vector<8x8xf32>
    %cst_111 = arith.constant dense<0.000000e+00> : vector<8xf32>
    %226 = vector.multi_reduction <add>, %225, %cst_111 [1] : vector<8x8xf32> to vector<8xf32>
    %227 = vector.shape_cast %226 : vector<8xf32> to vector<8x1xf32>
    %228 = vector.broadcast %227 : vector<8x1xf32> to vector<8x8xf32>
    %229 = arith.divf %225, %228 : vector<8x8xf32>
    %cst_112 = arith.constant dense<0.000000e+00> : vector<8x8xf32>
    %230 = tpu.matmul %229, %219, %cst_112 {dimension_numbers = #tpu.dot_dimension_numbers<[1], [0], [0], [1], [0, 0, 1, 1], [], []>} : vector<8x8xf32>, vector<8x8xf32>, vector<8x8xf32> -> vector<8x8xf32>
    %c0_113 = arith.constant 0 : index
    %c0_114 = arith.constant 0 : index
    %231 = vector.load %arg18[%c0_113, %c0_114] : memref<16x32xf32, #tpu.memory_space<vmem>>, vector<8x8xf32>
    tpu.vector_store %arg18[%c0_113, %c0_114], %230 {strides = array<i32>} : memref<16x32xf32, #tpu.memory_space<vmem>>, vector<8x8xf32>,
    %232 = vector.extract_strided_slice %216 {offsets = [0, 8], sizes = [8, 8], strides = [1, 1]} : vector<16x96xf32> to vector<8x8xf32>
    %233 = vector.extract_strided_slice %216 {offsets = [0, 40], sizes = [8, 8], strides = [1, 1]} : vector<16x96xf32> to vector<8x8xf32>
    %234 = vector.extract_strided_slice %216 {offsets = [0, 72], sizes = [8, 8], strides = [1, 1]} : vector<16x96xf32> to vector<8x8xf32>
    %cst_115 = arith.constant dense<0.000000e+00> : vector<8x8xf32>
    %235 = tpu.matmul %232, %233, %cst_115 {dimension_numbers = #tpu.dot_dimension_numbers<[1], [1], [0], [0], [0, 0, 1, 0], [], []>} : vector<8x8xf32>, vector<8x8xf32>, vector<8x8xf32> -> vector<8x8xf32>
    %cst_116 = arith.constant dense<0xFF800000> : vector<8xf32>
    %236 = vector.multi_reduction <maximumf>, %235, %cst_116 [1] : vector<8x8xf32> to vector<8xf32>
    %237 = vector.shape_cast %236 : vector<8xf32> to vector<8x1xf32>
    %238 = vector.broadcast %237 : vector<8x1xf32> to vector<8x8xf32>
    %239 = arith.subf %235, %238 : vector<8x8xf32>
    %240 = math.exp %239 : vector<8x8xf32>
    %cst_117 = arith.constant dense<0.000000e+00> : vector<8xf32>
    %241 = vector.multi_reduction <add>, %240, %cst_117 [1] : vector<8x8xf32> to vector<8xf32>
    %242 = vector.shape_cast %241 : vector<8xf32> to vector<8x1xf32>
    %243 = vector.broadcast %242 : vector<8x1xf32> to vector<8x8xf32>
    %244 = arith.divf %240, %243 : vector<8x8xf32>
    %cst_118 = arith.constant dense<0.000000e+00> : vector<8x8xf32>
    %245 = tpu.matmul %244, %234, %cst_118 {dimension_numbers = #tpu.dot_dimension_numbers<[1], [0], [0], [1], [0, 0, 1, 1], [], []>} : vector<8x8xf32>, vector<8x8xf32>, vector<8x8xf32> -> vector<8x8xf32>
    %c0_119 = arith.constant 0 : index
    %c8_120 = arith.constant 8 : index
    %246 = vector.load %arg18[%c0_119, %c8_120] : memref<16x32xf32, #tpu.memory_space<vmem>>, vector<8x8xf32>
    tpu.vector_store %arg18[%c0_119, %c8_120], %245 {strides = array<i32>} : memref<16x32xf32, #tpu.memory_space<vmem>>, vector<8x8xf32>,
    %247 = vector.extract_strided_slice %216 {offsets = [0, 16], sizes = [8, 8], strides = [1, 1]} : vector<16x96xf32> to vector<8x8xf32>
    %248 = vector.extract_strided_slice %216 {offsets = [0, 48], sizes = [8, 8], strides = [1, 1]} : vector<16x96xf32> to vector<8x8xf32>
    %249 = vector.extract_strided_slice %216 {offsets = [0, 80], sizes = [8, 8], strides = [1, 1]} : vector<16x96xf32> to vector<8x8xf32>
    %cst_121 = arith.constant dense<0.000000e+00> : vector<8x8xf32>
    %250 = tpu.matmul %247, %248, %cst_121 {dimension_numbers = #tpu.dot_dimension_numbers<[1], [1], [0], [0], [0, 0, 1, 0], [], []>} : vector<8x8xf32>, vector<8x8xf32>, vector<8x8xf32> -> vector<8x8xf32>
    %cst_122 = arith.constant dense<0xFF800000> : vector<8xf32>
    %251 = vector.multi_reduction <maximumf>, %250, %cst_122 [1] : vector<8x8xf32> to vector<8xf32>
    %252 = vector.shape_cast %251 : vector<8xf32> to vector<8x1xf32>
    %253 = vector.broadcast %252 : vector<8x1xf32> to vector<8x8xf32>
    %254 = arith.subf %250, %253 : vector<8x8xf32>
    %255 = math.exp %254 : vector<8x8xf32>
    %cst_123 = arith.constant dense<0.000000e+00> : vector<8xf32>
    %256 = vector.multi_reduction <add>, %255, %cst_123 [1] : vector<8x8xf32> to vector<8xf32>
    %257 = vector.shape_cast %256 : vector<8xf32> to vector<8x1xf32>
    %258 = vector.broadcast %257 : vector<8x1xf32> to vector<8x8xf32>
    %259 = arith.divf %255, %258 : vector<8x8xf32>
    %cst_124 = arith.constant dense<0.000000e+00> : vector<8x8xf32>
    %260 = tpu.matmul %259, %249, %cst_124 {dimension_numbers = #tpu.dot_dimension_numbers<[1], [0], [0], [1], [0, 0, 1, 1], [], []>} : vector<8x8xf32>, vector<8x8xf32>, vector<8x8xf32> -> vector<8x8xf32>
    %c0_125 = arith.constant 0 : index
    %c16_126 = arith.constant 16 : index
    %261 = vector.load %arg18[%c0_125, %c16_126] : memref<16x32xf32, #tpu.memory_space<vmem>>, vector<8x8xf32>
    tpu.vector_store %arg18[%c0_125, %c16_126], %260 {strides = array<i32>} : memref<16x32xf32, #tpu.memory_space<vmem>>, vector<8x8xf32>,
    %262 = vector.extract_strided_slice %216 {offsets = [0, 24], sizes = [8, 8], strides = [1, 1]} : vector<16x96xf32> to vector<8x8xf32>
    %263 = vector.extract_strided_slice %216 {offsets = [0, 56], sizes = [8, 8], strides = [1, 1]} : vector<16x96xf32> to vector<8x8xf32>
    %264 = vector.extract_strided_slice %216 {offsets = [0, 88], sizes = [8, 8], strides = [1, 1]} : vector<16x96xf32> to vector<8x8xf32>
    %cst_127 = arith.constant dense<0.000000e+00> : vector<8x8xf32>
    %265 = tpu.matmul %262, %263, %cst_127 {dimension_numbers = #tpu.dot_dimension_numbers<[1], [1], [0], [0], [0, 0, 1, 0], [], []>} : vector<8x8xf32>, vector<8x8xf32>, vector<8x8xf32> -> vector<8x8xf32>
    %cst_128 = arith.constant dense<0xFF800000> : vector<8xf32>
    %266 = vector.multi_reduction <maximumf>, %265, %cst_128 [1] : vector<8x8xf32> to vector<8xf32>
    %267 = vector.shape_cast %266 : vector<8xf32> to vector<8x1xf32>
    %268 = vector.broadcast %267 : vector<8x1xf32> to vector<8x8xf32>
    %269 = arith.subf %265, %268 : vector<8x8xf32>
    %270 = math.exp %269 : vector<8x8xf32>
    %cst_129 = arith.constant dense<0.000000e+00> : vector<8xf32>
    %271 = vector.multi_reduction <add>, %270, %cst_129 [1] : vector<8x8xf32> to vector<8xf32>
    %272 = vector.shape_cast %271 : vector<8xf32> to vector<8x1xf32>
    %273 = vector.broadcast %272 : vector<8x1xf32> to vector<8x8xf32>
    %274 = arith.divf %270, %273 : vector<8x8xf32>
    %cst_130 = arith.constant dense<0.000000e+00> : vector<8x8xf32>
    %275 = tpu.matmul %274, %264, %cst_130 {dimension_numbers = #tpu.dot_dimension_numbers<[1], [0], [0], [1], [0, 0, 1, 1], [], []>} : vector<8x8xf32>, vector<8x8xf32>, vector<8x8xf32> -> vector<8x8xf32>
    %c0_131 = arith.constant 0 : index
    %c24_132 = arith.constant 24 : index
    %276 = vector.load %arg18[%c0_131, %c24_132] : memref<16x32xf32, #tpu.memory_space<vmem>>, vector<8x8xf32>
    tpu.vector_store %arg18[%c0_131, %c24_132], %275 {strides = array<i32>} : memref<16x32xf32, #tpu.memory_space<vmem>>, vector<8x8xf32>,
    %277 = vector.extract_strided_slice %216 {offsets = [8, 0], sizes = [8, 8], strides = [1, 1]} : vector<16x96xf32> to vector<8x8xf32>
    %278 = vector.extract_strided_slice %216 {offsets = [8, 32], sizes = [8, 8], strides = [1, 1]} : vector<16x96xf32> to vector<8x8xf32>
    %279 = vector.extract_strided_slice %216 {offsets = [8, 64], sizes = [8, 8], strides = [1, 1]} : vector<16x96xf32> to vector<8x8xf32>
    %cst_133 = arith.constant dense<0.000000e+00> : vector<8x8xf32>
    %280 = tpu.matmul %277, %278, %cst_133 {dimension_numbers = #tpu.dot_dimension_numbers<[1], [1], [0], [0], [0, 0, 1, 0], [], []>} : vector<8x8xf32>, vector<8x8xf32>, vector<8x8xf32> -> vector<8x8xf32>
    %cst_134 = arith.constant dense<0xFF800000> : vector<8xf32>
    %281 = vector.multi_reduction <maximumf>, %280, %cst_134 [1] : vector<8x8xf32> to vector<8xf32>
    %282 = vector.shape_cast %281 : vector<8xf32> to vector<8x1xf32>
    %283 = vector.broadcast %282 : vector<8x1xf32> to vector<8x8xf32>
    %284 = arith.subf %280, %283 : vector<8x8xf32>
    %285 = math.exp %284 : vector<8x8xf32>
    %cst_135 = arith.constant dense<0.000000e+00> : vector<8xf32>
    %286 = vector.multi_reduction <add>, %285, %cst_135 [1] : vector<8x8xf32> to vector<8xf32>
    %287 = vector.shape_cast %286 : vector<8xf32> to vector<8x1xf32>
    %288 = vector.broadcast %287 : vector<8x1xf32> to vector<8x8xf32>
    %289 = arith.divf %285, %288 : vector<8x8xf32>
    %cst_136 = arith.constant dense<0.000000e+00> : vector<8x8xf32>
    %290 = tpu.matmul %289, %279, %cst_136 {dimension_numbers = #tpu.dot_dimension_numbers<[1], [0], [0], [1], [0, 0, 1, 1], [], []>} : vector<8x8xf32>, vector<8x8xf32>, vector<8x8xf32> -> vector<8x8xf32>
    %c8_137 = arith.constant 8 : index
    %c0_138 = arith.constant 0 : index
    %291 = vector.load %arg18[%c8_137, %c0_138] : memref<16x32xf32, #tpu.memory_space<vmem>>, vector<8x8xf32>
    tpu.vector_store %arg18[%c8_137, %c0_138], %290 {strides = array<i32>} : memref<16x32xf32, #tpu.memory_space<vmem>>, vector<8x8xf32>,
    %292 = vector.extract_strided_slice %216 {offsets = [8, 8], sizes = [8, 8], strides = [1, 1]} : vector<16x96xf32> to vector<8x8xf32>
    %293 = vector.extract_strided_slice %216 {offsets = [8, 40], sizes = [8, 8], strides = [1, 1]} : vector<16x96xf32> to vector<8x8xf32>
    %294 = vector.extract_strided_slice %216 {offsets = [8, 72], sizes = [8, 8], strides = [1, 1]} : vector<16x96xf32> to vector<8x8xf32>
    %cst_139 = arith.constant dense<0.000000e+00> : vector<8x8xf32>
    %295 = tpu.matmul %292, %293, %cst_139 {dimension_numbers = #tpu.dot_dimension_numbers<[1], [1], [0], [0], [0, 0, 1, 0], [], []>} : vector<8x8xf32>, vector<8x8xf32>, vector<8x8xf32> -> vector<8x8xf32>
    %cst_140 = arith.constant dense<0xFF800000> : vector<8xf32>
    %296 = vector.multi_reduction <maximumf>, %295, %cst_140 [1] : vector<8x8xf32> to vector<8xf32>
    %297 = vector.shape_cast %296 : vector<8xf32> to vector<8x1xf32>
    %298 = vector.broadcast %297 : vector<8x1xf32> to vector<8x8xf32>
    %299 = arith.subf %295, %298 : vector<8x8xf32>
    %300 = math.exp %299 : vector<8x8xf32>
    %cst_141 = arith.constant dense<0.000000e+00> : vector<8xf32>
    %301 = vector.multi_reduction <add>, %300, %cst_141 [1] : vector<8x8xf32> to vector<8xf32>
    %302 = vector.shape_cast %301 : vector<8xf32> to vector<8x1xf32>
    %303 = vector.broadcast %302 : vector<8x1xf32> to vector<8x8xf32>
    %304 = arith.divf %300, %303 : vector<8x8xf32>
    %cst_142 = arith.constant dense<0.000000e+00> : vector<8x8xf32>
    %305 = tpu.matmul %304, %294, %cst_142 {dimension_numbers = #tpu.dot_dimension_numbers<[1], [0], [0], [1], [0, 0, 1, 1], [], []>} : vector<8x8xf32>, vector<8x8xf32>, vector<8x8xf32> -> vector<8x8xf32>
    %c8_143 = arith.constant 8 : index
    %c8_144 = arith.constant 8 : index
    %306 = vector.load %arg18[%c8_143, %c8_144] : memref<16x32xf32, #tpu.memory_space<vmem>>, vector<8x8xf32>
    tpu.vector_store %arg18[%c8_143, %c8_144], %305 {strides = array<i32>} : memref<16x32xf32, #tpu.memory_space<vmem>>, vector<8x8xf32>,
    %307 = vector.extract_strided_slice %216 {offsets = [8, 16], sizes = [8, 8], strides = [1, 1]} : vector<16x96xf32> to vector<8x8xf32>
    %308 = vector.extract_strided_slice %216 {offsets = [8, 48], sizes = [8, 8], strides = [1, 1]} : vector<16x96xf32> to vector<8x8xf32>
    %309 = vector.extract_strided_slice %216 {offsets = [8, 80], sizes = [8, 8], strides = [1, 1]} : vector<16x96xf32> to vector<8x8xf32>
    %cst_145 = arith.constant dense<0.000000e+00> : vector<8x8xf32>
    %310 = tpu.matmul %307, %308, %cst_145 {dimension_numbers = #tpu.dot_dimension_numbers<[1], [1], [0], [0], [0, 0, 1, 0], [], []>} : vector<8x8xf32>, vector<8x8xf32>, vector<8x8xf32> -> vector<8x8xf32>
    %cst_146 = arith.constant dense<0xFF800000> : vector<8xf32>
    %311 = vector.multi_reduction <maximumf>, %310, %cst_146 [1] : vector<8x8xf32> to vector<8xf32>
    %312 = vector.shape_cast %311 : vector<8xf32> to vector<8x1xf32>
    %313 = vector.broadcast %312 : vector<8x1xf32> to vector<8x8xf32>
    %314 = arith.subf %310, %313 : vector<8x8xf32>
    %315 = math.exp %314 : vector<8x8xf32>
    %cst_147 = arith.constant dense<0.000000e+00> : vector<8xf32>
    %316 = vector.multi_reduction <add>, %315, %cst_147 [1] : vector<8x8xf32> to vector<8xf32>
    %317 = vector.shape_cast %316 : vector<8xf32> to vector<8x1xf32>
    %318 = vector.broadcast %317 : vector<8x1xf32> to vector<8x8xf32>
    %319 = arith.divf %315, %318 : vector<8x8xf32>
    %cst_148 = arith.constant dense<0.000000e+00> : vector<8x8xf32>
    %320 = tpu.matmul %319, %309, %cst_148 {dimension_numbers = #tpu.dot_dimension_numbers<[1], [0], [0], [1], [0, 0, 1, 1], [], []>} : vector<8x8xf32>, vector<8x8xf32>, vector<8x8xf32> -> vector<8x8xf32>
    %c8_149 = arith.constant 8 : index
    %c16_150 = arith.constant 16 : index
    %321 = vector.load %arg18[%c8_149, %c16_150] : memref<16x32xf32, #tpu.memory_space<vmem>>, vector<8x8xf32>
    tpu.vector_store %arg18[%c8_149, %c16_150], %320 {strides = array<i32>} : memref<16x32xf32, #tpu.memory_space<vmem>>, vector<8x8xf32>,
    %322 = vector.extract_strided_slice %216 {offsets = [8, 24], sizes = [8, 8], strides = [1, 1]} : vector<16x96xf32> to vector<8x8xf32>
    %323 = vector.extract_strided_slice %216 {offsets = [8, 56], sizes = [8, 8], strides = [1, 1]} : vector<16x96xf32> to vector<8x8xf32>
    %324 = vector.extract_strided_slice %216 {offsets = [8, 88], sizes = [8, 8], strides = [1, 1]} : vector<16x96xf32> to vector<8x8xf32>
    %cst_151 = arith.constant dense<0.000000e+00> : vector<8x8xf32>
    %325 = tpu.matmul %322, %323, %cst_151 {dimension_numbers = #tpu.dot_dimension_numbers<[1], [1], [0], [0], [0, 0, 1, 0], [], []>} : vector<8x8xf32>, vector<8x8xf32>, vector<8x8xf32> -> vector<8x8xf32>
    %cst_152 = arith.constant dense<0xFF800000> : vector<8xf32>
    %326 = vector.multi_reduction <maximumf>, %325, %cst_152 [1] : vector<8x8xf32> to vector<8xf32>
    %327 = vector.shape_cast %326 : vector<8xf32> to vector<8x1xf32>
    %328 = vector.broadcast %327 : vector<8x1xf32> to vector<8x8xf32>
    %329 = arith.subf %325, %328 : vector<8x8xf32>
    %330 = math.exp %329 : vector<8x8xf32>
    %cst_153 = arith.constant dense<0.000000e+00> : vector<8xf32>
    %331 = vector.multi_reduction <add>, %330, %cst_153 [1] : vector<8x8xf32> to vector<8xf32>
    %332 = vector.shape_cast %331 : vector<8xf32> to vector<8x1xf32>
    %333 = vector.broadcast %332 : vector<8x1xf32> to vector<8x8xf32>
    %334 = arith.divf %330, %333 : vector<8x8xf32>
    %cst_154 = arith.constant dense<0.000000e+00> : vector<8x8xf32>
    %335 = tpu.matmul %334, %324, %cst_154 {dimension_numbers = #tpu.dot_dimension_numbers<[1], [0], [0], [1], [0, 0, 1, 1], [], []>} : vector<8x8xf32>, vector<8x8xf32>, vector<8x8xf32> -> vector<8x8xf32>
    %c8_155 = arith.constant 8 : index
    %c24_156 = arith.constant 24 : index
    %336 = vector.load %arg18[%c8_155, %c24_156] : memref<16x32xf32, #tpu.memory_space<vmem>>, vector<8x8xf32>
    tpu.vector_store %arg18[%c8_155, %c24_156], %335 {strides = array<i32>} : memref<16x32xf32, #tpu.memory_space<vmem>>, vector<8x8xf32>,
    %c0_157 = arith.constant 0 : index
    %c0_158 = arith.constant 0 : index
    %337 = vector.load %arg18[%c0_157, %c0_158] : memref<16x32xf32, #tpu.memory_space<vmem>>, vector<16x32xf32>
    %c1_159 = arith.constant 1 : index
    %c0_160 = arith.constant 0 : index
    %c0_161 = arith.constant 0 : index
    %338 = vector.load %arg6[%c1_159, %c0_160, %c0_161] : memref<2x32x32xf32, #tpu.memory_space<vmem>>, vector<1x32x32xf32>
    %339 = vector.shape_cast %338 : vector<1x32x32xf32> to vector<32x32xf32>
    %cst_162 = arith.constant dense<0.000000e+00> : vector<16x32xf32>
    %340 = tpu.matmul %337, %339, %cst_162 {dimension_numbers = #tpu.dot_dimension_numbers<[1], [0], [0], [1], [0, 0, 1, 1], [], []>} : vector<16x32xf32>, vector<32x32xf32>, vector<16x32xf32> -> vector<16x32xf32>
    %c1_163 = arith.constant 1 : index
    %c0_164 = arith.constant 0 : index
    %c0_165 = arith.constant 0 : index
    %341 = vector.load %arg7[%c1_163, %c0_164, %c0_165] : memref<2x1x32xf32, #tpu.memory_space<vmem>>, vector<1x1x32xf32>
    %342 = vector.shape_cast %341 : vector<1x1x32xf32> to vector<1x32xf32>
    %343 = vector.broadcast %342 : vector<1x32xf32> to vector<16x32xf32>
    %344 = arith.addf %340, %343 : vector<16x32xf32>
    %345 = arith.addf %209, %344 : vector<16x32xf32>
    %c1_166 = arith.constant 1 : index
    %c0_167 = arith.constant 0 : index
    %c0_168 = arith.constant 0 : index
    %346 = vector.load %arg8[%c1_166, %c0_167, %c0_168] : memref<2x1x32xf32, #tpu.memory_space<vmem>>, vector<1x1x32xf32>
    %347 = vector.shape_cast %346 : vector<1x1x32xf32> to vector<1x32xf32>
    %c1_169 = arith.constant 1 : index
    %c0_170 = arith.constant 0 : index
    %c0_171 = arith.constant 0 : index
    %348 = vector.load %arg9[%c1_169, %c0_170, %c0_171] : memref<2x1x32xf32, #tpu.memory_space<vmem>>, vector<1x1x32xf32>
    %349 = vector.shape_cast %348 : vector<1x1x32xf32> to vector<1x32xf32>
    %cst_172 = arith.constant dense<0.000000e+00> : vector<16xf32>
    %350 = vector.multi_reduction <add>, %345, %cst_172 [1] : vector<16x32xf32> to vector<16xf32>
    %351 = vector.shape_cast %350 : vector<16xf32> to vector<16x1xf32>
    %cst_173 = arith.constant 3.200000e+01 : f32
    %352 = vector.broadcast %cst_173 : f32 to vector<16x1xf32>
    %353 = arith.divf %351, %352 : vector<16x1xf32>
    %354 = vector.broadcast %353 : vector<16x1xf32> to vector<16x32xf32>
    %355 = arith.subf %345, %354 : vector<16x32xf32>
    %356 = arith.mulf %355, %355 : vector<16x32xf32>
    %cst_174 = arith.constant dense<0.000000e+00> : vector<16xf32>
    %357 = vector.multi_reduction <add>, %356, %cst_174 [1] : vector<16x32xf32> to vector<16xf32>
    %358 = vector.shape_cast %357 : vector<16xf32> to vector<16x1xf32>
    %cst_175 = arith.constant 3.200000e+01 : f32
    %359 = vector.broadcast %cst_175 : f32 to vector<16x1xf32>
    %360 = arith.divf %358, %359 : vector<16x1xf32>
    %361 = vector.broadcast %353 : vector<16x1xf32> to vector<16x32xf32>
    %362 = arith.subf %345, %361 : vector<16x32xf32>
    %cst_176 = arith.constant 9.99999974E-6 : f32
    %363 = vector.broadcast %cst_176 : f32 to vector<16x1xf32>
    %364 = arith.addf %360, %363 : vector<16x1xf32>
    %365 = math.rsqrt %364 : vector<16x1xf32>
    %366 = vector.broadcast %365 : vector<16x1xf32> to vector<16x32xf32>
    %367 = arith.mulf %362, %366 : vector<16x32xf32>
    %368 = vector.broadcast %347 : vector<1x32xf32> to vector<16x32xf32>
    %369 = arith.mulf %367, %368 : vector<16x32xf32>
    %370 = vector.broadcast %349 : vector<1x32xf32> to vector<16x32xf32>
    %371 = arith.addf %369, %370 : vector<16x32xf32>
    %c1_177 = arith.constant 1 : index
    %c0_178 = arith.constant 0 : index
    %c0_179 = arith.constant 0 : index
    %372 = vector.load %arg10[%c1_177, %c0_178, %c0_179] : memref<2x32x64xf32, #tpu.memory_space<vmem>>, vector<1x32x64xf32>
    %373 = vector.shape_cast %372 : vector<1x32x64xf32> to vector<32x64xf32>
    %cst_180 = arith.constant dense<0.000000e+00> : vector<16x64xf32>
    %374 = tpu.matmul %371, %373, %cst_180 {dimension_numbers = #tpu.dot_dimension_numbers<[1], [0], [0], [1], [0, 0, 1, 1], [], []>} : vector<16x32xf32>, vector<32x64xf32>, vector<16x64xf32> -> vector<16x64xf32>
    %c1_181 = arith.constant 1 : index
    %c0_182 = arith.constant 0 : index
    %c0_183 = arith.constant 0 : index
    %375 = vector.load %arg11[%c1_181, %c0_182, %c0_183] : memref<2x1x64xf32, #tpu.memory_space<vmem>>, vector<1x1x64xf32>
    %376 = vector.shape_cast %375 : vector<1x1x64xf32> to vector<1x64xf32>
    %377 = vector.broadcast %376 : vector<1x64xf32> to vector<16x64xf32>
    %378 = arith.addf %374, %377 : vector<16x64xf32>
    %cst_184 = arith.constant 0.000000e+00 : f32
    %379 = vector.broadcast %cst_184 : f32 to vector<16x64xf32>
    %380 = arith.maximumf %378, %379 : vector<16x64xf32>
    %c1_185 = arith.constant 1 : index
    %c0_186 = arith.constant 0 : index
    %c0_187 = arith.constant 0 : index
    %381 = vector.load %arg12[%c1_185, %c0_186, %c0_187] : memref<2x64x32xf32, #tpu.memory_space<vmem>>, vector<1x64x32xf32>
    %382 = vector.shape_cast %381 : vector<1x64x32xf32> to vector<64x32xf32>
    %cst_188 = arith.constant dense<0.000000e+00> : vector<16x32xf32>
    %383 = tpu.matmul %380, %382, %cst_188 {dimension_numbers = #tpu.dot_dimension_numbers<[1], [0], [0], [1], [0, 0, 1, 1], [], []>} : vector<16x64xf32>, vector<64x32xf32>, vector<16x32xf32> -> vector<16x32xf32>
    %c1_189 = arith.constant 1 : index
    %c0_190 = arith.constant 0 : index
    %c0_191 = arith.constant 0 : index
    %384 = vector.load %arg13[%c1_189, %c0_190, %c0_191] : memref<2x1x32xf32, #tpu.memory_space<vmem>>, vector<1x1x32xf32>
    %385 = vector.shape_cast %384 : vector<1x1x32xf32> to vector<1x32xf32>
    %386 = vector.broadcast %385 : vector<1x32xf32> to vector<16x32xf32>
    %387 = arith.addf %383, %386 : vector<16x32xf32>
    %388 = arith.addf %371, %387 : vector<16x32xf32>
    %c1_192 = arith.constant 1 : index
    %c0_193 = arith.constant 0 : index
    %c0_194 = arith.constant 0 : index
    %389 = vector.load %arg14[%c1_192, %c0_193, %c0_194] : memref<2x1x32xf32, #tpu.memory_space<vmem>>, vector<1x1x32xf32>
    %390 = vector.shape_cast %389 : vector<1x1x32xf32> to vector<1x32xf32>
    %c1_195 = arith.constant 1 : index
    %c0_196 = arith.constant 0 : index
    %c0_197 = arith.constant 0 : index
    %391 = vector.load %arg15[%c1_195, %c0_196, %c0_197] : memref<2x1x32xf32, #tpu.memory_space<vmem>>, vector<1x1x32xf32>
    %392 = vector.shape_cast %391 : vector<1x1x32xf32> to vector<1x32xf32>
    %cst_198 = arith.constant dense<0.000000e+00> : vector<16xf32>
    %393 = vector.multi_reduction <add>, %388, %cst_198 [1] : vector<16x32xf32> to vector<16xf32>
    %394 = vector.shape_cast %393 : vector<16xf32> to vector<16x1xf32>
    %cst_199 = arith.constant 3.200000e+01 : f32
    %395 = vector.broadcast %cst_199 : f32 to vector<16x1xf32>
    %396 = arith.divf %394, %395 : vector<16x1xf32>
    %397 = vector.broadcast %396 : vector<16x1xf32> to vector<16x32xf32>
    %398 = arith.subf %388, %397 : vector<16x32xf32>
    %399 = arith.mulf %398, %398 : vector<16x32xf32>
    %cst_200 = arith.constant dense<0.000000e+00> : vector<16xf32>
    %400 = vector.multi_reduction <add>, %399, %cst_200 [1] : vector<16x32xf32> to vector<16xf32>
    %401 = vector.shape_cast %400 : vector<16xf32> to vector<16x1xf32>
    %cst_201 = arith.constant 3.200000e+01 : f32
    %402 = vector.broadcast %cst_201 : f32 to vector<16x1xf32>
    %403 = arith.divf %401, %402 : vector<16x1xf32>
    %404 = vector.broadcast %396 : vector<16x1xf32> to vector<16x32xf32>
    %405 = arith.subf %388, %404 : vector<16x32xf32>
    %cst_202 = arith.constant 9.99999974E-6 : f32
    %406 = vector.broadcast %cst_202 : f32 to vector<16x1xf32>
    %407 = arith.addf %403, %406 : vector<16x1xf32>
    %408 = math.rsqrt %407 : vector<16x1xf32>
    %409 = vector.broadcast %408 : vector<16x1xf32> to vector<16x32xf32>
    %410 = arith.mulf %405, %409 : vector<16x32xf32>
    %411 = vector.broadcast %390 : vector<1x32xf32> to vector<16x32xf32>
    %412 = arith.mulf %410, %411 : vector<16x32xf32>
    %413 = vector.broadcast %392 : vector<1x32xf32> to vector<16x32xf32>
    %414 = arith.addf %412, %413 : vector<16x32xf32>
    %c0_203 = arith.constant 0 : index
    %c0_204 = arith.constant 0 : index
    %415 = vector.load %arg16[%c0_203, %c0_204] : memref<32x2xf32, #tpu.memory_space<vmem>>, vector<32x2xf32>
    %cst_205 = arith.constant dense<0.000000e+00> : vector<16x2xf32>
    %416 = tpu.matmul %414, %415, %cst_205 {dimension_numbers = #tpu.dot_dimension_numbers<[1], [0], [0], [1], [0, 0, 1, 1], [], []>} : vector<16x32xf32>, vector<32x2xf32>, vector<16x2xf32> -> vector<16x2xf32>
    %c0_206 = arith.constant 0 : index
    %c0_207 = arith.constant 0 : index
    %417 = vector.load %arg17[%c0_206, %c0_207] : memref<16x2xf32, #tpu.memory_space<vmem>>, vector<16x2xf32>
    tpu.vector_store %arg17[%c0_206, %c0_207], %416 {strides = array<i32>} : memref<16x2xf32, #tpu.memory_space<vmem>>, vector<16x2xf32>,
    return
  }
  func.func @transform_0(%arg0: i32) -> (i32, i32) {
    %c0_i32 = arith.constant 0 : i32
    %c0_i32_0 = arith.constant 0 : i32
    return %arg0, %c0_i32 : i32, i32
  }
  func.func @transform_1(%arg0: i32) -> (i32, i32) {
    %c0_i32 = arith.constant 0 : i32
    %c0_i32_0 = arith.constant 0 : i32
    %c0_i32_1 = arith.constant 0 : i32
    return %c0_i32, %c0_i32_0 : i32, i32
  }
  func.func @transform_2(%arg0: i32) -> (i32, i32) {
    %c0_i32 = arith.constant 0 : i32
    %c0_i32_0 = arith.constant 0 : i32
    %c0_i32_1 = arith.constant 0 : i32
    return %c0_i32, %c0_i32_0 : i32, i32
  }
  func.func @transform_3(%arg0: i32) -> (i32, i32, i32) {
    %c0_i32 = arith.constant 0 : i32
    %c0_i32_0 = arith.constant 0 : i32
    %c0_i32_1 = arith.constant 0 : i32
    %c0_i32_2 = arith.constant 0 : i32
    return %c0_i32, %c0_i32_0, %c0_i32_1 : i32, i32, i32
  }
  func.func @transform_4(%arg0: i32) -> (i32, i32, i32) {
    %c0_i32 = arith.constant 0 : i32
    %c0_i32_0 = arith.constant 0 : i32
    %c0_i32_1 = arith.constant 0 : i32
    %c0_i32_2 = arith.constant 0 : i32
    return %c0_i32, %c0_i32_0, %c0_i32_1 : i32, i32, i32
  }
  func.func @transform_5(%arg0: i32) -> (i32, i32, i32) {
    %c0_i32 = arith.constant 0 : i32
    %c0_i32_0 = arith.constant 0 : i32
    %c0_i32_1 = arith.constant 0 : i32
    %c0_i32_2 = arith.constant 0 : i32
    return %c0_i32, %c0_i32_0, %c0_i32_1 : i32, i32, i32
  }
  func.func @transform_6(%arg0: i32) -> (i32, i32, i32) {
    %c0_i32 = arith.constant 0 : i32
    %c0_i32_0 = arith.constant 0 : i32
    %c0_i32_1 = arith.constant 0 : i32
    %c0_i32_2 = arith.constant 0 : i32
    return %c0_i32, %c0_i32_0, %c0_i32_1 : i32, i32, i32
  }
  func.func @transform_7(%arg0: i32) -> (i32, i32, i32) {
    %c0_i32 = arith.constant 0 : i32
    %c0_i32_0 = arith.constant 0 : i32
    %c0_i32_1 = arith.constant 0 : i32
    %c0_i32_2 = arith.constant 0 : i32
    return %c0_i32, %c0_i32_0, %c0_i32_1 : i32, i32, i32
  }
  func.func @transform_8(%arg0: i32) -> (i32, i32, i32) {
    %c0_i32 = arith.constant 0 : i32
    %c0_i32_0 = arith.constant 0 : i32
    %c0_i32_1 = arith.constant 0 : i32
    %c0_i32_2 = arith.constant 0 : i32
    return %c0_i32, %c0_i32_0, %c0_i32_1 : i32, i32, i32
  }
  func.func @transform_9(%arg0: i32) -> (i32, i32, i32) {
    %c0_i32 = arith.constant 0 : i32
    %c0_i32_0 = arith.constant 0 : i32
    %c0_i32_1 = arith.constant 0 : i32
    %c0_i32_2 = arith.constant 0 : i32
    return %c0_i32, %c0_i32_0, %c0_i32_1 : i32, i32, i32
  }
  func.func @transform_10(%arg0: i32) -> (i32, i32, i32) {
    %c0_i32 = arith.constant 0 : i32
    %c0_i32_0 = arith.constant 0 : i32
    %c0_i32_1 = arith.constant 0 : i32
    %c0_i32_2 = arith.constant 0 : i32
    return %c0_i32, %c0_i32_0, %c0_i32_1 : i32, i32, i32
  }
  func.func @transform_11(%arg0: i32) -> (i32, i32, i32) {
    %c0_i32 = arith.constant 0 : i32
    %c0_i32_0 = arith.constant 0 : i32
    %c0_i32_1 = arith.constant 0 : i32
    %c0_i32_2 = arith.constant 0 : i32
    return %c0_i32, %c0_i32_0, %c0_i32_1 : i32, i32, i32
  }
  func.func @transform_12(%arg0: i32) -> (i32, i32, i32) {
    %c0_i32 = arith.constant 0 : i32
    %c0_i32_0 = arith.constant 0 : i32
    %c0_i32_1 = arith.constant 0 : i32
    %c0_i32_2 = arith.constant 0 : i32
    return %c0_i32, %c0_i32_0, %c0_i32_1 : i32, i32, i32
  }
  func.func @transform_13(%arg0: i32) -> (i32, i32, i32) {
    %c0_i32 = arith.constant 0 : i32
    %c0_i32_0 = arith.constant 0 : i32
    %c0_i32_1 = arith.constant 0 : i32
    %c0_i32_2 = arith.constant 0 : i32
    return %c0_i32, %c0_i32_0, %c0_i32_1 : i32, i32, i32
  }
  func.func @transform_14(%arg0: i32) -> (i32, i32, i32) {
    %c0_i32 = arith.constant 0 : i32
    %c0_i32_0 = arith.constant 0 : i32
    %c0_i32_1 = arith.constant 0 : i32
    %c0_i32_2 = arith.constant 0 : i32
    return %c0_i32, %c0_i32_0, %c0_i32_1 : i32, i32, i32
  }
  func.func @transform_15(%arg0: i32) -> (i32, i32) {
    %c0_i32 = arith.constant 0 : i32
    %c0_i32_0 = arith.constant 0 : i32
    %c0_i32_1 = arith.constant 0 : i32
    return %c0_i32, %c0_i32_0 : i32, i32
  }
  func.func @transform_16(%arg0: i32) -> (i32, i32) {
    %c0_i32 = arith.constant 0 : i32
    %c0_i32_0 = arith.constant 0 : i32
    return %arg0, %c0_i32 : i32, i32
  }
}

</mosaic_0001>

<llo_original>
// kernel: discriminator_forward.1
$region0: #{discriminator_forward.1}
  #allocation0 [shape = 'u32[]', space=smem, size = 0x4, offset = 0x4, fixed_abs, tag = 'smem constant byte address 0x4 - core index']
  #allocation1 [shape = 'u32[144,128]{1,0:T(1,128)}', space=vmem, size = 0x12000, scoped, tag = 'internal scratch']
  #allocation2 [shape = 'f32[16,32]{1,0:T(8,128)}', space=vmem, size = 0x2000, scoped, tag = 'scratch operand']
  %s0 = inlined_call_operand.vmem [shape: f32[16,6], index: 0, kind: input, shape index: {}]
  %s1 = inlined_call_operand.vmem [shape: f32[16,32], index: 1, kind: input, shape index: {}]
  %s2 = inlined_call_operand.vmem [shape: f32[6,32], index: 2, kind: input, shape index: {}]
  %s3 = inlined_call_operand.vmem [shape: f32[2,32,96], index: 3, kind: input, shape index: {}]
  %s4 = inlined_call_operand.vmem [shape: f32[2,1,96], index: 4, kind: input, shape index: {}]
  %s5 = inlined_call_operand.vmem [shape: f32[2,32,32], index: 5, kind: input, shape index: {}]
  %s6 = inlined_call_operand.vmem [shape: f32[2,1,32], index: 6, kind: input, shape index: {}]
  %s7 = inlined_call_operand.vmem [shape: f32[2,1,32], index: 7, kind: input, shape index: {}]
  %s8 = inlined_call_operand.vmem [shape: f32[2,1,32], index: 8, kind: input, shape index: {}]
  %s9 = inlined_call_operand.vmem [shape: f32[2,32,64], index: 9, kind: input, shape index: {}]
  %s10 = inlined_call_operand.vmem [shape: f32[2,1,64], index: 10, kind: input, shape index: {}]
  %s11 = inlined_call_operand.vmem [shape: f32[2,64,32], index: 11, kind: input, shape index: {}]
  %s12 = inlined_call_operand.vmem [shape: f32[2,1,32], index: 12, kind: input, shape index: {}]
  %s13 = inlined_call_operand.vmem [shape: f32[2,1,32], index: 13, kind: input, shape index: {}]
  %s14 = inlined_call_operand.vmem [shape: f32[2,1,32], index: 14, kind: input, shape index: {}]
  %s15 = inlined_call_operand.vmem [shape: f32[32,2], index: 15, kind: input, shape index: {}]
  %s16 = inlined_call_operand.vmem [shape: f32[16,2], index: 16, kind: output, shape index: {}]
  %s17 = sld [smem:[#allocation0]]
  $region74: #{discriminator_forward.1} parent=0
    _
  %s19 = ssub.s32 1, %s17
  %s20 = scalar_select 0, %s19, %s17
  // Predicated region
  $region2: #{discriminator_forward.1} parent=0 // pred_check
    _
  $region3: #{discriminator_forward.1} parent=0 // pred_check_branch
    %22 = sbr.rel (0) target = $region5
  $region4: #{discriminator_forward.1} parent=0 // pred_region
    _
  $region5: #{discriminator_forward.1} parent=0 // pred_fallthru
    _
  // Predicated region
  $region6: #{discriminator_forward.1} parent=0 // pred_check
    _
  $region7: #{discriminator_forward.1} parent=0 // pred_check_branch
    %24 = sbr.rel (0) target = $region9
  $region8: #{discriminator_forward.1} parent=0 // pred_region
    _
  $region9: #{discriminator_forward.1} parent=0 // pred_fallthru
    _
  // Predicated region
  $region10: #{discriminator_forward.1} parent=0 // pred_check
    _
  $region11: #{discriminator_forward.1} parent=0 // pred_check_branch
    %26 = sbr.rel (0) target = $region13
  $region12: #{discriminator_forward.1} parent=0 // pred_region
    _
  $region13: #{discriminator_forward.1} parent=0 // pred_fallthru
    _
  // Predicated region
  $region14: #{discriminator_forward.1} parent=0 // pred_check
    _
  $region15: #{discriminator_forward.1} parent=0 // pred_check_branch
    %28 = sbr.rel (0) target = $region17
  $region16: #{discriminator_forward.1} parent=0 // pred_region
    _
  $region17: #{discriminator_forward.1} parent=0 // pred_fallthru
    _
  // Predicated region
  $region18: #{discriminator_forward.1} parent=0 // pred_check
    _
  $region19: #{discriminator_forward.1} parent=0 // pred_check_branch
    %30 = sbr.rel (0) target = $region21
  $region20: #{discriminator_forward.1} parent=0 // pred_region
    _
  $region21: #{discriminator_forward.1} parent=0 // pred_fallthru
    _
  // Predicated region
  $region22: #{discriminator_forward.1} parent=0 // pred_check
    _
  $region23: #{discriminator_forward.1} parent=0 // pred_check_branch
    %32 = sbr.rel (0) target = $region25
  $region24: #{discriminator_forward.1} parent=0 // pred_region
    _
  $region25: #{discriminator_forward.1} parent=0 // pred_fallthru
    _
  // Predicated region
  $region26: #{discriminator_forward.1} parent=0 // pred_check
    _
  $region27: #{discriminator_forward.1} parent=0 // pred_check_branch
    %34 = sbr.rel (0) target = $region29
  $region28: #{discriminator_forward.1} parent=0 // pred_region
    _
  $region29: #{discriminator_forward.1} parent=0 // pred_fallthru
    _
  // Predicated region
  $region30: #{discriminator_forward.1} parent=0 // pred_check
    _
  $region31: #{discriminator_forward.1} parent=0 // pred_check_branch
    %36 = sbr.rel (0) target = $region33
  $region32: #{discriminator_forward.1} parent=0 // pred_region
    _
  $region33: #{discriminator_forward.1} parent=0 // pred_fallthru
    _
  // Predicated region
  $region34: #{discriminator_forward.1} parent=0 // pred_check
    _
  $region35: #{discriminator_forward.1} parent=0 // pred_check_branch
    %38 = sbr.rel (0) target = $region37
  $region36: #{discriminator_forward.1} parent=0 // pred_region
    _
  $region37: #{discriminator_forward.1} parent=0 // pred_fallthru
    _
  // Predicated region
  $region38: #{discriminator_forward.1} parent=0 // pred_check
    _
  $region39: #{discriminator_forward.1} parent=0 // pred_check_branch
    %40 = sbr.rel (0) target = $region41
  $region40: #{discriminator_forward.1} parent=0 // pred_region
    _
  $region41: #{discriminator_forward.1} parent=0 // pred_fallthru
    _
  // Predicated region
  $region42: #{discriminator_forward.1} parent=0 // pred_check
    _
  $region43: #{discriminator_forward.1} parent=0 // pred_check_branch
    %42 = sbr.rel (0) target = $region45
  $region44: #{discriminator_forward.1} parent=0 // pred_region
    _
  $region45: #{discriminator_forward.1} parent=0 // pred_fallthru
    _
  // Predicated region
  $region46: #{discriminator_forward.1} parent=0 // pred_check
    _
  $region47: #{discriminator_forward.1} parent=0 // pred_check_branch
    %44 = sbr.rel (0) target = $region49
  $region48: #{discriminator_forward.1} parent=0 // pred_region
    _
  $region49: #{discriminator_forward.1} parent=0 // pred_fallthru
    _
  // Predicated region
  $region50: #{discriminator_forward.1} parent=0 // pred_check
    _
  $region51: #{discriminator_forward.1} parent=0 // pred_check_branch
    %46 = sbr.rel (0) target = $region53
  $region52: #{discriminator_forward.1} parent=0 // pred_region
    _
  $region53: #{discriminator_forward.1} parent=0 // pred_fallthru
    _
  // Predicated region
  $region54: #{discriminator_forward.1} parent=0 // pred_check
    _
  $region55: #{discriminator_forward.1} parent=0 // pred_check_branch
    %48 = sbr.rel (0) target = $region57
  $region56: #{discriminator_forward.1} parent=0 // pred_region
    _
  $region57: #{discriminator_forward.1} parent=0 // pred_fallthru
    _
  // Predicated region
  $region58: #{discriminator_forward.1} parent=0 // pred_check
    _
  $region59: #{discriminator_forward.1} parent=0 // pred_check_branch
    %50 = sbr.rel (0) target = $region61
  $region60: #{discriminator_forward.1} parent=0 // pred_region
    _
  $region61: #{discriminator_forward.1} parent=0 // pred_fallthru
    _
  // Predicated region
  $region62: #{discriminator_forward.1} parent=0 // pred_check
    _
  $region63: #{discriminator_forward.1} parent=0 // pred_check_branch
    %52 = sbr.rel (0) target = $region65
  $region64: #{discriminator_forward.1} parent=0 // pred_region
    _
  $region65: #{discriminator_forward.1} parent=0 // pred_fallthru
    _
  %v53 = vld [vmem:[%s0] sm:$0xff]
  %v54 = vld [vmem:[%s0 + $0x8] sm:$0xff]
  %v55 = vld [vmem:[%s2] sm:$0x3f]
  %v56 = vld [vmem:[%s1] sm:$0xff]
  %v57 = vld [vmem:[%s1 + $0x8] sm:$0xff]
  %vm58 = vcmask 48128
  %v60 = vsel %vm58, %v53, 0
  %v63 = vsel %vm58, %v54, 0
  %vm65 = vcmask 1045504
  %v67 = vsel %vm65, %v55, 0
  %69 = vmatprep.subr.mxu0 0.0
  %70 = vmatpush1.msra.mxu0 0.0
  %71 = vmatprep.subr.mxu0 0.0
  %72 = vmatpush1.msra.mxu0 0.0
  %73 = vmatprep.subr.mxu0 0.0
  %74 = vmatpush1.msra.mxu0 0.0
  %75 = vmatprep.subr.mxu0 0.0
  %76 = vmatpush1.msra.mxu0 0.0
  %77 = vmatprep.subr.mxu0 0.0
  %78 = vmatpush1.msra.mxu0 0.0
  %79 = vmatprep.subr.mxu0 0.0
  %80 = vmatpush1.msra.mxu0 0.0
  %81 = vmatprep.subr.mxu0 0.0
  %82 = vmatpush1.msra.mxu0 0.0
  %83 = vmatprep.subr.mxu0 0.0
  %84 = vmatpush1.msra.mxu0 0.0
  %85 = vmatprep.subr.mxu0 0.0
  %86 = vmatpush1.msra.mxu0 0.0
  %87 = vmatprep.subr.mxu0 0.0
  %88 = vmatpush1.msra.mxu0 0.0
  %89 = vmatprep.subr.mxu0 0.0
  %90 = vmatpush1.msra.mxu0 0.0
  %91 = vmatprep.subr.mxu0 0.0
  %92 = vmatpush1.msra.mxu0 0.0
  %93 = vmatprep.subr.mxu0 0.0
  %94 = vmatpush1.msra.mxu0 0.0
  %95 = vmatprep.subr.mxu0 0.0
  %96 = vmatpush1.msra.mxu0 0.0
  %97 = vmatprep.subr.mxu0 0.0
  %98 = vmatpush1.msra.mxu0 0.0
  %99 = vmatprep.subr.mxu0 0.0
  %100 = vmatpush1.msra.mxu0 %v67
  %101 = vmatprep.subr.mxu0 0.0
  %102 = vmatpush2.msra.mxu0 0.0
  %103 = vmatprep.subr.mxu0 0.0
  %104 = vmatpush2.msra.mxu0 0.0
  %105 = vmatprep.subr.mxu0 0.0
  %106 = vmatpush2.msra.mxu0 0.0
  %107 = vmatprep.subr.mxu0 0.0
  %108 = vmatpush2.msra.mxu0 0.0
  %109 = vmatprep.subr.mxu0 0.0
  %110 = vmatpush2.msra.mxu0 0.0
  %111 = vmatprep.subr.mxu0 0.0
  %112 = vmatpush2.msra.mxu0 0.0
  %113 = vmatprep.subr.mxu0 0.0
  %114 = vmatpush2.msra.mxu0 0.0
  %115 = vmatprep.subr.mxu0 0.0
  %116 = vmatpush2.msra.mxu0 0.0
  %117 = vmatprep.subr.mxu0 0.0
  %118 = vmatpush2.msra.mxu0 0.0
  %119 = vmatprep.subr.mxu0 0.0
  %120 = vmatpush2.msra.mxu0 0.0
  %121 = vmatprep.subr.mxu0 0.0
  %122 = vmatpush2.msra.mxu0 0.0
  %123 = vmatprep.subr.mxu0 0.0
  %124 = vmatpush2.msra.mxu0 0.0
  %125 = vmatprep.subr.mxu0 0.0
  %126 = vmatpush2.msra.mxu0 0.0
  %127 = vmatprep.subr.mxu0 0.0
  %128 = vmatpush2.msra.mxu0 0.0
  %129 = vmatprep.subr.mxu0 0.0
  %130 = vmatpush2.msra.mxu0 0.0
  %131 = vmatprep.subr.mxu0 0.0
  %132 = vmatpush2.msra.mxu0 0.0
  %133 = vmatprep.mubr.f32.mxu0 0.0
  %134 = vmatmul.mubr.f32.gmra.mxu0 %v60
  %v135 = vpop.f32.mrf.mxu0
  %v136 = vadd.f32 %v56, %v135
  %v137 = vpop.f32.mrf.mxu0
  %138 = vmatprep.mubr.f32.mxu0 0.0
  %139 = vmatmul.mubr.f32.gmra.mxu0 %v63
  %v140 = vpop.f32.mrf.mxu0
  %v141 = vadd.f32 %v57, %v140
  %v142 = vpop.f32.mrf.mxu0
  %143 = vdwg.mxu0
  %v144 = vld [vmem:[%s3] sm:$0xff]
  %v145 = vld [vmem:[%s3 + $0x8] sm:$0xff]
  %v146 = vld [vmem:[%s3 + $0x10] sm:$0xff]
  %v147 = vld [vmem:[%s3 + $0x18] sm:$0xff]
  %v148 = vld [vmem:[%s4] sm:$0x1]
  %v150 = vlaneseq
  %v151 = vshrl.u32 %v150, 7
  %v152 = vsub.s32 0, %v151
  %v153 = vrot.slane %v148, %v152
  %vm155 = vcmask 261120
  %v157 = vsel %vm155, %v136, 0
  %v160 = vsel %vm155, %v141, 0
  %162 = vmatprep.subr.mxu0 0.0
  %163 = vmatpush1.msra.mxu0 0.0
  %164 = vmatprep.subr.mxu0 0.0
  %165 = vmatpush1.msra.mxu0 0.0
  %166 = vmatprep.subr.mxu0 0.0
  %167 = vmatpush1.msra.mxu0 0.0
  %168 = vmatprep.subr.mxu0 0.0
  %169 = vmatpush1.msra.mxu0 0.0
  %170 = vmatprep.subr.mxu0 0.0
  %171 = vmatpush1.msra.mxu0 0.0
  %172 = vmatprep.subr.mxu0 0.0
  %173 = vmatpush1.msra.mxu0 0.0
  %174 = vmatprep.subr.mxu0 0.0
  %175 = vmatpush1.msra.mxu0 0.0
  %176 = vmatprep.subr.mxu0 0.0
  %177 = vmatpush1.msra.mxu0 0.0
  %178 = vmatprep.subr.mxu0 0.0
  %179 = vmatpush1.msra.mxu0 0.0
  %180 = vmatprep.subr.mxu0 0.0
  %181 = vmatpush1.msra.mxu0 0.0
  %182 = vmatprep.subr.mxu0 0.0
  %183 = vmatpush1.msra.mxu0 0.0
  %184 = vmatprep.subr.mxu0 0.0
  %185 = vmatpush1.msra.mxu0 0.0
  %186 = vmatprep.subr.mxu0 0.0
  %187 = vmatpush1.msra.mxu0 %v147
  %188 = vmatprep.subr.mxu0 0.0
  %189 = vmatpush1.msra.mxu0 %v146
  %190 = vmatprep.subr.mxu0 0.0
  %191 = vmatpush1.msra.mxu0 %v145
  %192 = vmatprep.subr.mxu0 0.0
  %193 = vmatpush1.msra.mxu0 %v144
  %194 = vmatprep.subr.mxu0 0.0
  %195 = vmatpush2.msra.mxu0 0.0
  %196 = vmatprep.subr.mxu0 0.0
  %197 = vmatpush2.msra.mxu0 0.0
  %198 = vmatprep.subr.mxu0 0.0
  %199 = vmatpush2.msra.mxu0 0.0
  %200 = vmatprep.subr.mxu0 0.0
  %201 = vmatpush2.msra.mxu0 0.0
  %202 = vmatprep.subr.mxu0 0.0
  %203 = vmatpush2.msra.mxu0 0.0
  %204 = vmatprep.subr.mxu0 0.0
  %205 = vmatpush2.msra.mxu0 0.0
  %206 = vmatprep.subr.mxu0 0.0
  %207 = vmatpush2.msra.mxu0 0.0
  %208 = vmatprep.subr.mxu0 0.0
  %209 = vmatpush2.msra.mxu0 0.0
  %210 = vmatprep.subr.mxu0 0.0
  %211 = vmatpush2.msra.mxu0 0.0
  %212 = vmatprep.subr.mxu0 0.0
  %213 = vmatpush2.msra.mxu0 0.0
  %214 = vmatprep.subr.mxu0 0.0
  %215 = vmatpush2.msra.mxu0 0.0
  %216 = vmatprep.subr.mxu0 0.0
  %217 = vmatpush2.msra.mxu0 0.0
  %218 = vmatprep.subr.mxu0 0.0
  %219 = vmatpush2.msra.mxu0 0.0
  %220 = vmatprep.subr.mxu0 0.0
  %221 = vmatpush2.msra.mxu0 0.0
  %222 = vmatprep.subr.mxu0 0.0
  %223 = vmatpush2.msra.mxu0 0.0
  %224 = vmatprep.subr.mxu0 0.0
  %225 = vmatpush2.msra.mxu0 0.0
  %226 = vmatprep.mubr.f32.mxu0 0.0
  %227 = vmatmul.mubr.f32.gmra.mxu0 %v157
  %v228 = vpop.f32.mrf.mxu0
  %v229 = vadd.f32 %v153, %v228
  %v230 = vpop.f32.mrf.mxu0
  %231 = vmatprep.mubr.f32.mxu0 0.0
  %232 = vmatmul.mubr.f32.gmra.mxu0 %v160
  %v233 = vpop.f32.mrf.mxu0
  %v234 = vadd.f32 %v153, %v233
  %v235 = vpop.f32.mrf.mxu0
  %236 = vdwg.mxu0
  %238 = vrot.lane.b32.xlu0 %v229, 96
  %v239 = vpop.permute.xlu0 %238
  %vm240 = vcmask 64512
  %v241 = vsel %vm240, %v229, 0
  %v243 = vsel %vm240, %v239, 0
  %245 = vmatprep.subr.mxu0 0.0
  %246 = vmatpush1.xpose.msra.mxu0 0.0
  %247 = vmatprep.subr.mxu0 0.0
  %248 = vmatpush1.xpose.msra.mxu0 0.0
  %249 = vmatprep.subr.mxu0 0.0
  %250 = vmatpush1.xpose.msra.mxu0 0.0
  %251 = vmatprep.subr.mxu0 0.0
  %252 = vmatpush1.xpose.msra.mxu0 0.0
  %253 = vmatprep.subr.mxu0 0.0
  %254 = vmatpush1.xpose.msra.mxu0 0.0
  %255 = vmatprep.subr.mxu0 0.0
  %256 = vmatpush1.xpose.msra.mxu0 0.0
  %257 = vmatprep.subr.mxu0 0.0
  %258 = vmatpush1.xpose.msra.mxu0 0.0
  %259 = vmatprep.subr.mxu0 0.0
  %260 = vmatpush1.xpose.msra.mxu0 0.0
  %261 = vmatprep.subr.mxu0 0.0
  %262 = vmatpush1.xpose.msra.mxu0 0.0
  %263 = vmatprep.subr.mxu0 0.0
  %264 = vmatpush1.xpose.msra.mxu0 0.0
  %265 = vmatprep.subr.mxu0 0.0
  %266 = vmatpush1.xpose.msra.mxu0 0.0
  %267 = vmatprep.subr.mxu0 0.0
  %268 = vmatpush1.xpose.msra.mxu0 0.0
  %269 = vmatprep.subr.mxu0 0.0
  %270 = vmatpush1.xpose.msra.mxu0 0.0
  %271 = vmatprep.subr.mxu0 0.0
  %272 = vmatpush1.xpose.msra.mxu0 0.0
  %273 = vmatprep.subr.mxu0 0.0
  %274 = vmatpush1.xpose.msra.mxu0 0.0
  %275 = vmatprep.subr.mxu0 0.0
  %276 = vmatpush1.xpose.msra.mxu0 %v243
  %277 = vmatprep.subr.mxu0 0.0
  %278 = vmatpush2.xpose.msra.mxu0 0.0
  %279 = vmatprep.subr.mxu0 0.0
  %280 = vmatpush2.xpose.msra.mxu0 0.0
  %281 = vmatprep.subr.mxu0 0.0
  %282 = vmatpush2.xpose.msra.mxu0 0.0
  %283 = vmatprep.subr.mxu0 0.0
  %284 = vmatpush2.xpose.msra.mxu0 0.0
  %285 = vmatprep.subr.mxu0 0.0
  %286 = vmatpush2.xpose.msra.mxu0 0.0
  %287 = vmatprep.subr.mxu0 0.0
  %288 = vmatpush2.xpose.msra.mxu0 0.0
  %289 = vmatprep.subr.mxu0 0.0
  %290 = vmatpush2.xpose.msra.mxu0 0.0
  %291 = vmatprep.subr.mxu0 0.0
  %292 = vmatpush2.xpose.msra.mxu0 0.0
  %293 = vmatprep.subr.mxu0 0.0
  %294 = vmatpush2.xpose.msra.mxu0 0.0
  %295 = vmatprep.subr.mxu0 0.0
  %296 = vmatpush2.xpose.msra.mxu0 0.0
  %297 = vmatprep.subr.mxu0 0.0
  %298 = vmatpush2.xpose.msra.mxu0 0.0
  %299 = vmatprep.subr.mxu0 0.0
  %300 = vmatpush2.xpose.msra.mxu0 0.0
  %301 = vmatprep.subr.mxu0 0.0
  %302 = vmatpush2.xpose.msra.mxu0 0.0
  %303 = vmatprep.subr.mxu0 0.0
  %304 = vmatpush2.xpose.msra.mxu0 0.0
  %305 = vmatprep.subr.mxu0 0.0
  %306 = vmatpush2.xpose.msra.mxu0 0.0
  %307 = vmatprep.subr.mxu0 0.0
  %308 = vmatpush2.xpose.msra.mxu0 0.0
  %309 = vmatprep.mubr.f32.mxu0 0.0
  %310 = vmatmul.mubr.f32.gmra.mxu0 %v241
  %v311 = vpop.f32.mrf.mxu0
  %v312 = vadd.f32 0.0, %v311
  %v313 = vpop.f32.mrf.mxu0
  %314 = vdwg.mxu0
  %v315 = vsel %vm240, %v312, -inf
  %316 = vmax.xlane.f32.xlu0 %v315
  %v317 = vpop.xlane.xlu0 %316
  %v318 = vsub.f32 %v312, %v317
  %v319 = vmul.f32 %v318, 1.442695
  %v320 = vpow.pop %v319
  %v321 = vsel %vm240, %v320, 0.0
  %322 = vadd.xlane.f32.xlu0 %v321
  %v323 = vpop.xlane.xlu0 %322
  %v324 = vrcp.pop %v323
  %v325 = vmul.f32 %v320, %v324
  %326 = vrot.lane.b32.xlu0 %v229, 64
  %v327 = vpop.permute.xlu0 %326
  %v330 = vsel %vm240, %v325, 0
  %332 = vmatprep.subr.mxu0 0.0
  %333 = vmatpush1.msra.mxu0 0.0
  %334 = vmatprep.subr.mxu0 0.0
  %335 = vmatpush1.msra.mxu0 0.0
  %336 = vmatprep.subr.mxu0 0.0
  %337 = vmatpush1.msra.mxu0 0.0
  %338 = vmatprep.subr.mxu0 0.0
  %339 = vmatpush1.msra.mxu0 0.0
  %340 = vmatprep.subr.mxu0 0.0
  %341 = vmatpush1.msra.mxu0 0.0
  %342 = vmatprep.subr.mxu0 0.0
  %343 = vmatpush1.msra.mxu0 0.0
  %344 = vmatprep.subr.mxu0 0.0
  %345 = vmatpush1.msra.mxu0 0.0
  %346 = vmatprep.subr.mxu0 0.0
  %347 = vmatpush1.msra.mxu0 0.0
  %348 = vmatprep.subr.mxu0 0.0
  %349 = vmatpush1.msra.mxu0 0.0
  %350 = vmatprep.subr.mxu0 0.0
  %351 = vmatpush1.msra.mxu0 0.0
  %352 = vmatprep.subr.mxu0 0.0
  %353 = vmatpush1.msra.mxu0 0.0
  %354 = vmatprep.subr.mxu0 0.0
  %355 = vmatpush1.msra.mxu0 0.0
  %356 = vmatprep.subr.mxu0 0.0
  %357 = vmatpush1.msra.mxu0 0.0
  %358 = vmatprep.subr.mxu0 0.0
  %359 = vmatpush1.msra.mxu0 0.0
  %360 = vmatprep.subr.mxu0 0.0
  %361 = vmatpush1.msra.mxu0 0.0
  %362 = vmatprep.subr.mxu0 0.0
  %363 = vmatpush1.msra.mxu0 %v327
  %364 = vmatprep.subr.mxu0 0.0
  %365 = vmatpush2.msra.mxu0 0.0
  %366 = vmatprep.subr.mxu0 0.0
  %367 = vmatpush2.msra.mxu0 0.0
  %368 = vmatprep.subr.mxu0 0.0
  %369 = vmatpush2.msra.mxu0 0.0
  %370 = vmatprep.subr.mxu0 0.0
  %371 = vmatpush2.msra.mxu0 0.0
  %372 = vmatprep.subr.mxu0 0.0
  %373 = vmatpush2.msra.mxu0 0.0
  %374 = vmatprep.subr.mxu0 0.0
  %375 = vmatpush2.msra.mxu0 0.0
  %376 = vmatprep.subr.mxu0 0.0
  %377 = vmatpush2.msra.mxu0 0.0
  %378 = vmatprep.subr.mxu0 0.0
  %379 = vmatpush2.msra.mxu0 0.0
  %380 = vmatprep.subr.mxu0 0.0
  %381 = vmatpush2.msra.mxu0 0.0
  %382 = vmatprep.subr.mxu0 0.0
  %383 = vmatpush2.msra.mxu0 0.0
  %384 = vmatprep.subr.mxu0 0.0
  %385 = vmatpush2.msra.mxu0 0.0
  %386 = vmatprep.subr.mxu0 0.0
  %387 = vmatpush2.msra.mxu0 0.0
  %388 = vmatprep.subr.mxu0 0.0
  %389 = vmatpush2.msra.mxu0 0.0
  %390 = vmatprep.subr.mxu0 0.0
  %391 = vmatpush2.msra.mxu0 0.0
  %392 = vmatprep.subr.mxu0 0.0
  %393 = vmatpush2.msra.mxu0 0.0
  %394 = vmatprep.subr.mxu0 0.0
  %395 = vmatpush2.msra.mxu0 0.0
  %396 = vmatprep.mubr.f32.mxu0 0.0
  %397 = vmatmul.mubr.f32.gmra.mxu0 %v330
  %v398 = vpop.f32.mrf.mxu0
  %v399 = vadd.f32 0.0, %v398
  %v400 = vpop.f32.mrf.mxu0
  %401 = vdwg.mxu0
  %402 = vst.msk [vmem:[#allocation2] sm:$0xff] %vm240, %v399
  %403 = vrot.lane.b32.xlu0 %v229, 120
  %v404 = vpop.permute.xlu0 %403
  %405 = vrot.lane.b32.xlu0 %v229, 88
  %v406 = vpop.permute.xlu0 %405
  %v407 = vsel %vm240, %v404, 0
  %v409 = vsel %vm240, %v406, 0
  %411 = vmatprep.subr.mxu0 0.0
  %412 = vmatpush1.xpose.msra.mxu0 0.0
  %413 = vmatprep.subr.mxu0 0.0
  %414 = vmatpush1.xpose.msra.mxu0 0.0
  %415 = vmatprep.subr.mxu0 0.0
  %416 = vmatpush1.xpose.msra.mxu0 0.0
  %417 = vmatprep.subr.mxu0 0.0
  %418 = vmatpush1.xpose.msra.mxu0 0.0
  %419 = vmatprep.subr.mxu0 0.0
  %420 = vmatpush1.xpose.msra.mxu0 0.0
  %421 = vmatprep.subr.mxu0 0.0
  %422 = vmatpush1.xpose.msra.mxu0 0.0
  %423 = vmatprep.subr.mxu0 0.0
  %424 = vmatpush1.xpose.msra.mxu0 0.0
  %425 = vmatprep.subr.mxu0 0.0
  %426 = vmatpush1.xpose.msra.mxu0 0.0
  %427 = vmatprep.subr.mxu0 0.0
  %428 = vmatpush1.xpose.msra.mxu0 0.0
  %429 = vmatprep.subr.mxu0 0.0
  %430 = vmatpush1.xpose.msra.mxu0 0.0
  %431 = vmatprep.subr.mxu0 0.0
  %432 = vmatpush1.xpose.msra.mxu0 0.0
  %433 = vmatprep.subr.mxu0 0.0
  %434 = vmatpush1.xpose.msra.mxu0 0.0
  %435 = vmatprep.subr.mxu0 0.0
  %436 = vmatpush1.xpose.msra.mxu0 0.0
  %437 = vmatprep.subr.mxu0 0.0
  %438 = vmatpush1.xpose.msra.mxu0 0.0
  %439 = vmatprep.subr.mxu0 0.0
  %440 = vmatpush1.xpose.msra.mxu0 0.0
  %441 = vmatprep.subr.mxu0 0.0
  %442 = vmatpush1.xpose.msra.mxu0 %v409
  %443 = vmatprep.subr.mxu0 0.0
  %444 = vmatpush2.xpose.msra.mxu0 0.0
  %445 = vmatprep.subr.mxu0 0.0
  %446 = vmatpush2.xpose.msra.mxu0 0.0
  %447 = vmatprep.subr.mxu0 0.0
  %448 = vmatpush2.xpose.msra.mxu0 0.0
  %449 = vmatprep.subr.mxu0 0.0
  %450 = vmatpush2.xpose.msra.mxu0 0.0
  %451 = vmatprep.subr.mxu0 0.0
  %452 = vmatpush2.xpose.msra.mxu0 0.0
  %453 = vmatprep.subr.mxu0 0.0
  %454 = vmatpush2.xpose.msra.mxu0 0.0
  %455 = vmatprep.subr.mxu0 0.0
  %456 = vmatpush2.xpose.msra.mxu0 0.0
  %457 = vmatprep.subr.mxu0 0.0
  %458 = vmatpush2.xpose.msra.mxu0 0.0
  %459 = vmatprep.subr.mxu0 0.0
  %460 = vmatpush2.xpose.msra.mxu0 0.0
  %461 = vmatprep.subr.mxu0 0.0
  %462 = vmatpush2.xpose.msra.mxu0 0.0
  %463 = vmatprep.subr.mxu0 0.0
  %464 = vmatpush2.xpose.msra.mxu0 0.0
  %465 = vmatprep.subr.mxu0 0.0
  %466 = vmatpush2.xpose.msra.mxu0 0.0
  %467 = vmatprep.subr.mxu0 0.0
  %468 = vmatpush2.xpose.msra.mxu0 0.0
  %469 = vmatprep.subr.mxu0 0.0
  %470 = vmatpush2.xpose.msra.mxu0 0.0
  %471 = vmatprep.subr.mxu0 0.0
  %472 = vmatpush2.xpose.msra.mxu0 0.0
  %473 = vmatprep.subr.mxu0 0.0
  %474 = vmatpush2.xpose.msra.mxu0 0.0
  %475 = vmatprep.mubr.f32.mxu0 0.0
  %476 = vmatmul.mubr.f32.gmra.mxu0 %v407
  %v477 = vpop.f32.mrf.mxu0
  %v478 = vadd.f32 0.0, %v477
  %v479 = vpop.f32.mrf.mxu0
  %480 = vdwg.mxu0
  %v481 = vsel %vm240, %v478, -inf
  %482 = vmax.xlane.f32.xlu0 %v481
  %v483 = vpop.xlane.xlu0 %482
  %v484 = vsub.f32 %v478, %v483
  %v485 = vmul.f32 %v484, 1.442695
  %v486 = vpow.pop %v485
  %v487 = vsel %vm240, %v486, 0.0
  %488 = vadd.xlane.f32.xlu0 %v487
  %v489 = vpop.xlane.xlu0 %488
  %v490 = vrcp.pop %v489
  %v491 = vmul.f32 %v486, %v490
  %492 = vrot.lane.b32.xlu0 %v229, 56
  %v493 = vpop.permute.xlu0 %492
  %v496 = vsel %vm240, %v491, 0
  %498 = vmatprep.subr.mxu0 0.0
  %499 = vmatpush1.msra.mxu0 0.0
  %500 = vmatprep.subr.mxu0 0.0
  %501 = vmatpush1.msra.mxu0 0.0
  %502 = vmatprep.subr.mxu0 0.0
  %503 = vmatpush1.msra.mxu0 0.0
  %504 = vmatprep.subr.mxu0 0.0
  %505 = vmatpush1.msra.mxu0 0.0
  %506 = vmatprep.subr.mxu0 0.0
  %507 = vmatpush1.msra.mxu0 0.0
  %508 = vmatprep.subr.mxu0 0.0
  %509 = vmatpush1.msra.mxu0 0.0
  %510 = vmatprep.subr.mxu0 0.0
  %511 = vmatpush1.msra.mxu0 0.0
  %512 = vmatprep.subr.mxu0 0.0
  %513 = vmatpush1.msra.mxu0 0.0
  %514 = vmatprep.subr.mxu0 0.0
  %515 = vmatpush1.msra.mxu0 0.0
  %516 = vmatprep.subr.mxu0 0.0
  %517 = vmatpush1.msra.mxu0 0.0
  %518 = vmatprep.subr.mxu0 0.0
  %519 = vmatpush1.msra.mxu0 0.0
  %520 = vmatprep.subr.mxu0 0.0
  %521 = vmatpush1.msra.mxu0 0.0
  %522 = vmatprep.subr.mxu0 0.0
  %523 = vmatpush1.msra.mxu0 0.0
  %524 = vmatprep.subr.mxu0 0.0
  %525 = vmatpush1.msra.mxu0 0.0
  %526 = vmatprep.subr.mxu0 0.0
  %527 = vmatpush1.msra.mxu0 0.0
  %528 = vmatprep.subr.mxu0 0.0
  %529 = vmatpush1.msra.mxu0 %v493
  %530 = vmatprep.subr.mxu0 0.0
  %531 = vmatpush2.msra.mxu0 0.0
  %532 = vmatprep.subr.mxu0 0.0
  %533 = vmatpush2.msra.mxu0 0.0
  %534 = vmatprep.subr.mxu0 0.0
  %535 = vmatpush2.msra.mxu0 0.0
  %536 = vmatprep.subr.mxu0 0.0
  %537 = vmatpush2.msra.mxu0 0.0
  %538 = vmatprep.subr.mxu0 0.0
  %539 = vmatpush2.msra.mxu0 0.0
  %540 = vmatprep.subr.mxu0 0.0
  %541 = vmatpush2.msra.mxu0 0.0
  %542 = vmatprep.subr.mxu0 0.0
  %543 = vmatpush2.msra.mxu0 0.0
  %544 = vmatprep.subr.mxu0 0.0
  %545 = vmatpush2.msra.mxu0 0.0
  %546 = vmatprep.subr.mxu0 0.0
  %547 = vmatpush2.msra.mxu0 0.0
  %548 = vmatprep.subr.mxu0 0.0
  %549 = vmatpush2.msra.mxu0 0.0
  %550 = vmatprep.subr.mxu0 0.0
  %551 = vmatpush2.msra.mxu0 0.0
  %552 = vmatprep.subr.mxu0 0.0
  %553 = vmatpush2.msra.mxu0 0.0
  %554 = vmatprep.subr.mxu0 0.0
  %555 = vmatpush2.msra.mxu0 0.0
  %556 = vmatprep.subr.mxu0 0.0
  %557 = vmatpush2.msra.mxu0 0.0
  %558 = vmatprep.subr.mxu0 0.0
  %559 = vmatpush2.msra.mxu0 0.0
  %560 = vmatprep.subr.mxu0 0.0
  %561 = vmatpush2.msra.mxu0 0.0
  %562 = vmatprep.mubr.f32.mxu0 0.0
  %563 = vmatmul.mubr.f32.gmra.mxu0 %v496
  %v564 = vpop.f32.mrf.mxu0
  %v565 = vadd.f32 0.0, %v564
  %v566 = vpop.f32.mrf.mxu0
  %567 = vdwg.mxu0
  %569 = vrot.lane.b32.xlu0 %v565, 8
  %v570 = vpop.permute.xlu0 %569
  %vm572 = vcmask 130112
  %573 = vst.msk [vmem:[#allocation2] sm:$0xff] %vm572, %v570
  %574 = vrot.lane.b32.xlu0 %v229, 112
  %v575 = vpop.permute.xlu0 %574
  %576 = vrot.lane.b32.xlu0 %v229, 80
  %v577 = vpop.permute.xlu0 %576
  %v578 = vsel %vm240, %v575, 0
  %v580 = vsel %vm240, %v577, 0
  %582 = vmatprep.subr.mxu0 0.0
  %583 = vmatpush1.xpose.msra.mxu0 0.0
  %584 = vmatprep.subr.mxu0 0.0
  %585 = vmatpush1.xpose.msra.mxu0 0.0
  %586 = vmatprep.subr.mxu0 0.0
  %587 = vmatpush1.xpose.msra.mxu0 0.0
  %588 = vmatprep.subr.mxu0 0.0
  %589 = vmatpush1.xpose.msra.mxu0 0.0
  %590 = vmatprep.subr.mxu0 0.0
  %591 = vmatpush1.xpose.msra.mxu0 0.0
  %592 = vmatprep.subr.mxu0 0.0
  %593 = vmatpush1.xpose.msra.mxu0 0.0
  %594 = vmatprep.subr.mxu0 0.0
  %595 = vmatpush1.xpose.msra.mxu0 0.0
  %596 = vmatprep.subr.mxu0 0.0
  %597 = vmatpush1.xpose.msra.mxu0 0.0
  %598 = vmatprep.subr.mxu0 0.0
  %599 = vmatpush1.xpose.msra.mxu0 0.0
  %600 = vmatprep.subr.mxu0 0.0
  %601 = vmatpush1.xpose.msra.mxu0 0.0
  %602 = vmatprep.subr.mxu0 0.0
  %603 = vmatpush1.xpose.msra.mxu0 0.0
  %604 = vmatprep.subr.mxu0 0.0
  %605 = vmatpush1.xpose.msra.mxu0 0.0
  %606 = vmatprep.subr.mxu0 0.0
  %607 = vmatpush1.xpose.msra.mxu0 0.0
  %608 = vmatprep.subr.mxu0 0.0
  %609 = vmatpush1.xpose.msra.mxu0 0.0
  %610 = vmatprep.subr.mxu0 0.0
  %611 = vmatpush1.xpose.msra.mxu0 0.0
  %612 = vmatprep.subr.mxu0 0.0
  %613 = vmatpush1.xpose.msra.mxu0 %v580
  %614 = vmatprep.subr.mxu0 0.0
  %615 = vmatpush2.xpose.msra.mxu0 0.0
  %616 = vmatprep.subr.mxu0 0.0
  %617 = vmatpush2.xpose.msra.mxu0 0.0
  %618 = vmatprep.subr.mxu0 0.0
  %619 = vmatpush2.xpose.msra.mxu0 0.0
  %620 = vmatprep.subr.mxu0 0.0
  %621 = vmatpush2.xpose.msra.mxu0 0.0
  %622 = vmatprep.subr.mxu0 0.0
  %623 = vmatpush2.xpose.msra.mxu0 0.0
  %624 = vmatprep.subr.mxu0 0.0
  %625 = vmatpush2.xpose.msra.mxu0 0.0
  %626 = vmatprep.subr.mxu0 0.0
  %627 = vmatpush2.xpose.msra.mxu0 0.0
  %628 = vmatprep.subr.mxu0 0.0
  %629 = vmatpush2.xpose.msra.mxu0 0.0
  %630 = vmatprep.subr.mxu0 0.0
  %631 = vmatpush2.xpose.msra.mxu0 0.0
  %632 = vmatprep.subr.mxu0 0.0
  %633 = vmatpush2.xpose.msra.mxu0 0.0
  %634 = vmatprep.subr.mxu0 0.0
  %635 = vmatpush2.xpose.msra.mxu0 0.0
  %636 = vmatprep.subr.mxu0 0.0
  %637 = vmatpush2.xpose.msra.mxu0 0.0
  %638 = vmatprep.subr.mxu0 0.0
  %639 = vmatpush2.xpose.msra.mxu0 0.0
  %640 = vmatprep.subr.mxu0 0.0
  %641 = vmatpush2.xpose.msra.mxu0 0.0
  %642 = vmatprep.subr.mxu0 0.0
  %643 = vmatpush2.xpose.msra.mxu0 0.0
  %644 = vmatprep.subr.mxu0 0.0
  %645 = vmatpush2.xpose.msra.mxu0 0.0
  %646 = vmatprep.mubr.f32.mxu0 0.0
  %647 = vmatmul.mubr.f32.gmra.mxu0 %v578
  %v648 = vpop.f32.mrf.mxu0
  %v649 = vadd.f32 0.0, %v648
  %v650 = vpop.f32.mrf.mxu0
  %651 = vdwg.mxu0
  %v652 = vsel %vm240, %v649, -inf
  %653 = vmax.xlane.f32.xlu0 %v652
  %v654 = vpop.xlane.xlu0 %653
  %v655 = vsub.f32 %v649, %v654
  %v656 = vmul.f32 %v655, 1.442695
  %v657 = vpow.pop %v656
  %v658 = vsel %vm240, %v657, 0.0
  %659 = vadd.xlane.f32.xlu0 %v658
  %v660 = vpop.xlane.xlu0 %659
  %v661 = vrcp.pop %v660
  %v662 = vmul.f32 %v657, %v661
  %663 = vrot.lane.b32.xlu0 %v229, 48
  %v664 = vpop.permute.xlu0 %663
  %v667 = vsel %vm240, %v662, 0
  %669 = vmatprep.subr.mxu0 0.0
  %670 = vmatpush1.msra.mxu0 0.0
  %671 = vmatprep.subr.mxu0 0.0
  %672 = vmatpush1.msra.mxu0 0.0
  %673 = vmatprep.subr.mxu0 0.0
  %674 = vmatpush1.msra.mxu0 0.0
  %675 = vmatprep.subr.mxu0 0.0
  %676 = vmatpush1.msra.mxu0 0.0
  %677 = vmatprep.subr.mxu0 0.0
  %678 = vmatpush1.msra.mxu0 0.0
  %679 = vmatprep.subr.mxu0 0.0
  %680 = vmatpush1.msra.mxu0 0.0
  %681 = vmatprep.subr.mxu0 0.0
  %682 = vmatpush1.msra.mxu0 0.0
  %683 = vmatprep.subr.mxu0 0.0
  %684 = vmatpush1.msra.mxu0 0.0
  %685 = vmatprep.subr.mxu0 0.0
  %686 = vmatpush1.msra.mxu0 0.0
  %687 = vmatprep.subr.mxu0 0.0
  %688 = vmatpush1.msra.mxu0 0.0
  %689 = vmatprep.subr.mxu0 0.0
  %690 = vmatpush1.msra.mxu0 0.0
  %691 = vmatprep.subr.mxu0 0.0
  %692 = vmatpush1.msra.mxu0 0.0
  %693 = vmatprep.subr.mxu0 0.0
  %694 = vmatpush1.msra.mxu0 0.0
  %695 = vmatprep.subr.mxu0 0.0
  %696 = vmatpush1.msra.mxu0 0.0
  %697 = vmatprep.subr.mxu0 0.0
  %698 = vmatpush1.msra.mxu0 0.0
  %699 = vmatprep.subr.mxu0 0.0
  %700 = vmatpush1.msra.mxu0 %v664
  %701 = vmatprep.subr.mxu0 0.0
  %702 = vmatpush2.msra.mxu0 0.0
  %703 = vmatprep.subr.mxu0 0.0
  %704 = vmatpush2.msra.mxu0 0.0
  %705 = vmatprep.subr.mxu0 0.0
  %706 = vmatpush2.msra.mxu0 0.0
  %707 = vmatprep.subr.mxu0 0.0
  %708 = vmatpush2.msra.mxu0 0.0
  %709 = vmatprep.subr.mxu0 0.0
  %710 = vmatpush2.msra.mxu0 0.0
  %711 = vmatprep.subr.mxu0 0.0
  %712 = vmatpush2.msra.mxu0 0.0
  %713 = vmatprep.subr.mxu0 0.0
  %714 = vmatpush2.msra.mxu0 0.0
  %715 = vmatprep.subr.mxu0 0.0
  %716 = vmatpush2.msra.mxu0 0.0
  %717 = vmatprep.subr.mxu0 0.0
  %718 = vmatpush2.msra.mxu0 0.0
  %719 = vmatprep.subr.mxu0 0.0
  %720 = vmatpush2.msra.mxu0 0.0
  %721 = vmatprep.subr.mxu0 0.0
  %722 = vmatpush2.msra.mxu0 0.0
  %723 = vmatprep.subr.mxu0 0.0
  %724 = vmatpush2.msra.mxu0 0.0
  %725 = vmatprep.subr.mxu0 0.0
  %726 = vmatpush2.msra.mxu0 0.0
  %727 = vmatprep.subr.mxu0 0.0
  %728 = vmatpush2.msra.mxu0 0.0
  %729 = vmatprep.subr.mxu0 0.0
  %730 = vmatpush2.msra.mxu0 0.0
  %731 = vmatprep.subr.mxu0 0.0
  %732 = vmatpush2.msra.mxu0 0.0
  %733 = vmatprep.mubr.f32.mxu0 0.0
  %734 = vmatmul.mubr.f32.gmra.mxu0 %v667
  %v735 = vpop.f32.mrf.mxu0
  %v736 = vadd.f32 0.0, %v735
  %v737 = vpop.f32.mrf.mxu0
  %738 = vdwg.mxu0
  %740 = vrot.lane.b32.xlu0 %v736, 16
  %v741 = vpop.permute.xlu0 %740
  %vm743 = vcmask 195712
  %744 = vst.msk [vmem:[#allocation2] sm:$0xff] %vm743, %v741
  %745 = vrot.lane.b32.xlu0 %v229, 104
  %v746 = vpop.permute.xlu0 %745
  %747 = vrot.lane.b32.xlu0 %v229, 72
  %v748 = vpop.permute.xlu0 %747
  %v749 = vsel %vm240, %v746, 0
  %v751 = vsel %vm240, %v748, 0
  %753 = vmatprep.subr.mxu0 0.0
  %754 = vmatpush1.xpose.msra.mxu0 0.0
  %755 = vmatprep.subr.mxu0 0.0
  %756 = vmatpush1.xpose.msra.mxu0 0.0
  %757 = vmatprep.subr.mxu0 0.0
  %758 = vmatpush1.xpose.msra.mxu0 0.0
  %759 = vmatprep.subr.mxu0 0.0
  %760 = vmatpush1.xpose.msra.mxu0 0.0
  %761 = vmatprep.subr.mxu0 0.0
  %762 = vmatpush1.xpose.msra.mxu0 0.0
  %763 = vmatprep.subr.mxu0 0.0
  %764 = vmatpush1.xpose.msra.mxu0 0.0
  %765 = vmatprep.subr.mxu0 0.0
  %766 = vmatpush1.xpose.msra.mxu0 0.0
  %767 = vmatprep.subr.mxu0 0.0
  %768 = vmatpush1.xpose.msra.mxu0 0.0
  %769 = vmatprep.subr.mxu0 0.0
  %770 = vmatpush1.xpose.msra.mxu0 0.0
  %771 = vmatprep.subr.mxu0 0.0
  %772 = vmatpush1.xpose.msra.mxu0 0.0
  %773 = vmatprep.subr.mxu0 0.0
  %774 = vmatpush1.xpose.msra.mxu0 0.0
  %775 = vmatprep.subr.mxu0 0.0
  %776 = vmatpush1.xpose.msra.mxu0 0.0
  %777 = vmatprep.subr.mxu0 0.0
  %778 = vmatpush1.xpose.msra.mxu0 0.0
  %779 = vmatprep.subr.mxu0 0.0
  %780 = vmatpush1.xpose.msra.mxu0 0.0
  %781 = vmatprep.subr.mxu0 0.0
  %782 = vmatpush1.xpose.msra.mxu0 0.0
  %783 = vmatprep.subr.mxu0 0.0
  %784 = vmatpush1.xpose.msra.mxu0 %v751
  %785 = vmatprep.subr.mxu0 0.0
  %786 = vmatpush2.xpose.msra.mxu0 0.0
  %787 = vmatprep.subr.mxu0 0.0
  %788 = vmatpush2.xpose.msra.mxu0 0.0
  %789 = vmatprep.subr.mxu0 0.0
  %790 = vmatpush2.xpose.msra.mxu0 0.0
  %791 = vmatprep.subr.mxu0 0.0
  %792 = vmatpush2.xpose.msra.mxu0 0.0
  %793 = vmatprep.subr.mxu0 0.0
  %794 = vmatpush2.xpose.msra.mxu0 0.0
  %795 = vmatprep.subr.mxu0 0.0
  %796 = vmatpush2.xpose.msra.mxu0 0.0
  %797 = vmatprep.subr.mxu0 0.0
  %798 = vmatpush2.xpose.msra.mxu0 0.0
  %799 = vmatprep.subr.mxu0 0.0
  %800 = vmatpush2.xpose.msra.mxu0 0.0
  %801 = vmatprep.subr.mxu0 0.0
  %802 = vmatpush2.xpose.msra.mxu0 0.0
  %803 = vmatprep.subr.mxu0 0.0
  %804 = vmatpush2.xpose.msra.mxu0 0.0
  %805 = vmatprep.subr.mxu0 0.0
  %806 = vmatpush2.xpose.msra.mxu0 0.0
  %807 = vmatprep.subr.mxu0 0.0
  %808 = vmatpush2.xpose.msra.mxu0 0.0
  %809 = vmatprep.subr.mxu0 0.0
  %810 = vmatpush2.xpose.msra.mxu0 0.0
  %811 = vmatprep.subr.mxu0 0.0
  %812 = vmatpush2.xpose.msra.mxu0 0.0
  %813 = vmatprep.subr.mxu0 0.0
  %814 = vmatpush2.xpose.msra.mxu0 0.0
  %815 = vmatprep.subr.mxu0 0.0
  %816 = vmatpush2.xpose.msra.mxu0 0.0
  %817 = vmatprep.mubr.f32.mxu0 0.0
  %818 = vmatmul.mubr.f32.gmra.mxu0 %v749
  %v819 = vpop.f32.mrf.mxu0
  %v820 = vadd.f32 0.0, %v819
  %v821 = vpop.f32.mrf.mxu0
  %822 = vdwg.mxu0
  %v823 = vsel %vm240, %v820, -inf
  %824 = vmax.xlane.f32.xlu0 %v823
  %v825 = vpop.xlane.xlu0 %824
  %v826 = vsub.f32 %v820, %v825
  %v827 = vmul.f32 %v826, 1.442695
  %v828 = vpow.pop %v827
  %v829 = vsel %vm240, %v828, 0.0
  %830 = vadd.xlane.f32.xlu0 %v829
  %v831 = vpop.xlane.xlu0 %830
  %v832 = vrcp.pop %v831
  %v833 = vmul.f32 %v828, %v832
  %834 = vrot.lane.b32.xlu0 %v229, 40
  %v835 = vpop.permute.xlu0 %834
  %v838 = vsel %vm240, %v833, 0
  %840 = vmatprep.subr.mxu0 0.0
  %841 = vmatpush1.msra.mxu0 0.0
  %842 = vmatprep.subr.mxu0 0.0
  %843 = vmatpush1.msra.mxu0 0.0
  %844 = vmatprep.subr.mxu0 0.0
  %845 = vmatpush1.msra.mxu0 0.0
  %846 = vmatprep.subr.mxu0 0.0
  %847 = vmatpush1.msra.mxu0 0.0
  %848 = vmatprep.subr.mxu0 0.0
  %849 = vmatpush1.msra.mxu0 0.0
  %850 = vmatprep.subr.mxu0 0.0
  %851 = vmatpush1.msra.mxu0 0.0
  %852 = vmatprep.subr.mxu0 0.0
  %853 = vmatpush1.msra.mxu0 0.0
  %854 = vmatprep.subr.mxu0 0.0
  %855 = vmatpush1.msra.mxu0 0.0
  %856 = vmatprep.subr.mxu0 0.0
  %857 = vmatpush1.msra.mxu0 0.0
  %858 = vmatprep.subr.mxu0 0.0
  %859 = vmatpush1.msra.mxu0 0.0
  %860 = vmatprep.subr.mxu0 0.0
  %861 = vmatpush1.msra.mxu0 0.0
  %862 = vmatprep.subr.mxu0 0.0
  %863 = vmatpush1.msra.mxu0 0.0
  %864 = vmatprep.subr.mxu0 0.0
  %865 = vmatpush1.msra.mxu0 0.0
  %866 = vmatprep.subr.mxu0 0.0
  %867 = vmatpush1.msra.mxu0 0.0
  %868 = vmatprep.subr.mxu0 0.0
  %869 = vmatpush1.msra.mxu0 0.0
  %870 = vmatprep.subr.mxu0 0.0
  %871 = vmatpush1.msra.mxu0 %v835
  %872 = vmatprep.subr.mxu0 0.0
  %873 = vmatpush2.msra.mxu0 0.0
  %874 = vmatprep.subr.mxu0 0.0
  %875 = vmatpush2.msra.mxu0 0.0
  %876 = vmatprep.subr.mxu0 0.0
  %877 = vmatpush2.msra.mxu0 0.0
  %878 = vmatprep.subr.mxu0 0.0
  %879 = vmatpush2.msra.mxu0 0.0
  %880 = vmatprep.subr.mxu0 0.0
  %881 = vmatpush2.msra.mxu0 0.0
  %882 = vmatprep.subr.mxu0 0.0
  %883 = vmatpush2.msra.mxu0 0.0
  %884 = vmatprep.subr.mxu0 0.0
  %885 = vmatpush2.msra.mxu0 0.0
  %886 = vmatprep.subr.mxu0 0.0
  %887 = vmatpush2.msra.mxu0 0.0
  %888 = vmatprep.subr.mxu0 0.0
  %889 = vmatpush2.msra.mxu0 0.0
  %890 = vmatprep.subr.mxu0 0.0
  %891 = vmatpush2.msra.mxu0 0.0
  %892 = vmatprep.subr.mxu0 0.0
  %893 = vmatpush2.msra.mxu0 0.0
  %894 = vmatprep.subr.mxu0 0.0
  %895 = vmatpush2.msra.mxu0 0.0
  %896 = vmatprep.subr.mxu0 0.0
  %897 = vmatpush2.msra.mxu0 0.0
  %898 = vmatprep.subr.mxu0 0.0
  %899 = vmatpush2.msra.mxu0 0.0
  %900 = vmatprep.subr.mxu0 0.0
  %901 = vmatpush2.msra.mxu0 0.0
  %902 = vmatprep.subr.mxu0 0.0
  %903 = vmatpush2.msra.mxu0 0.0
  %904 = vmatprep.mubr.f32.mxu0 0.0
  %905 = vmatmul.mubr.f32.gmra.mxu0 %v838
  %v906 = vpop.f32.mrf.mxu0
  %v907 = vadd.f32 0.0, %v906
  %v908 = vpop.f32.mrf.mxu0
  %909 = vdwg.mxu0
  %911 = vrot.lane.b32.xlu0 %v907, 24
  %v912 = vpop.permute.xlu0 %911
  %vm914 = vcmask 261312
  %915 = vst.msk [vmem:[#allocation2] sm:$0xff] %vm914, %v912
  %917 = vrot.lane.b32.xlu0 %v234, 96
  %v918 = vpop.permute.xlu0 %917
  %v919 = vsel %vm240, %v234, 0
  %v921 = vsel %vm240, %v918, 0
  %923 = vmatprep.subr.mxu0 0.0
  %924 = vmatpush1.xpose.msra.mxu0 0.0
  %925 = vmatprep.subr.mxu0 0.0
  %926 = vmatpush1.xpose.msra.mxu0 0.0
  %927 = vmatprep.subr.mxu0 0.0
  %928 = vmatpush1.xpose.msra.mxu0 0.0
  %929 = vmatprep.subr.mxu0 0.0
  %930 = vmatpush1.xpose.msra.mxu0 0.0
  %931 = vmatprep.subr.mxu0 0.0
  %932 = vmatpush1.xpose.msra.mxu0 0.0
  %933 = vmatprep.subr.mxu0 0.0
  %934 = vmatpush1.xpose.msra.mxu0 0.0
  %935 = vmatprep.subr.mxu0 0.0
  %936 = vmatpush1.xpose.msra.mxu0 0.0
  %937 = vmatprep.subr.mxu0 0.0
  %938 = vmatpush1.xpose.msra.mxu0 0.0
  %939 = vmatprep.subr.mxu0 0.0
  %940 = vmatpush1.xpose.msra.mxu0 0.0
  %941 = vmatprep.subr.mxu0 0.0
  %942 = vmatpush1.xpose.msra.mxu0 0.0
  %943 = vmatprep.subr.mxu0 0.0
  %944 = vmatpush1.xpose.msra.mxu0 0.0
  %945 = vmatprep.subr.mxu0 0.0
  %946 = vmatpush1.xpose.msra.mxu0 0.0
  %947 = vmatprep.subr.mxu0 0.0
  %948 = vmatpush1.xpose.msra.mxu0 0.0
  %949 = vmatprep.subr.mxu0 0.0
  %950 = vmatpush1.xpose.msra.mxu0 0.0
  %951 = vmatprep.subr.mxu0 0.0
  %952 = vmatpush1.xpose.msra.mxu0 0.0
  %953 = vmatprep.subr.mxu0 0.0
  %954 = vmatpush1.xpose.msra.mxu0 %v921
  %955 = vmatprep.subr.mxu0 0.0
  %956 = vmatpush2.xpose.msra.mxu0 0.0
  %957 = vmatprep.subr.mxu0 0.0
  %958 = vmatpush2.xpose.msra.mxu0 0.0
  %959 = vmatprep.subr.mxu0 0.0
  %960 = vmatpush2.xpose.msra.mxu0 0.0
  %961 = vmatprep.subr.mxu0 0.0
  %962 = vmatpush2.xpose.msra.mxu0 0.0
  %963 = vmatprep.subr.mxu0 0.0
  %964 = vmatpush2.xpose.msra.mxu0 0.0
  %965 = vmatprep.subr.mxu0 0.0
  %966 = vmatpush2.xpose.msra.mxu0 0.0
  %967 = vmatprep.subr.mxu0 0.0
  %968 = vmatpush2.xpose.msra.mxu0 0.0
  %969 = vmatprep.subr.mxu0 0.0
  %970 = vmatpush2.xpose.msra.mxu0 0.0
  %971 = vmatprep.subr.mxu0 0.0
  %972 = vmatpush2.xpose.msra.mxu0 0.0
  %973 = vmatprep.subr.mxu0 0.0
  %974 = vmatpush2.xpose.msra.mxu0 0.0
  %975 = vmatprep.subr.mxu0 0.0
  %976 = vmatpush2.xpose.msra.mxu0 0.0
  %977 = vmatprep.subr.mxu0 0.0
  %978 = vmatpush2.xpose.msra.mxu0 0.0
  %979 = vmatprep.subr.mxu0 0.0
  %980 = vmatpush2.xpose.msra.mxu0 0.0
  %981 = vmatprep.subr.mxu0 0.0
  %982 = vmatpush2.xpose.msra.mxu0 0.0
  %983 = vmatprep.subr.mxu0 0.0
  %984 = vmatpush2.xpose.msra.mxu0 0.0
  %985 = vmatprep.subr.mxu0 0.0
  %986 = vmatpush2.xpose.msra.mxu0 0.0
  %987 = vmatprep.mubr.f32.mxu0 0.0
  %988 = vmatmul.mubr.f32.gmra.mxu0 %v919
  %v989 = vpop.f32.mrf.mxu0
  %v990 = vadd.f32 0.0, %v989
  %v991 = vpop.f32.mrf.mxu0
  %992 = vdwg.mxu0
  %v993 = vsel %vm240, %v990, -inf
  %994 = vmax.xlane.f32.xlu0 %v993
  %v995 = vpop.xlane.xlu0 %994
  %v996 = vsub.f32 %v990, %v995
  %v997 = vmul.f32 %v996, 1.442695
  %v998 = vpow.pop %v997
  %v999 = vsel %vm240, %v998, 0.0
  %1000 = vadd.xlane.f32.xlu0 %v999
  %v1001 = vpop.xlane.xlu0 %1000
  %v1002 = vrcp.pop %v1001
  %v1003 = vmul.f32 %v998, %v1002
  %1004 = vrot.lane.b32.xlu0 %v234, 64
  %v1005 = vpop.permute.xlu0 %1004
  %v1008 = vsel %vm240, %v1003, 0
  %1010 = vmatprep.subr.mxu0 0.0
  %1011 = vmatpush1.msra.mxu0 0.0
  %1012 = vmatprep.subr.mxu0 0.0
  %1013 = vmatpush1.msra.mxu0 0.0
  %1014 = vmatprep.subr.mxu0 0.0
  %1015 = vmatpush1.msra.mxu0 0.0
  %1016 = vmatprep.subr.mxu0 0.0
  %1017 = vmatpush1.msra.mxu0 0.0
  %1018 = vmatprep.subr.mxu0 0.0
  %1019 = vmatpush1.msra.mxu0 0.0
  %1020 = vmatprep.subr.mxu0 0.0
  %1021 = vmatpush1.msra.mxu0 0.0
  %1022 = vmatprep.subr.mxu0 0.0
  %1023 = vmatpush1.msra.mxu0 0.0
  %1024 = vmatprep.subr.mxu0 0.0
  %1025 = vmatpush1.msra.mxu0 0.0
  %1026 = vmatprep.subr.mxu0 0.0
  %1027 = vmatpush1.msra.mxu0 0.0
  %1028 = vmatprep.subr.mxu0 0.0
  %1029 = vmatpush1.msra.mxu0 0.0
  %1030 = vmatprep.subr.mxu0 0.0
  %1031 = vmatpush1.msra.mxu0 0.0
  %1032 = vmatprep.subr.mxu0 0.0
  %1033 = vmatpush1.msra.mxu0 0.0
  %1034 = vmatprep.subr.mxu0 0.0
  %1035 = vmatpush1.msra.mxu0 0.0
  %1036 = vmatprep.subr.mxu0 0.0
  %1037 = vmatpush1.msra.mxu0 0.0
  %1038 = vmatprep.subr.mxu0 0.0
  %1039 = vmatpush1.msra.mxu0 0.0
  %1040 = vmatprep.subr.mxu0 0.0
  %1041 = vmatpush1.msra.mxu0 %v1005
  %1042 = vmatprep.subr.mxu0 0.0
  %1043 = vmatpush2.msra.mxu0 0.0
  %1044 = vmatprep.subr.mxu0 0.0
  %1045 = vmatpush2.msra.mxu0 0.0
  %1046 = vmatprep.subr.mxu0 0.0
  %1047 = vmatpush2.msra.mxu0 0.0
  %1048 = vmatprep.subr.mxu0 0.0
  %1049 = vmatpush2.msra.mxu0 0.0
  %1050 = vmatprep.subr.mxu0 0.0
  %1051 = vmatpush2.msra.mxu0 0.0
  %1052 = vmatprep.subr.mxu0 0.0
  %1053 = vmatpush2.msra.mxu0 0.0
  %1054 = vmatprep.subr.mxu0 0.0
  %1055 = vmatpush2.msra.mxu0 0.0
  %1056 = vmatprep.subr.mxu0 0.0
  %1057 = vmatpush2.msra.mxu0 0.0
  %1058 = vmatprep.subr.mxu0 0.0
  %1059 = vmatpush2.msra.mxu0 0.0
  %1060 = vmatprep.subr.mxu0 0.0
  %1061 = vmatpush2.msra.mxu0 0.0
  %1062 = vmatprep.subr.mxu0 0.0
  %1063 = vmatpush2.msra.mxu0 0.0
  %1064 = vmatprep.subr.mxu0 0.0
  %1065 = vmatpush2.msra.mxu0 0.0
  %1066 = vmatprep.subr.mxu0 0.0
  %1067 = vmatpush2.msra.mxu0 0.0
  %1068 = vmatprep.subr.mxu0 0.0
  %1069 = vmatpush2.msra.mxu0 0.0
  %1070 = vmatprep.subr.mxu0 0.0
  %1071 = vmatpush2.msra.mxu0 0.0
  %1072 = vmatprep.subr.mxu0 0.0
  %1073 = vmatpush2.msra.mxu0 0.0
  %1074 = vmatprep.mubr.f32.mxu0 0.0
  %1075 = vmatmul.mubr.f32.gmra.mxu0 %v1008
  %v1076 = vpop.f32.mrf.mxu0
  %v1077 = vadd.f32 0.0, %v1076
  %v1078 = vpop.f32.mrf.mxu0
  %1079 = vdwg.mxu0
  %1080 = vst.msk [vmem:[#allocation2 + $0x8] sm:$0xff] %vm240, %v1077
  %1081 = vrot.lane.b32.xlu0 %v234, 120
  %v1082 = vpop.permute.xlu0 %1081
  %1083 = vrot.lane.b32.xlu0 %v234, 88
  %v1084 = vpop.permute.xlu0 %1083
  %v1085 = vsel %vm240, %v1082, 0
  %v1087 = vsel %vm240, %v1084, 0
  %1089 = vmatprep.subr.mxu0 0.0
  %1090 = vmatpush1.xpose.msra.mxu0 0.0
  %1091 = vmatprep.subr.mxu0 0.0
  %1092 = vmatpush1.xpose.msra.mxu0 0.0
  %1093 = vmatprep.subr.mxu0 0.0
  %1094 = vmatpush1.xpose.msra.mxu0 0.0
  %1095 = vmatprep.subr.mxu0 0.0
  %1096 = vmatpush1.xpose.msra.mxu0 0.0
  %1097 = vmatprep.subr.mxu0 0.0
  %1098 = vmatpush1.xpose.msra.mxu0 0.0
  %1099 = vmatprep.subr.mxu0 0.0
  %1100 = vmatpush1.xpose.msra.mxu0 0.0
  %1101 = vmatprep.subr.mxu0 0.0
  %1102 = vmatpush1.xpose.msra.mxu0 0.0
  %1103 = vmatprep.subr.mxu0 0.0
  %1104 = vmatpush1.xpose.msra.mxu0 0.0
  %1105 = vmatprep.subr.mxu0 0.0
  %1106 = vmatpush1.xpose.msra.mxu0 0.0
  %1107 = vmatprep.subr.mxu0 0.0
  %1108 = vmatpush1.xpose.msra.mxu0 0.0
  %1109 = vmatprep.subr.mxu0 0.0
  %1110 = vmatpush1.xpose.msra.mxu0 0.0
  %1111 = vmatprep.subr.mxu0 0.0
  %1112 = vmatpush1.xpose.msra.mxu0 0.0
  %1113 = vmatprep.subr.mxu0 0.0
  %1114 = vmatpush1.xpose.msra.mxu0 0.0
  %1115 = vmatprep.subr.mxu0 0.0
  %1116 = vmatpush1.xpose.msra.mxu0 0.0
  %1117 = vmatprep.subr.mxu0 0.0
  %1118 = vmatpush1.xpose.msra.mxu0 0.0
  %1119 = vmatprep.subr.mxu0 0.0
  %1120 = vmatpush1.xpose.msra.mxu0 %v1087
  %1121 = vmatprep.subr.mxu0 0.0
  %1122 = vmatpush2.xpose.msra.mxu0 0.0
  %1123 = vmatprep.subr.mxu0 0.0
  %1124 = vmatpush2.xpose.msra.mxu0 0.0
  %1125 = vmatprep.subr.mxu0 0.0
  %1126 = vmatpush2.xpose.msra.mxu0 0.0
  %1127 = vmatprep.subr.mxu0 0.0
  %1128 = vmatpush2.xpose.msra.mxu0 0.0
  %1129 = vmatprep.subr.mxu0 0.0
  %1130 = vmatpush2.xpose.msra.mxu0 0.0
  %1131 = vmatprep.subr.mxu0 0.0
  %1132 = vmatpush2.xpose.msra.mxu0 0.0
  %1133 = vmatprep.subr.mxu0 0.0
  %1134 = vmatpush2.xpose.msra.mxu0 0.0
  %1135 = vmatprep.subr.mxu0 0.0
  %1136 = vmatpush2.xpose.msra.mxu0 0.0
  %1137 = vmatprep.subr.mxu0 0.0
  %1138 = vmatpush2.xpose.msra.mxu0 0.0
  %1139 = vmatprep.subr.mxu0 0.0
  %1140 = vmatpush2.xpose.msra.mxu0 0.0
  %1141 = vmatprep.subr.mxu0 0.0
  %1142 = vmatpush2.xpose.msra.mxu0 0.0
  %1143 = vmatprep.subr.mxu0 0.0
  %1144 = vmatpush2.xpose.msra.mxu0 0.0
  %1145 = vmatprep.subr.mxu0 0.0
  %1146 = vmatpush2.xpose.msra.mxu0 0.0
  %1147 = vmatprep.subr.mxu0 0.0
  %1148 = vmatpush2.xpose.msra.mxu0 0.0
  %1149 = vmatprep.subr.mxu0 0.0
  %1150 = vmatpush2.xpose.msra.mxu0 0.0
  %1151 = vmatprep.subr.mxu0 0.0
  %1152 = vmatpush2.xpose.msra.mxu0 0.0
  %1153 = vmatprep.mubr.f32.mxu0 0.0
  %1154 = vmatmul.mubr.f32.gmra.mxu0 %v1085
  %v1155 = vpop.f32.mrf.mxu0
  %v1156 = vadd.f32 0.0, %v1155
  %v1157 = vpop.f32.mrf.mxu0
  %1158 = vdwg.mxu0
  %v1159 = vsel %vm240, %v1156, -inf
  %1160 = vmax.xlane.f32.xlu0 %v1159
  %v1161 = vpop.xlane.xlu0 %1160
  %v1162 = vsub.f32 %v1156, %v1161
  %v1163 = vmul.f32 %v1162, 1.442695
  %v1164 = vpow.pop %v1163
  %v1165 = vsel %vm240, %v1164, 0.0
  %1166 = vadd.xlane.f32.xlu0 %v1165
  %v1167 = vpop.xlane.xlu0 %1166
  %v1168 = vrcp.pop %v1167
  %v1169 = vmul.f32 %v1164, %v1168
  %1170 = vrot.lane.b32.xlu0 %v234, 56
  %v1171 = vpop.permute.xlu0 %1170
  %v1174 = vsel %vm240, %v1169, 0
  %1176 = vmatprep.subr.mxu0 0.0
  %1177 = vmatpush1.msra.mxu0 0.0
  %1178 = vmatprep.subr.mxu0 0.0
  %1179 = vmatpush1.msra.mxu0 0.0
  %1180 = vmatprep.subr.mxu0 0.0
  %1181 = vmatpush1.msra.mxu0 0.0
  %1182 = vmatprep.subr.mxu0 0.0
  %1183 = vmatpush1.msra.mxu0 0.0
  %1184 = vmatprep.subr.mxu0 0.0
  %1185 = vmatpush1.msra.mxu0 0.0
  %1186 = vmatprep.subr.mxu0 0.0
  %1187 = vmatpush1.msra.mxu0 0.0
  %1188 = vmatprep.subr.mxu0 0.0
  %1189 = vmatpush1.msra.mxu0 0.0
  %1190 = vmatprep.subr.mxu0 0.0
  %1191 = vmatpush1.msra.mxu0 0.0
  %1192 = vmatprep.subr.mxu0 0.0
  %1193 = vmatpush1.msra.mxu0 0.0
  %1194 = vmatprep.subr.mxu0 0.0
  %1195 = vmatpush1.msra.mxu0 0.0
  %1196 = vmatprep.subr.mxu0 0.0
  %1197 = vmatpush1.msra.mxu0 0.0
  %1198 = vmatprep.subr.mxu0 0.0
  %1199 = vmatpush1.msra.mxu0 0.0
  %1200 = vmatprep.subr.mxu0 0.0
  %1201 = vmatpush1.msra.mxu0 0.0
  %1202 = vmatprep.subr.mxu0 0.0
  %1203 = vmatpush1.msra.mxu0 0.0
  %1204 = vmatprep.subr.mxu0 0.0
  %1205 = vmatpush1.msra.mxu0 0.0
  %1206 = vmatprep.subr.mxu0 0.0
  %1207 = vmatpush1.msra.mxu0 %v1171
  %1208 = vmatprep.subr.mxu0 0.0
  %1209 = vmatpush2.msra.mxu0 0.0
  %1210 = vmatprep.subr.mxu0 0.0
  %1211 = vmatpush2.msra.mxu0 0.0
  %1212 = vmatprep.subr.mxu0 0.0
  %1213 = vmatpush2.msra.mxu0 0.0
  %1214 = vmatprep.subr.mxu0 0.0
  %1215 = vmatpush2.msra.mxu0 0.0
  %1216 = vmatprep.subr.mxu0 0.0
  %1217 = vmatpush2.msra.mxu0 0.0
  %1218 = vmatprep.subr.mxu0 0.0
  %1219 = vmatpush2.msra.mxu0 0.0
  %1220 = vmatprep.subr.mxu0 0.0
  %1221 = vmatpush2.msra.mxu0 0.0
  %1222 = vmatprep.subr.mxu0 0.0
  %1223 = vmatpush2.msra.mxu0 0.0
  %1224 = vmatprep.subr.mxu0 0.0
  %1225 = vmatpush2.msra.mxu0 0.0
  %1226 = vmatprep.subr.mxu0 0.0
  %1227 = vmatpush2.msra.mxu0 0.0
  %1228 = vmatprep.subr.mxu0 0.0
  %1229 = vmatpush2.msra.mxu0 0.0
  %1230 = vmatprep.subr.mxu0 0.0
  %1231 = vmatpush2.msra.mxu0 0.0
  %1232 = vmatprep.subr.mxu0 0.0
  %1233 = vmatpush2.msra.mxu0 0.0
  %1234 = vmatprep.subr.mxu0 0.0
  %1235 = vmatpush2.msra.mxu0 0.0
  %1236 = vmatprep.subr.mxu0 0.0
  %1237 = vmatpush2.msra.mxu0 0.0
  %1238 = vmatprep.subr.mxu0 0.0
  %1239 = vmatpush2.msra.mxu0 0.0
  %1240 = vmatprep.mubr.f32.mxu0 0.0
  %1241 = vmatmul.mubr.f32.gmra.mxu0 %v1174
  %v1242 = vpop.f32.mrf.mxu0
  %v1243 = vadd.f32 0.0, %v1242
  %v1244 = vpop.f32.mrf.mxu0
  %1245 = vdwg.mxu0
  %1247 = vrot.lane.b32.xlu0 %v1243, 8
  %v1248 = vpop.permute.xlu0 %1247
  %1250 = vst.msk [vmem:[#allocation2 + $0x8] sm:$0xff] %vm572, %v1248
  %1251 = vrot.lane.b32.xlu0 %v234, 112
  %v1252 = vpop.permute.xlu0 %1251
  %1253 = vrot.lane.b32.xlu0 %v234, 80
  %v1254 = vpop.permute.xlu0 %1253
  %v1255 = vsel %vm240, %v1252, 0
  %v1257 = vsel %vm240, %v1254, 0
  %1259 = vmatprep.subr.mxu0 0.0
  %1260 = vmatpush1.xpose.msra.mxu0 0.0
  %1261 = vmatprep.subr.mxu0 0.0
  %1262 = vmatpush1.xpose.msra.mxu0 0.0
  %1263 = vmatprep.subr.mxu0 0.0
  %1264 = vmatpush1.xpose.msra.mxu0 0.0
  %1265 = vmatprep.subr.mxu0 0.0
  %1266 = vmatpush1.xpose.msra.mxu0 0.0
  %1267 = vmatprep.subr.mxu0 0.0
  %1268 = vmatpush1.xpose.msra.mxu0 0.0
  %1269 = vmatprep.subr.mxu0 0.0
  %1270 = vmatpush1.xpose.msra.mxu0 0.0
  %1271 = vmatprep.subr.mxu0 0.0
  %1272 = vmatpush1.xpose.msra.mxu0 0.0
  %1273 = vmatprep.subr.mxu0 0.0
  %1274 = vmatpush1.xpose.msra.mxu0 0.0
  %1275 = vmatprep.subr.mxu0 0.0
  %1276 = vmatpush1.xpose.msra.mxu0 0.0
  %1277 = vmatprep.subr.mxu0 0.0
  %1278 = vmatpush1.xpose.msra.mxu0 0.0
  %1279 = vmatprep.subr.mxu0 0.0
  %1280 = vmatpush1.xpose.msra.mxu0 0.0
  %1281 = vmatprep.subr.mxu0 0.0
  %1282 = vmatpush1.xpose.msra.mxu0 0.0
  %1283 = vmatprep.subr.mxu0 0.0
  %1284 = vmatpush1.xpose.msra.mxu0 0.0
  %1285 = vmatprep.subr.mxu0 0.0
  %1286 = vmatpush1.xpose.msra.mxu0 0.0
  %1287 = vmatprep.subr.mxu0 0.0
  %1288 = vmatpush1.xpose.msra.mxu0 0.0
  %1289 = vmatprep.subr.mxu0 0.0
  %1290 = vmatpush1.xpose.msra.mxu0 %v1257
  %1291 = vmatprep.subr.mxu0 0.0
  %1292 = vmatpush2.xpose.msra.mxu0 0.0
  %1293 = vmatprep.subr.mxu0 0.0
  %1294 = vmatpush2.xpose.msra.mxu0 0.0
  %1295 = vmatprep.subr.mxu0 0.0
  %1296 = vmatpush2.xpose.msra.mxu0 0.0
  %1297 = vmatprep.subr.mxu0 0.0
  %1298 = vmatpush2.xpose.msra.mxu0 0.0
  %1299 = vmatprep.subr.mxu0 0.0
  %1300 = vmatpush2.xpose.msra.mxu0 0.0
  %1301 = vmatprep.subr.mxu0 0.0
  %1302 = vmatpush2.xpose.msra.mxu0 0.0
  %1303 = vmatprep.subr.mxu0 0.0
  %1304 = vmatpush2.xpose.msra.mxu0 0.0
  %1305 = vmatprep.subr.mxu0 0.0
  %1306 = vmatpush2.xpose.msra.mxu0 0.0
  %1307 = vmatprep.subr.mxu0 0.0
  %1308 = vmatpush2.xpose.msra.mxu0 0.0
  %1309 = vmatprep.subr.mxu0 0.0
  %1310 = vmatpush2.xpose.msra.mxu0 0.0
  %1311 = vmatprep.subr.mxu0 0.0
  %1312 = vmatpush2.xpose.msra.mxu0 0.0
  %1313 = vmatprep.subr.mxu0 0.0
  %1314 = vmatpush2.xpose.msra.mxu0 0.0
  %1315 = vmatprep.subr.mxu0 0.0
  %1316 = vmatpush2.xpose.msra.mxu0 0.0
  %1317 = vmatprep.subr.mxu0 0.0
  %1318 = vmatpush2.xpose.msra.mxu0 0.0
  %1319 = vmatprep.subr.mxu0 0.0
  %1320 = vmatpush2.xpose.msra.mxu0 0.0
  %1321 = vmatprep.subr.mxu0 0.0
  %1322 = vmatpush2.xpose.msra.mxu0 0.0
  %1323 = vmatprep.mubr.f32.mxu0 0.0
  %1324 = vmatmul.mubr.f32.gmra.mxu0 %v1255
  %v1325 = vpop.f32.mrf.mxu0
  %v1326 = vadd.f32 0.0, %v1325
  %v1327 = vpop.f32.mrf.mxu0
  %1328 = vdwg.mxu0
  %v1329 = vsel %vm240, %v1326, -inf
  %1330 = vmax.xlane.f32.xlu0 %v1329
  %v1331 = vpop.xlane.xlu0 %1330
  %v1332 = vsub.f32 %v1326, %v1331
  %v1333 = vmul.f32 %v1332, 1.442695
  %v1334 = vpow.pop %v1333
  %v1335 = vsel %vm240, %v1334, 0.0
  %1336 = vadd.xlane.f32.xlu0 %v1335
  %v1337 = vpop.xlane.xlu0 %1336
  %v1338 = vrcp.pop %v1337
  %v1339 = vmul.f32 %v1334, %v1338
  %1340 = vrot.lane.b32.xlu0 %v234, 48
  %v1341 = vpop.permute.xlu0 %1340
  %v1344 = vsel %vm240, %v1339, 0
  %1346 = vmatprep.subr.mxu0 0.0
  %1347 = vmatpush1.msra.mxu0 0.0
  %1348 = vmatprep.subr.mxu0 0.0
  %1349 = vmatpush1.msra.mxu0 0.0
  %1350 = vmatprep.subr.mxu0 0.0
  %1351 = vmatpush1.msra.mxu0 0.0
  %1352 = vmatprep.subr.mxu0 0.0
  %1353 = vmatpush1.msra.mxu0 0.0
  %1354 = vmatprep.subr.mxu0 0.0
  %1355 = vmatpush1.msra.mxu0 0.0
  %1356 = vmatprep.subr.mxu0 0.0
  %1357 = vmatpush1.msra.mxu0 0.0
  %1358 = vmatprep.subr.mxu0 0.0
  %1359 = vmatpush1.msra.mxu0 0.0
  %1360 = vmatprep.subr.mxu0 0.0
  %1361 = vmatpush1.msra.mxu0 0.0
  %1362 = vmatprep.subr.mxu0 0.0
  %1363 = vmatpush1.msra.mxu0 0.0
  %1364 = vmatprep.subr.mxu0 0.0
  %1365 = vmatpush1.msra.mxu0 0.0
  %1366 = vmatprep.subr.mxu0 0.0
  %1367 = vmatpush1.msra.mxu0 0.0
  %1368 = vmatprep.subr.mxu0 0.0
  %1369 = vmatpush1.msra.mxu0 0.0
  %1370 = vmatprep.subr.mxu0 0.0
  %1371 = vmatpush1.msra.mxu0 0.0
  %1372 = vmatprep.subr.mxu0 0.0
  %1373 = vmatpush1.msra.mxu0 0.0
  %1374 = vmatprep.subr.mxu0 0.0
  %1375 = vmatpush1.msra.mxu0 0.0
  %1376 = vmatprep.subr.mxu0 0.0
  %1377 = vmatpush1.msra.mxu0 %v1341
  %1378 = vmatprep.subr.mxu0 0.0
  %1379 = vmatpush2.msra.mxu0 0.0
  %1380 = vmatprep.subr.mxu0 0.0
  %1381 = vmatpush2.msra.mxu0 0.0
  %1382 = vmatprep.subr.mxu0 0.0
  %1383 = vmatpush2.msra.mxu0 0.0
  %1384 = vmatprep.subr.mxu0 0.0
  %1385 = vmatpush2.msra.mxu0 0.0
  %1386 = vmatprep.subr.mxu0 0.0
  %1387 = vmatpush2.msra.mxu0 0.0
  %1388 = vmatprep.subr.mxu0 0.0
  %1389 = vmatpush2.msra.mxu0 0.0
  %1390 = vmatprep.subr.mxu0 0.0
  %1391 = vmatpush2.msra.mxu0 0.0
  %1392 = vmatprep.subr.mxu0 0.0
  %1393 = vmatpush2.msra.mxu0 0.0
  %1394 = vmatprep.subr.mxu0 0.0
  %1395 = vmatpush2.msra.mxu0 0.0
  %1396 = vmatprep.subr.mxu0 0.0
  %1397 = vmatpush2.msra.mxu0 0.0
  %1398 = vmatprep.subr.mxu0 0.0
  %1399 = vmatpush2.msra.mxu0 0.0
  %1400 = vmatprep.subr.mxu0 0.0
  %1401 = vmatpush2.msra.mxu0 0.0
  %1402 = vmatprep.subr.mxu0 0.0
  %1403 = vmatpush2.msra.mxu0 0.0
  %1404 = vmatprep.subr.mxu0 0.0
  %1405 = vmatpush2.msra.mxu0 0.0
  %1406 = vmatprep.subr.mxu0 0.0
  %1407 = vmatpush2.msra.mxu0 0.0
  %1408 = vmatprep.subr.mxu0 0.0
  %1409 = vmatpush2.msra.mxu0 0.0
  %1410 = vmatprep.mubr.f32.mxu0 0.0
  %1411 = vmatmul.mubr.f32.gmra.mxu0 %v1344
  %v1412 = vpop.f32.mrf.mxu0
  %v1413 = vadd.f32 0.0, %v1412
  %v1414 = vpop.f32.mrf.mxu0
  %1415 = vdwg.mxu0
  %1417 = vrot.lane.b32.xlu0 %v1413, 16
  %v1418 = vpop.permute.xlu0 %1417
  %1420 = vst.msk [vmem:[#allocation2 + $0x8] sm:$0xff] %vm743, %v1418
  %1421 = vrot.lane.b32.xlu0 %v234, 104
  %v1422 = vpop.permute.xlu0 %1421
  %1423 = vrot.lane.b32.xlu0 %v234, 72
  %v1424 = vpop.permute.xlu0 %1423
  %v1425 = vsel %vm240, %v1422, 0
  %v1427 = vsel %vm240, %v1424, 0
  %1429 = vmatprep.subr.mxu0 0.0
  %1430 = vmatpush1.xpose.msra.mxu0 0.0
  %1431 = vmatprep.subr.mxu0 0.0
  %1432 = vmatpush1.xpose.msra.mxu0 0.0
  %1433 = vmatprep.subr.mxu0 0.0
  %1434 = vmatpush1.xpose.msra.mxu0 0.0
  %1435 = vmatprep.subr.mxu0 0.0
  %1436 = vmatpush1.xpose.msra.mxu0 0.0
  %1437 = vmatprep.subr.mxu0 0.0
  %1438 = vmatpush1.xpose.msra.mxu0 0.0
  %1439 = vmatprep.subr.mxu0 0.0
  %1440 = vmatpush1.xpose.msra.mxu0 0.0
  %1441 = vmatprep.subr.mxu0 0.0
  %1442 = vmatpush1.xpose.msra.mxu0 0.0
  %1443 = vmatprep.subr.mxu0 0.0
  %1444 = vmatpush1.xpose.msra.mxu0 0.0
  %1445 = vmatprep.subr.mxu0 0.0
  %1446 = vmatpush1.xpose.msra.mxu0 0.0
  %1447 = vmatprep.subr.mxu0 0.0
  %1448 = vmatpush1.xpose.msra.mxu0 0.0
  %1449 = vmatprep.subr.mxu0 0.0
  %1450 = vmatpush1.xpose.msra.mxu0 0.0
  %1451 = vmatprep.subr.mxu0 0.0
  %1452 = vmatpush1.xpose.msra.mxu0 0.0
  %1453 = vmatprep.subr.mxu0 0.0
  %1454 = vmatpush1.xpose.msra.mxu0 0.0
  %1455 = vmatprep.subr.mxu0 0.0
  %1456 = vmatpush1.xpose.msra.mxu0 0.0
  %1457 = vmatprep.subr.mxu0 0.0
  %1458 = vmatpush1.xpose.msra.mxu0 0.0
  %1459 = vmatprep.subr.mxu0 0.0
  %1460 = vmatpush1.xpose.msra.mxu0 %v1427
  %1461 = vmatprep.subr.mxu0 0.0
  %1462 = vmatpush2.xpose.msra.mxu0 0.0
  %1463 = vmatprep.subr.mxu0 0.0
  %1464 = vmatpush2.xpose.msra.mxu0 0.0
  %1465 = vmatprep.subr.mxu0 0.0
  %1466 = vmatpush2.xpose.msra.mxu0 0.0
  %1467 = vmatprep.subr.mxu0 0.0
  %1468 = vmatpush2.xpose.msra.mxu0 0.0
  %1469 = vmatprep.subr.mxu0 0.0
  %1470 = vmatpush2.xpose.msra.mxu0 0.0
  %1471 = vmatprep.subr.mxu0 0.0
  %1472 = vmatpush2.xpose.msra.mxu0 0.0
  %1473 = vmatprep.subr.mxu0 0.0
  %1474 = vmatpush2.xpose.msra.mxu0 0.0
  %1475 = vmatprep.subr.mxu0 0.0
  %1476 = vmatpush2.xpose.msra.mxu0 0.0
  %1477 = vmatprep.subr.mxu0 0.0
  %1478 = vmatpush2.xpose.msra.mxu0 0.0
  %1479 = vmatprep.subr.mxu0 0.0
  %1480 = vmatpush2.xpose.msra.mxu0 0.0
  %1481 = vmatprep.subr.mxu0 0.0
  %1482 = vmatpush2.xpose.msra.mxu0 0.0
  %1483 = vmatprep.subr.mxu0 0.0
  %1484 = vmatpush2.xpose.msra.mxu0 0.0
  %1485 = vmatprep.subr.mxu0 0.0
  %1486 = vmatpush2.xpose.msra.mxu0 0.0
  %1487 = vmatprep.subr.mxu0 0.0
  %1488 = vmatpush2.xpose.msra.mxu0 0.0
  %1489 = vmatprep.subr.mxu0 0.0
  %1490 = vmatpush2.xpose.msra.mxu0 0.0
  %1491 = vmatprep.subr.mxu0 0.0
  %1492 = vmatpush2.xpose.msra.mxu0 0.0
  %1493 = vmatprep.mubr.f32.mxu0 0.0
  %1494 = vmatmul.mubr.f32.gmra.mxu0 %v1425
  %v1495 = vpop.f32.mrf.mxu0
  %v1496 = vadd.f32 0.0, %v1495
  %v1497 = vpop.f32.mrf.mxu0
  %1498 = vdwg.mxu0
  %v1499 = vsel %vm240, %v1496, -inf
  %1500 = vmax.xlane.f32.xlu0 %v1499
  %v1501 = vpop.xlane.xlu0 %1500
  %v1502 = vsub.f32 %v1496, %v1501
  %v1503 = vmul.f32 %v1502, 1.442695
  %v1504 = vpow.pop %v1503
  %v1505 = vsel %vm240, %v1504, 0.0
  %1506 = vadd.xlane.f32.xlu0 %v1505
  %v1507 = vpop.xlane.xlu0 %1506
  %v1508 = vrcp.pop %v1507
  %v1509 = vmul.f32 %v1504, %v1508
  %1510 = vrot.lane.b32.xlu0 %v234, 40
  %v1511 = vpop.permute.xlu0 %1510
  %v1514 = vsel %vm240, %v1509, 0
  %1516 = vmatprep.subr.mxu0 0.0
  %1517 = vmatpush1.msra.mxu0 0.0
  %1518 = vmatprep.subr.mxu0 0.0
  %1519 = vmatpush1.msra.mxu0 0.0
  %1520 = vmatprep.subr.mxu0 0.0
  %1521 = vmatpush1.msra.mxu0 0.0
  %1522 = vmatprep.subr.mxu0 0.0
  %1523 = vmatpush1.msra.mxu0 0.0
  %1524 = vmatprep.subr.mxu0 0.0
  %1525 = vmatpush1.msra.mxu0 0.0
  %1526 = vmatprep.subr.mxu0 0.0
  %1527 = vmatpush1.msra.mxu0 0.0
  %1528 = vmatprep.subr.mxu0 0.0
  %1529 = vmatpush1.msra.mxu0 0.0
  %1530 = vmatprep.subr.mxu0 0.0
  %1531 = vmatpush1.msra.mxu0 0.0
  %1532 = vmatprep.subr.mxu0 0.0
  %1533 = vmatpush1.msra.mxu0 0.0
  %1534 = vmatprep.subr.mxu0 0.0
  %1535 = vmatpush1.msra.mxu0 0.0
  %1536 = vmatprep.subr.mxu0 0.0
  %1537 = vmatpush1.msra.mxu0 0.0
  %1538 = vmatprep.subr.mxu0 0.0
  %1539 = vmatpush1.msra.mxu0 0.0
  %1540 = vmatprep.subr.mxu0 0.0
  %1541 = vmatpush1.msra.mxu0 0.0
  %1542 = vmatprep.subr.mxu0 0.0
  %1543 = vmatpush1.msra.mxu0 0.0
  %1544 = vmatprep.subr.mxu0 0.0
  %1545 = vmatpush1.msra.mxu0 0.0
  %1546 = vmatprep.subr.mxu0 0.0
  %1547 = vmatpush1.msra.mxu0 %v1511
  %1548 = vmatprep.subr.mxu0 0.0
  %1549 = vmatpush2.msra.mxu0 0.0
  %1550 = vmatprep.subr.mxu0 0.0
  %1551 = vmatpush2.msra.mxu0 0.0
  %1552 = vmatprep.subr.mxu0 0.0
  %1553 = vmatpush2.msra.mxu0 0.0
  %1554 = vmatprep.subr.mxu0 0.0
  %1555 = vmatpush2.msra.mxu0 0.0
  %1556 = vmatprep.subr.mxu0 0.0
  %1557 = vmatpush2.msra.mxu0 0.0
  %1558 = vmatprep.subr.mxu0 0.0
  %1559 = vmatpush2.msra.mxu0 0.0
  %1560 = vmatprep.subr.mxu0 0.0
  %1561 = vmatpush2.msra.mxu0 0.0
  %1562 = vmatprep.subr.mxu0 0.0
  %1563 = vmatpush2.msra.mxu0 0.0
  %1564 = vmatprep.subr.mxu0 0.0
  %1565 = vmatpush2.msra.mxu0 0.0
  %1566 = vmatprep.subr.mxu0 0.0
  %1567 = vmatpush2.msra.mxu0 0.0
  %1568 = vmatprep.subr.mxu0 0.0
  %1569 = vmatpush2.msra.mxu0 0.0
  %1570 = vmatprep.subr.mxu0 0.0
  %1571 = vmatpush2.msra.mxu0 0.0
  %1572 = vmatprep.subr.mxu0 0.0
  %1573 = vmatpush2.msra.mxu0 0.0
  %1574 = vmatprep.subr.mxu0 0.0
  %1575 = vmatpush2.msra.mxu0 0.0
  %1576 = vmatprep.subr.mxu0 0.0
  %1577 = vmatpush2.msra.mxu0 0.0
  %1578 = vmatprep.subr.mxu0 0.0
  %1579 = vmatpush2.msra.mxu0 0.0
  %1580 = vmatprep.mubr.f32.mxu0 0.0
  %1581 = vmatmul.mubr.f32.gmra.mxu0 %v1514
  %v1582 = vpop.f32.mrf.mxu0
  %v1583 = vadd.f32 0.0, %v1582
  %v1584 = vpop.f32.mrf.mxu0
  %1585 = vdwg.mxu0
  %1587 = vrot.lane.b32.xlu0 %v1583, 24
  %v1588 = vpop.permute.xlu0 %1587
  %1590 = vst.msk [vmem:[#allocation2 + $0x8] sm:$0xff] %vm914, %v1588
  %v1591 = vld [vmem:[#allocation2] sm:$0xff]
  %v1592 = vld [vmem:[#allocation2 + $0x8] sm:$0xff]
  %v1593 = vld [vmem:[%s5] sm:$0xff]
  %v1594 = vld [vmem:[%s5 + $0x8] sm:$0xff]
  %v1595 = vld [vmem:[%s5 + $0x10] sm:$0xff]
  %v1596 = vld [vmem:[%s5 + $0x18] sm:$0xff]
  %v1597 = vld [vmem:[%s6] sm:$0x1]
  %v1599 = vlaneseq
  %v1600 = vshrl.u32 %v1599, 7
  %v1601 = vsub.s32 0, %v1600
  %v1602 = vrot.slane %v1597, %v1601
  %v1605 = vsel %vm155, %v1591, 0
  %v1608 = vsel %vm155, %v1592, 0
  %1610 = vmatprep.subr.mxu0 0.0
  %1611 = vmatpush1.msra.mxu0 0.0
  %1612 = vmatprep.subr.mxu0 0.0
  %1613 = vmatpush1.msra.mxu0 0.0
  %1614 = vmatprep.subr.mxu0 0.0
  %1615 = vmatpush1.msra.mxu0 0.0
  %1616 = vmatprep.subr.mxu0 0.0
  %1617 = vmatpush1.msra.mxu0 0.0
  %1618 = vmatprep.subr.mxu0 0.0
  %1619 = vmatpush1.msra.mxu0 0.0
  %1620 = vmatprep.subr.mxu0 0.0
  %1621 = vmatpush1.msra.mxu0 0.0
  %1622 = vmatprep.subr.mxu0 0.0
  %1623 = vmatpush1.msra.mxu0 0.0
  %1624 = vmatprep.subr.mxu0 0.0
  %1625 = vmatpush1.msra.mxu0 0.0
  %1626 = vmatprep.subr.mxu0 0.0
  %1627 = vmatpush1.msra.mxu0 0.0
  %1628 = vmatprep.subr.mxu0 0.0
  %1629 = vmatpush1.msra.mxu0 0.0
  %1630 = vmatprep.subr.mxu0 0.0
  %1631 = vmatpush1.msra.mxu0 0.0
  %1632 = vmatprep.subr.mxu0 0.0
  %1633 = vmatpush1.msra.mxu0 0.0
  %1634 = vmatprep.subr.mxu0 0.0
  %1635 = vmatpush1.msra.mxu0 %v1596
  %1636 = vmatprep.subr.mxu0 0.0
  %1637 = vmatpush1.msra.mxu0 %v1595
  %1638 = vmatprep.subr.mxu0 0.0
  %1639 = vmatpush1.msra.mxu0 %v1594
  %1640 = vmatprep.subr.mxu0 0.0
  %1641 = vmatpush1.msra.mxu0 %v1593
  %1642 = vmatprep.subr.mxu0 0.0
  %1643 = vmatpush2.msra.mxu0 0.0
  %1644 = vmatprep.subr.mxu0 0.0
  %1645 = vmatpush2.msra.mxu0 0.0
  %1646 = vmatprep.subr.mxu0 0.0
  %1647 = vmatpush2.msra.mxu0 0.0
  %1648 = vmatprep.subr.mxu0 0.0
  %1649 = vmatpush2.msra.mxu0 0.0
  %1650 = vmatprep.subr.mxu0 0.0
  %1651 = vmatpush2.msra.mxu0 0.0
  %1652 = vmatprep.subr.mxu0 0.0
  %1653 = vmatpush2.msra.mxu0 0.0
  %1654 = vmatprep.subr.mxu0 0.0
  %1655 = vmatpush2.msra.mxu0 0.0
  %1656 = vmatprep.subr.mxu0 0.0
  %1657 = vmatpush2.msra.mxu0 0.0
  %1658 = vmatprep.subr.mxu0 0.0
  %1659 = vmatpush2.msra.mxu0 0.0
  %1660 = vmatprep.subr.mxu0 0.0
  %1661 = vmatpush2.msra.mxu0 0.0
  %1662 = vmatprep.subr.mxu0 0.0
  %1663 = vmatpush2.msra.mxu0 0.0
  %1664 = vmatprep.subr.mxu0 0.0
  %1665 = vmatpush2.msra.mxu0 0.0
  %1666 = vmatprep.subr.mxu0 0.0
  %1667 = vmatpush2.msra.mxu0 0.0
  %1668 = vmatprep.subr.mxu0 0.0
  %1669 = vmatpush2.msra.mxu0 0.0
  %1670 = vmatprep.subr.mxu0 0.0
  %1671 = vmatpush2.msra.mxu0 0.0
  %1672 = vmatprep.subr.mxu0 0.0
  %1673 = vmatpush2.msra.mxu0 0.0
  %1674 = vmatprep.mubr.f32.mxu0 0.0
  %1675 = vmatmul.mubr.f32.gmra.mxu0 %v1605
  %v1676 = vpop.f32.mrf.mxu0
  %v1677 = vadd.f32 %v1602, %v1676
  %v1678 = vpop.f32.mrf.mxu0
  %1679 = vmatprep.mubr.f32.mxu0 0.0
  %1680 = vmatmul.mubr.f32.gmra.mxu0 %v1608
  %v1681 = vpop.f32.mrf.mxu0
  %v1682 = vadd.f32 %v1602, %v1681
  %v1683 = vpop.f32.mrf.mxu0
  %1684 = vdwg.mxu0
  %v1685 = vadd.f32 %v136, %v1677
  %v1686 = vadd.f32 %v141, %v1682
  %v1687 = vld [vmem:[%s7] sm:$0x1]
  %v1688 = vld [vmem:[%s8] sm:$0x1]
  %v1689 = vsel %vm155, %v1685, 0.0
  %1690 = vadd.xlane.f32.xlu0 %v1689
  %v1691 = vpop.xlane.xlu0 %1690
  %v1692 = vsel %vm155, %v1686, 0.0
  %1693 = vadd.xlane.f32.xlu0 %v1692
  %v1694 = vpop.xlane.xlu0 %1693
  %v1695 = vrcp.pop 32.0
  %v1696 = vmul.f32 %v1691, %v1695
  %v1697 = vmul.f32 %v1694, %v1695
  %v1698 = vsub.f32 %v1685, %v1696
  %v1699 = vsub.f32 %v1686, %v1697
  %v1700 = vmul.f32 %v1698, %v1698
  %v1701 = vmul.f32 %v1699, %v1699
  %v1702 = vsel %vm155, %v1700, 0.0
  %1703 = vadd.xlane.f32.xlu0 %v1702
  %v1704 = vpop.xlane.xlu0 %1703
  %v1705 = vsel %vm155, %v1701, 0.0
  %1706 = vadd.xlane.f32.xlu0 %v1705
  %v1707 = vpop.xlane.xlu0 %1706
  %v1708 = vmul.f32 %v1704, %v1695
  %v1709 = vmul.f32 %v1707, %v1695
  %v1710 = vadd.f32 %v1708, 1e-05
  %v1711 = vadd.f32 %v1709, 1e-05
  %v1712 = vrsqrt.pop %v1710
  %v1713 = vrsqrt.pop %v1711
  %v1714 = vmul.f32 %v1698, %v1712
  %v1715 = vmul.f32 %v1699, %v1713
  %v1717 = vlaneseq
  %v1718 = vshrl.u32 %v1717, 7
  %v1719 = vsub.s32 0, %v1718
  %v1720 = vrot.slane %v1687, %v1719
  %v1722 = vmul.f32 %v1714, %v1720
  %v1723 = vmul.f32 %v1715, %v1720
  %v1725 = vlaneseq
  %v1726 = vshrl.u32 %v1725, 7
  %v1727 = vsub.s32 0, %v1726
  %v1728 = vrot.slane %v1688, %v1727
  %v1730 = vadd.f32 %v1722, %v1728
  %v1731 = vadd.f32 %v1723, %v1728
  %v1732 = vld [vmem:[%s9] sm:$0xff]
  %v1733 = vld [vmem:[%s9 + $0x8] sm:$0xff]
  %v1734 = vld [vmem:[%s9 + $0x10] sm:$0xff]
  %v1735 = vld [vmem:[%s9 + $0x18] sm:$0xff]
  %v1736 = vld [vmem:[%s10] sm:$0x1]
  %v1738 = vlaneseq
  %v1739 = vshrl.u32 %v1738, 7
  %v1740 = vsub.s32 0, %v1739
  %v1741 = vrot.slane %v1736, %v1740
  %v1744 = vsel %vm155, %v1730, 0
  %v1747 = vsel %vm155, %v1731, 0
  %1749 = vmatprep.subr.mxu0 0.0
  %1750 = vmatpush1.msra.mxu0 0.0
  %1751 = vmatprep.subr.mxu0 0.0
  %1752 = vmatpush1.msra.mxu0 0.0
  %1753 = vmatprep.subr.mxu0 0.0
  %1754 = vmatpush1.msra.mxu0 0.0
  %1755 = vmatprep.subr.mxu0 0.0
  %1756 = vmatpush1.msra.mxu0 0.0
  %1757 = vmatprep.subr.mxu0 0.0
  %1758 = vmatpush1.msra.mxu0 0.0
  %1759 = vmatprep.subr.mxu0 0.0
  %1760 = vmatpush1.msra.mxu0 0.0
  %1761 = vmatprep.subr.mxu0 0.0
  %1762 = vmatpush1.msra.mxu0 0.0
  %1763 = vmatprep.subr.mxu0 0.0
  %1764 = vmatpush1.msra.mxu0 0.0
  %1765 = vmatprep.subr.mxu0 0.0
  %1766 = vmatpush1.msra.mxu0 0.0
  %1767 = vmatprep.subr.mxu0 0.0
  %1768 = vmatpush1.msra.mxu0 0.0
  %1769 = vmatprep.subr.mxu0 0.0
  %1770 = vmatpush1.msra.mxu0 0.0
  %1771 = vmatprep.subr.mxu0 0.0
  %1772 = vmatpush1.msra.mxu0 0.0
  %1773 = vmatprep.subr.mxu0 0.0
  %1774 = vmatpush1.msra.mxu0 %v1735
  %1775 = vmatprep.subr.mxu0 0.0
  %1776 = vmatpush1.msra.mxu0 %v1734
  %1777 = vmatprep.subr.mxu0 0.0
  %1778 = vmatpush1.msra.mxu0 %v1733
  %1779 = vmatprep.subr.mxu0 0.0
  %1780 = vmatpush1.msra.mxu0 %v1732
  %1781 = vmatprep.subr.mxu0 0.0
  %1782 = vmatpush2.msra.mxu0 0.0
  %1783 = vmatprep.subr.mxu0 0.0
  %1784 = vmatpush2.msra.mxu0 0.0
  %1785 = vmatprep.subr.mxu0 0.0
  %1786 = vmatpush2.msra.mxu0 0.0
  %1787 = vmatprep.subr.mxu0 0.0
  %1788 = vmatpush2.msra.mxu0 0.0
  %1789 = vmatprep.subr.mxu0 0.0
  %1790 = vmatpush2.msra.mxu0 0.0
  %1791 = vmatprep.subr.mxu0 0.0
  %1792 = vmatpush2.msra.mxu0 0.0
  %1793 = vmatprep.subr.mxu0 0.0
  %1794 = vmatpush2.msra.mxu0 0.0
  %1795 = vmatprep.subr.mxu0 0.0
  %1796 = vmatpush2.msra.mxu0 0.0
  %1797 = vmatprep.subr.mxu0 0.0
  %1798 = vmatpush2.msra.mxu0 0.0
  %1799 = vmatprep.subr.mxu0 0.0
  %1800 = vmatpush2.msra.mxu0 0.0
  %1801 = vmatprep.subr.mxu0 0.0
  %1802 = vmatpush2.msra.mxu0 0.0
  %1803 = vmatprep.subr.mxu0 0.0
  %1804 = vmatpush2.msra.mxu0 0.0
  %1805 = vmatprep.subr.mxu0 0.0
  %1806 = vmatpush2.msra.mxu0 0.0
  %1807 = vmatprep.subr.mxu0 0.0
  %1808 = vmatpush2.msra.mxu0 0.0
  %1809 = vmatprep.subr.mxu0 0.0
  %1810 = vmatpush2.msra.mxu0 0.0
  %1811 = vmatprep.subr.mxu0 0.0
  %1812 = vmatpush2.msra.mxu0 0.0
  %1813 = vmatprep.mubr.f32.mxu0 0.0
  %1814 = vmatmul.mubr.f32.gmra.mxu0 %v1744
  %v1815 = vpop.f32.mrf.mxu0
  %v1816 = vadd.f32 %v1741, %v1815
  %v1817 = vpop.f32.mrf.mxu0
  %1818 = vmatprep.mubr.f32.mxu0 0.0
  %1819 = vmatmul.mubr.f32.gmra.mxu0 %v1747
  %v1820 = vpop.f32.mrf.mxu0
  %v1821 = vadd.f32 %v1741, %v1820
  %v1822 = vpop.f32.mrf.mxu0
  %1823 = vdwg.mxu0
  %v1824 = vmax.f32 %v1816, 0.0
  %v1825 = vmax.f32 %v1821, 0.0
  %v1826 = vld [vmem:[%s11] sm:$0xff]
  %v1827 = vld [vmem:[%s11 + $0x8] sm:$0xff]
  %v1828 = vld [vmem:[%s11 + $0x10] sm:$0xff]
  %v1829 = vld [vmem:[%s11 + $0x18] sm:$0xff]
  %v1830 = vld [vmem:[%s11 + $0x20] sm:$0xff]
  %v1831 = vld [vmem:[%s11 + $0x28] sm:$0xff]
  %v1832 = vld [vmem:[%s11 + $0x30] sm:$0xff]
  %v1833 = vld [vmem:[%s11 + $0x38] sm:$0xff]
  %v1834 = vld [vmem:[%s12] sm:$0x1]
  %v1836 = vlaneseq
  %v1837 = vshrl.u32 %v1836, 7
  %v1838 = vsub.s32 0, %v1837
  %v1839 = vrot.slane %v1834, %v1838
  %vm1841 = vcmask 523264
  %v1843 = vsel %vm1841, %v1824, 0
  %v1846 = vsel %vm1841, %v1825, 0
  %1848 = vmatprep.subr.mxu0 0.0
  %1849 = vmatpush1.msra.mxu0 0.0
  %1850 = vmatprep.subr.mxu0 0.0
  %1851 = vmatpush1.msra.mxu0 0.0
  %1852 = vmatprep.subr.mxu0 0.0
  %1853 = vmatpush1.msra.mxu0 0.0
  %1854 = vmatprep.subr.mxu0 0.0
  %1855 = vmatpush1.msra.mxu0 0.0
  %1856 = vmatprep.subr.mxu0 0.0
  %1857 = vmatpush1.msra.mxu0 0.0
  %1858 = vmatprep.subr.mxu0 0.0
  %1859 = vmatpush1.msra.mxu0 0.0
  %1860 = vmatprep.subr.mxu0 0.0
  %1861 = vmatpush1.msra.mxu0 0.0
  %1862 = vmatprep.subr.mxu0 0.0
  %1863 = vmatpush1.msra.mxu0 0.0
  %1864 = vmatprep.subr.mxu0 0.0
  %1865 = vmatpush1.msra.mxu0 %v1833
  %1866 = vmatprep.subr.mxu0 0.0
  %1867 = vmatpush1.msra.mxu0 %v1832
  %1868 = vmatprep.subr.mxu0 0.0
  %1869 = vmatpush1.msra.mxu0 %v1831
  %1870 = vmatprep.subr.mxu0 0.0
  %1871 = vmatpush1.msra.mxu0 %v1830
  %1872 = vmatprep.subr.mxu0 0.0
  %1873 = vmatpush1.msra.mxu0 %v1829
  %1874 = vmatprep.subr.mxu0 0.0
  %1875 = vmatpush1.msra.mxu0 %v1828
  %1876 = vmatprep.subr.mxu0 0.0
  %1877 = vmatpush1.msra.mxu0 %v1827
  %1878 = vmatprep.subr.mxu0 0.0
  %1879 = vmatpush1.msra.mxu0 %v1826
  %1880 = vmatprep.subr.mxu0 0.0
  %1881 = vmatpush2.msra.mxu0 0.0
  %1882 = vmatprep.subr.mxu0 0.0
  %1883 = vmatpush2.msra.mxu0 0.0
  %1884 = vmatprep.subr.mxu0 0.0
  %1885 = vmatpush2.msra.mxu0 0.0
  %1886 = vmatprep.subr.mxu0 0.0
  %1887 = vmatpush2.msra.mxu0 0.0
  %1888 = vmatprep.subr.mxu0 0.0
  %1889 = vmatpush2.msra.mxu0 0.0
  %1890 = vmatprep.subr.mxu0 0.0
  %1891 = vmatpush2.msra.mxu0 0.0
  %1892 = vmatprep.subr.mxu0 0.0
  %1893 = vmatpush2.msra.mxu0 0.0
  %1894 = vmatprep.subr.mxu0 0.0
  %1895 = vmatpush2.msra.mxu0 0.0
  %1896 = vmatprep.subr.mxu0 0.0
  %1897 = vmatpush2.msra.mxu0 0.0
  %1898 = vmatprep.subr.mxu0 0.0
  %1899 = vmatpush2.msra.mxu0 0.0
  %1900 = vmatprep.subr.mxu0 0.0
  %1901 = vmatpush2.msra.mxu0 0.0
  %1902 = vmatprep.subr.mxu0 0.0
  %1903 = vmatpush2.msra.mxu0 0.0
  %1904 = vmatprep.subr.mxu0 0.0
  %1905 = vmatpush2.msra.mxu0 0.0
  %1906 = vmatprep.subr.mxu0 0.0
  %1907 = vmatpush2.msra.mxu0 0.0
  %1908 = vmatprep.subr.mxu0 0.0
  %1909 = vmatpush2.msra.mxu0 0.0
  %1910 = vmatprep.subr.mxu0 0.0
  %1911 = vmatpush2.msra.mxu0 0.0
  %1912 = vmatprep.mubr.f32.mxu0 0.0
  %1913 = vmatmul.mubr.f32.gmra.mxu0 %v1843
  %v1914 = vpop.f32.mrf.mxu0
  %v1915 = vadd.f32 %v1839, %v1914
  %v1916 = vpop.f32.mrf.mxu0
  %1917 = vmatprep.mubr.f32.mxu0 0.0
  %1918 = vmatmul.mubr.f32.gmra.mxu0 %v1846
  %v1919 = vpop.f32.mrf.mxu0
  %v1920 = vadd.f32 %v1839, %v1919
  %v1921 = vpop.f32.mrf.mxu0
  %1922 = vdwg.mxu0
  %v1923 = vadd.f32 %v1730, %v1915
  %v1924 = vadd.f32 %v1731, %v1920
  %v1925 = vld [vmem:[%s13] sm:$0x1]
  %v1926 = vld [vmem:[%s14] sm:$0x1]
  %v1927 = vsel %vm155, %v1923, 0.0
  %1928 = vadd.xlane.f32.xlu0 %v1927
  %v1929 = vpop.xlane.xlu0 %1928
  %v1930 = vsel %vm155, %v1924, 0.0
  %1931 = vadd.xlane.f32.xlu0 %v1930
  %v1932 = vpop.xlane.xlu0 %1931
  %v1933 = vmul.f32 %v1929, %v1695
  %v1934 = vmul.f32 %v1932, %v1695
  %v1935 = vsub.f32 %v1923, %v1933
  %v1936 = vsub.f32 %v1924, %v1934
  %v1937 = vmul.f32 %v1935, %v1935
  %v1938 = vmul.f32 %v1936, %v1936
  %v1939 = vsel %vm155, %v1937, 0.0
  %1940 = vadd.xlane.f32.xlu0 %v1939
  %v1941 = vpop.xlane.xlu0 %1940
  %v1942 = vsel %vm155, %v1938, 0.0
  %1943 = vadd.xlane.f32.xlu0 %v1942
  %v1944 = vpop.xlane.xlu0 %1943
  %v1945 = vmul.f32 %v1941, %v1695
  %v1946 = vmul.f32 %v1944, %v1695
  %v1947 = vadd.f32 %v1945, 1e-05
  %v1948 = vadd.f32 %v1946, 1e-05
  %v1949 = vrsqrt.pop %v1947
  %v1950 = vrsqrt.pop %v1948
  %v1951 = vmul.f32 %v1935, %v1949
  %v1952 = vmul.f32 %v1936, %v1950
  %v1954 = vlaneseq
  %v1955 = vshrl.u32 %v1954, 7
  %v1956 = vsub.s32 0, %v1955
  %v1957 = vrot.slane %v1925, %v1956
  %v1959 = vmul.f32 %v1951, %v1957
  %v1960 = vmul.f32 %v1952, %v1957
  %v1962 = vlaneseq
  %v1963 = vshrl.u32 %v1962, 7
  %v1964 = vsub.s32 0, %v1963
  %v1965 = vrot.slane %v1926, %v1964
  %v1967 = vadd.f32 %v1959, %v1965
  %v1968 = vadd.f32 %v1960, %v1965
  %s1969 = scalar_lea.vmem %s3, 32
  %v1970 = vld [vmem:[%s1969] sm:$0xff]
  %v1971 = vld [vmem:[%s1969 + $0x8] sm:$0xff]
  %v1972 = vld [vmem:[%s1969 + $0x10] sm:$0xff]
  %v1973 = vld [vmem:[%s1969 + $0x18] sm:$0xff]
  %s1974 = scalar_lea.vmem %s4, 1
  %v1975 = vld [vmem:[%s1974] sm:$0x1]
  %v1977 = vlaneseq
  %v1978 = vshrl.u32 %v1977, 7
  %v1979 = vsub.s32 0, %v1978
  %v1980 = vrot.slane %v1975, %v1979
  %v1983 = vsel %vm155, %v1967, 0
  %v1986 = vsel %vm155, %v1968, 0
  %1988 = vmatprep.subr.mxu0 0.0
  %1989 = vmatpush1.msra.mxu0 0.0
  %1990 = vmatprep.subr.mxu0 0.0
  %1991 = vmatpush1.msra.mxu0 0.0
  %1992 = vmatprep.subr.mxu0 0.0
  %1993 = vmatpush1.msra.mxu0 0.0
  %1994 = vmatprep.subr.mxu0 0.0
  %1995 = vmatpush1.msra.mxu0 0.0
  %1996 = vmatprep.subr.mxu0 0.0
  %1997 = vmatpush1.msra.mxu0 0.0
  %1998 = vmatprep.subr.mxu0 0.0
  %1999 = vmatpush1.msra.mxu0 0.0
  %2000 = vmatprep.subr.mxu0 0.0
  %2001 = vmatpush1.msra.mxu0 0.0
  %2002 = vmatprep.subr.mxu0 0.0
  %2003 = vmatpush1.msra.mxu0 0.0
  %2004 = vmatprep.subr.mxu0 0.0
  %2005 = vmatpush1.msra.mxu0 0.0
  %2006 = vmatprep.subr.mxu0 0.0
  %2007 = vmatpush1.msra.mxu0 0.0
  %2008 = vmatprep.subr.mxu0 0.0
  %2009 = vmatpush1.msra.mxu0 0.0
  %2010 = vmatprep.subr.mxu0 0.0
  %2011 = vmatpush1.msra.mxu0 0.0
  %2012 = vmatprep.subr.mxu0 0.0
  %2013 = vmatpush1.msra.mxu0 %v1973
  %2014 = vmatprep.subr.mxu0 0.0
  %2015 = vmatpush1.msra.mxu0 %v1972
  %2016 = vmatprep.subr.mxu0 0.0
  %2017 = vmatpush1.msra.mxu0 %v1971
  %2018 = vmatprep.subr.mxu0 0.0
  %2019 = vmatpush1.msra.mxu0 %v1970
  %2020 = vmatprep.subr.mxu0 0.0
  %2021 = vmatpush2.msra.mxu0 0.0
  %2022 = vmatprep.subr.mxu0 0.0
  %2023 = vmatpush2.msra.mxu0 0.0
  %2024 = vmatprep.subr.mxu0 0.0
  %2025 = vmatpush2.msra.mxu0 0.0
  %2026 = vmatprep.subr.mxu0 0.0
  %2027 = vmatpush2.msra.mxu0 0.0
  %2028 = vmatprep.subr.mxu0 0.0
  %2029 = vmatpush2.msra.mxu0 0.0
  %2030 = vmatprep.subr.mxu0 0.0
  %2031 = vmatpush2.msra.mxu0 0.0
  %2032 = vmatprep.subr.mxu0 0.0
  %2033 = vmatpush2.msra.mxu0 0.0
  %2034 = vmatprep.subr.mxu0 0.0
  %2035 = vmatpush2.msra.mxu0 0.0
  %2036 = vmatprep.subr.mxu0 0.0
  %2037 = vmatpush2.msra.mxu0 0.0
  %2038 = vmatprep.subr.mxu0 0.0
  %2039 = vmatpush2.msra.mxu0 0.0
  %2040 = vmatprep.subr.mxu0 0.0
  %2041 = vmatpush2.msra.mxu0 0.0
  %2042 = vmatprep.subr.mxu0 0.0
  %2043 = vmatpush2.msra.mxu0 0.0
  %2044 = vmatprep.subr.mxu0 0.0
  %2045 = vmatpush2.msra.mxu0 0.0
  %2046 = vmatprep.subr.mxu0 0.0
  %2047 = vmatpush2.msra.mxu0 0.0
  %2048 = vmatprep.subr.mxu0 0.0
  %2049 = vmatpush2.msra.mxu0 0.0
  %2050 = vmatprep.subr.mxu0 0.0
  %2051 = vmatpush2.msra.mxu0 0.0
  %2052 = vmatprep.mubr.f32.mxu0 0.0
  %2053 = vmatmul.mubr.f32.gmra.mxu0 %v1983
  %v2054 = vpop.f32.mrf.mxu0
  %v2055 = vadd.f32 %v1980, %v2054
  %v2056 = vpop.f32.mrf.mxu0
  %2057 = vmatprep.mubr.f32.mxu0 0.0
  %2058 = vmatmul.mubr.f32.gmra.mxu0 %v1986
  %v2059 = vpop.f32.mrf.mxu0
  %v2060 = vadd.f32 %v1980, %v2059
  %v2061 = vpop.f32.mrf.mxu0
  %2062 = vdwg.mxu0
  %2064 = vrot.lane.b32.xlu0 %v2055, 96
  %v2065 = vpop.permute.xlu0 %2064
  %v2066 = vsel %vm240, %v2055, 0
  %v2068 = vsel %vm240, %v2065, 0
  %2070 = vmatprep.subr.mxu0 0.0
  %2071 = vmatpush1.xpose.msra.mxu0 0.0
  %2072 = vmatprep.subr.mxu0 0.0
  %2073 = vmatpush1.xpose.msra.mxu0 0.0
  %2074 = vmatprep.subr.mxu0 0.0
  %2075 = vmatpush1.xpose.msra.mxu0 0.0
  %2076 = vmatprep.subr.mxu0 0.0
  %2077 = vmatpush1.xpose.msra.mxu0 0.0
  %2078 = vmatprep.subr.mxu0 0.0
  %2079 = vmatpush1.xpose.msra.mxu0 0.0
  %2080 = vmatprep.subr.mxu0 0.0
  %2081 = vmatpush1.xpose.msra.mxu0 0.0
  %2082 = vmatprep.subr.mxu0 0.0
  %2083 = vmatpush1.xpose.msra.mxu0 0.0
  %2084 = vmatprep.subr.mxu0 0.0
  %2085 = vmatpush1.xpose.msra.mxu0 0.0
  %2086 = vmatprep.subr.mxu0 0.0
  %2087 = vmatpush1.xpose.msra.mxu0 0.0
  %2088 = vmatprep.subr.mxu0 0.0
  %2089 = vmatpush1.xpose.msra.mxu0 0.0
  %2090 = vmatprep.subr.mxu0 0.0
  %2091 = vmatpush1.xpose.msra.mxu0 0.0
  %2092 = vmatprep.subr.mxu0 0.0
  %2093 = vmatpush1.xpose.msra.mxu0 0.0
  %2094 = vmatprep.subr.mxu0 0.0
  %2095 = vmatpush1.xpose.msra.mxu0 0.0
  %2096 = vmatprep.subr.mxu0 0.0
  %2097 = vmatpush1.xpose.msra.mxu0 0.0
  %2098 = vmatprep.subr.mxu0 0.0
  %2099 = vmatpush1.xpose.msra.mxu0 0.0
  %2100 = vmatprep.subr.mxu0 0.0
  %2101 = vmatpush1.xpose.msra.mxu0 %v2068
  %2102 = vmatprep.subr.mxu0 0.0
  %2103 = vmatpush2.xpose.msra.mxu0 0.0
  %2104 = vmatprep.subr.mxu0 0.0
  %2105 = vmatpush2.xpose.msra.mxu0 0.0
  %2106 = vmatprep.subr.mxu0 0.0
  %2107 = vmatpush2.xpose.msra.mxu0 0.0
  %2108 = vmatprep.subr.mxu0 0.0
  %2109 = vmatpush2.xpose.msra.mxu0 0.0
  %2110 = vmatprep.subr.mxu0 0.0
  %2111 = vmatpush2.xpose.msra.mxu0 0.0
  %2112 = vmatprep.subr.mxu0 0.0
  %2113 = vmatpush2.xpose.msra.mxu0 0.0
  %2114 = vmatprep.subr.mxu0 0.0
  %2115 = vmatpush2.xpose.msra.mxu0 0.0
  %2116 = vmatprep.subr.mxu0 0.0
  %2117 = vmatpush2.xpose.msra.mxu0 0.0
  %2118 = vmatprep.subr.mxu0 0.0
  %2119 = vmatpush2.xpose.msra.mxu0 0.0
  %2120 = vmatprep.subr.mxu0 0.0
  %2121 = vmatpush2.xpose.msra.mxu0 0.0
  %2122 = vmatprep.subr.mxu0 0.0
  %2123 = vmatpush2.xpose.msra.mxu0 0.0
  %2124 = vmatprep.subr.mxu0 0.0
  %2125 = vmatpush2.xpose.msra.mxu0 0.0
  %2126 = vmatprep.subr.mxu0 0.0
  %2127 = vmatpush2.xpose.msra.mxu0 0.0
  %2128 = vmatprep.subr.mxu0 0.0
  %2129 = vmatpush2.xpose.msra.mxu0 0.0
  %2130 = vmatprep.subr.mxu0 0.0
  %2131 = vmatpush2.xpose.msra.mxu0 0.0
  %2132 = vmatprep.subr.mxu0 0.0
  %2133 = vmatpush2.xpose.msra.mxu0 0.0
  %2134 = vmatprep.mubr.f32.mxu0 0.0
  %2135 = vmatmul.mubr.f32.gmra.mxu0 %v2066
  %v2136 = vpop.f32.mrf.mxu0
  %v2137 = vadd.f32 0.0, %v2136
  %v2138 = vpop.f32.mrf.mxu0
  %2139 = vdwg.mxu0
  %v2140 = vsel %vm240, %v2137, -inf
  %2141 = vmax.xlane.f32.xlu0 %v2140
  %v2142 = vpop.xlane.xlu0 %2141
  %v2143 = vsub.f32 %v2137, %v2142
  %v2144 = vmul.f32 %v2143, 1.442695
  %v2145 = vpow.pop %v2144
  %v2146 = vsel %vm240, %v2145, 0.0
  %2147 = vadd.xlane.f32.xlu0 %v2146
  %v2148 = vpop.xlane.xlu0 %2147
  %v2149 = vrcp.pop %v2148
  %v2150 = vmul.f32 %v2145, %v2149
  %2151 = vrot.lane.b32.xlu0 %v2055, 64
  %v2152 = vpop.permute.xlu0 %2151
  %v2155 = vsel %vm240, %v2150, 0
  %2157 = vmatprep.subr.mxu0 0.0
  %2158 = vmatpush1.msra.mxu0 0.0
  %2159 = vmatprep.subr.mxu0 0.0
  %2160 = vmatpush1.msra.mxu0 0.0
  %2161 = vmatprep.subr.mxu0 0.0
  %2162 = vmatpush1.msra.mxu0 0.0
  %2163 = vmatprep.subr.mxu0 0.0
  %2164 = vmatpush1.msra.mxu0 0.0
  %2165 = vmatprep.subr.mxu0 0.0
  %2166 = vmatpush1.msra.mxu0 0.0
  %2167 = vmatprep.subr.mxu0 0.0
  %2168 = vmatpush1.msra.mxu0 0.0
  %2169 = vmatprep.subr.mxu0 0.0
  %2170 = vmatpush1.msra.mxu0 0.0
  %2171 = vmatprep.subr.mxu0 0.0
  %2172 = vmatpush1.msra.mxu0 0.0
  %2173 = vmatprep.subr.mxu0 0.0
  %2174 = vmatpush1.msra.mxu0 0.0
  %2175 = vmatprep.subr.mxu0 0.0
  %2176 = vmatpush1.msra.mxu0 0.0
  %2177 = vmatprep.subr.mxu0 0.0
  %2178 = vmatpush1.msra.mxu0 0.0
  %2179 = vmatprep.subr.mxu0 0.0
  %2180 = vmatpush1.msra.mxu0 0.0
  %2181 = vmatprep.subr.mxu0 0.0
  %2182 = vmatpush1.msra.mxu0 0.0
  %2183 = vmatprep.subr.mxu0 0.0
  %2184 = vmatpush1.msra.mxu0 0.0
  %2185 = vmatprep.subr.mxu0 0.0
  %2186 = vmatpush1.msra.mxu0 0.0
  %2187 = vmatprep.subr.mxu0 0.0
  %2188 = vmatpush1.msra.mxu0 %v2152
  %2189 = vmatprep.subr.mxu0 0.0
  %2190 = vmatpush2.msra.mxu0 0.0
  %2191 = vmatprep.subr.mxu0 0.0
  %2192 = vmatpush2.msra.mxu0 0.0
  %2193 = vmatprep.subr.mxu0 0.0
  %2194 = vmatpush2.msra.mxu0 0.0
  %2195 = vmatprep.subr.mxu0 0.0
  %2196 = vmatpush2.msra.mxu0 0.0
  %2197 = vmatprep.subr.mxu0 0.0
  %2198 = vmatpush2.msra.mxu0 0.0
  %2199 = vmatprep.subr.mxu0 0.0
  %2200 = vmatpush2.msra.mxu0 0.0
  %2201 = vmatprep.subr.mxu0 0.0
  %2202 = vmatpush2.msra.mxu0 0.0
  %2203 = vmatprep.subr.mxu0 0.0
  %2204 = vmatpush2.msra.mxu0 0.0
  %2205 = vmatprep.subr.mxu0 0.0
  %2206 = vmatpush2.msra.mxu0 0.0
  %2207 = vmatprep.subr.mxu0 0.0
  %2208 = vmatpush2.msra.mxu0 0.0
  %2209 = vmatprep.subr.mxu0 0.0
  %2210 = vmatpush2.msra.mxu0 0.0
  %2211 = vmatprep.subr.mxu0 0.0
  %2212 = vmatpush2.msra.mxu0 0.0
  %2213 = vmatprep.subr.mxu0 0.0
  %2214 = vmatpush2.msra.mxu0 0.0
  %2215 = vmatprep.subr.mxu0 0.0
  %2216 = vmatpush2.msra.mxu0 0.0
  %2217 = vmatprep.subr.mxu0 0.0
  %2218 = vmatpush2.msra.mxu0 0.0
  %2219 = vmatprep.subr.mxu0 0.0
  %2220 = vmatpush2.msra.mxu0 0.0
  %2221 = vmatprep.mubr.f32.mxu0 0.0
  %2222 = vmatmul.mubr.f32.gmra.mxu0 %v2155
  %v2223 = vpop.f32.mrf.mxu0
  %v2224 = vadd.f32 0.0, %v2223
  %v2225 = vpop.f32.mrf.mxu0
  %2226 = vdwg.mxu0
  %2227 = vst.msk [vmem:[#allocation2] sm:$0xff] %vm240, %v2224
  %2228 = vrot.lane.b32.xlu0 %v2055, 120
  %v2229 = vpop.permute.xlu0 %2228
  %2230 = vrot.lane.b32.xlu0 %v2055, 88
  %v2231 = vpop.permute.xlu0 %2230
  %v2232 = vsel %vm240, %v2229, 0
  %v2234 = vsel %vm240, %v2231, 0
  %2236 = vmatprep.subr.mxu0 0.0
  %2237 = vmatpush1.xpose.msra.mxu0 0.0
  %2238 = vmatprep.subr.mxu0 0.0
  %2239 = vmatpush1.xpose.msra.mxu0 0.0
  %2240 = vmatprep.subr.mxu0 0.0
  %2241 = vmatpush1.xpose.msra.mxu0 0.0
  %2242 = vmatprep.subr.mxu0 0.0
  %2243 = vmatpush1.xpose.msra.mxu0 0.0
  %2244 = vmatprep.subr.mxu0 0.0
  %2245 = vmatpush1.xpose.msra.mxu0 0.0
  %2246 = vmatprep.subr.mxu0 0.0
  %2247 = vmatpush1.xpose.msra.mxu0 0.0
  %2248 = vmatprep.subr.mxu0 0.0
  %2249 = vmatpush1.xpose.msra.mxu0 0.0
  %2250 = vmatprep.subr.mxu0 0.0
  %2251 = vmatpush1.xpose.msra.mxu0 0.0
  %2252 = vmatprep.subr.mxu0 0.0
  %2253 = vmatpush1.xpose.msra.mxu0 0.0
  %2254 = vmatprep.subr.mxu0 0.0
  %2255 = vmatpush1.xpose.msra.mxu0 0.0
  %2256 = vmatprep.subr.mxu0 0.0
  %2257 = vmatpush1.xpose.msra.mxu0 0.0
  %2258 = vmatprep.subr.mxu0 0.0
  %2259 = vmatpush1.xpose.msra.mxu0 0.0
  %2260 = vmatprep.subr.mxu0 0.0
  %2261 = vmatpush1.xpose.msra.mxu0 0.0
  %2262 = vmatprep.subr.mxu0 0.0
  %2263 = vmatpush1.xpose.msra.mxu0 0.0
  %2264 = vmatprep.subr.mxu0 0.0
  %2265 = vmatpush1.xpose.msra.mxu0 0.0
  %2266 = vmatprep.subr.mxu0 0.0
  %2267 = vmatpush1.xpose.msra.mxu0 %v2234
  %2268 = vmatprep.subr.mxu0 0.0
  %2269 = vmatpush2.xpose.msra.mxu0 0.0
  %2270 = vmatprep.subr.mxu0 0.0
  %2271 = vmatpush2.xpose.msra.mxu0 0.0
  %2272 = vmatprep.subr.mxu0 0.0
  %2273 = vmatpush2.xpose.msra.mxu0 0.0
  %2274 = vmatprep.subr.mxu0 0.0
  %2275 = vmatpush2.xpose.msra.mxu0 0.0
  %2276 = vmatprep.subr.mxu0 0.0
  %2277 = vmatpush2.xpose.msra.mxu0 0.0
  %2278 = vmatprep.subr.mxu0 0.0
  %2279 = vmatpush2.xpose.msra.mxu0 0.0
  %2280 = vmatprep.subr.mxu0 0.0
  %2281 = vmatpush2.xpose.msra.mxu0 0.0
  %2282 = vmatprep.subr.mxu0 0.0
  %2283 = vmatpush2.xpose.msra.mxu0 0.0
  %2284 = vmatprep.subr.mxu0 0.0
  %2285 = vmatpush2.xpose.msra.mxu0 0.0
  %2286 = vmatprep.subr.mxu0 0.0
  %2287 = vmatpush2.xpose.msra.mxu0 0.0
  %2288 = vmatprep.subr.mxu0 0.0
  %2289 = vmatpush2.xpose.msra.mxu0 0.0
  %2290 = vmatprep.subr.mxu0 0.0
  %2291 = vmatpush2.xpose.msra.mxu0 0.0
  %2292 = vmatprep.subr.mxu0 0.0
  %2293 = vmatpush2.xpose.msra.mxu0 0.0
  %2294 = vmatprep.subr.mxu0 0.0
  %2295 = vmatpush2.xpose.msra.mxu0 0.0
  %2296 = vmatprep.subr.mxu0 0.0
  %2297 = vmatpush2.xpose.msra.mxu0 0.0
  %2298 = vmatprep.subr.mxu0 0.0
  %2299 = vmatpush2.xpose.msra.mxu0 0.0
  %2300 = vmatprep.mubr.f32.mxu0 0.0
  %2301 = vmatmul.mubr.f32.gmra.mxu0 %v2232
  %v2302 = vpop.f32.mrf.mxu0
  %v2303 = vadd.f32 0.0, %v2302
  %v2304 = vpop.f32.mrf.mxu0
  %2305 = vdwg.mxu0
  %v2306 = vsel %vm240, %v2303, -inf
  %2307 = vmax.xlane.f32.xlu0 %v2306
  %v2308 = vpop.xlane.xlu0 %2307
  %v2309 = vsub.f32 %v2303, %v2308
  %v2310 = vmul.f32 %v2309, 1.442695
  %v2311 = vpow.pop %v2310
  %v2312 = vsel %vm240, %v2311, 0.0
  %2313 = vadd.xlane.f32.xlu0 %v2312
  %v2314 = vpop.xlane.xlu0 %2313
  %v2315 = vrcp.pop %v2314
  %v2316 = vmul.f32 %v2311, %v2315
  %2317 = vrot.lane.b32.xlu0 %v2055, 56
  %v2318 = vpop.permute.xlu0 %2317
  %v2321 = vsel %vm240, %v2316, 0
  %2323 = vmatprep.subr.mxu0 0.0
  %2324 = vmatpush1.msra.mxu0 0.0
  %2325 = vmatprep.subr.mxu0 0.0
  %2326 = vmatpush1.msra.mxu0 0.0
  %2327 = vmatprep.subr.mxu0 0.0
  %2328 = vmatpush1.msra.mxu0 0.0
  %2329 = vmatprep.subr.mxu0 0.0
  %2330 = vmatpush1.msra.mxu0 0.0
  %2331 = vmatprep.subr.mxu0 0.0
  %2332 = vmatpush1.msra.mxu0 0.0
  %2333 = vmatprep.subr.mxu0 0.0
  %2334 = vmatpush1.msra.mxu0 0.0
  %2335 = vmatprep.subr.mxu0 0.0
  %2336 = vmatpush1.msra.mxu0 0.0
  %2337 = vmatprep.subr.mxu0 0.0
  %2338 = vmatpush1.msra.mxu0 0.0
  %2339 = vmatprep.subr.mxu0 0.0
  %2340 = vmatpush1.msra.mxu0 0.0
  %2341 = vmatprep.subr.mxu0 0.0
  %2342 = vmatpush1.msra.mxu0 0.0
  %2343 = vmatprep.subr.mxu0 0.0
  %2344 = vmatpush1.msra.mxu0 0.0
  %2345 = vmatprep.subr.mxu0 0.0
  %2346 = vmatpush1.msra.mxu0 0.0
  %2347 = vmatprep.subr.mxu0 0.0
  %2348 = vmatpush1.msra.mxu0 0.0
  %2349 = vmatprep.subr.mxu0 0.0
  %2350 = vmatpush1.msra.mxu0 0.0
  %2351 = vmatprep.subr.mxu0 0.0
  %2352 = vmatpush1.msra.mxu0 0.0
  %2353 = vmatprep.subr.mxu0 0.0
  %2354 = vmatpush1.msra.mxu0 %v2318
  %2355 = vmatprep.subr.mxu0 0.0
  %2356 = vmatpush2.msra.mxu0 0.0
  %2357 = vmatprep.subr.mxu0 0.0
  %2358 = vmatpush2.msra.mxu0 0.0
  %2359 = vmatprep.subr.mxu0 0.0
  %2360 = vmatpush2.msra.mxu0 0.0
  %2361 = vmatprep.subr.mxu0 0.0
  %2362 = vmatpush2.msra.mxu0 0.0
  %2363 = vmatprep.subr.mxu0 0.0
  %2364 = vmatpush2.msra.mxu0 0.0
  %2365 = vmatprep.subr.mxu0 0.0
  %2366 = vmatpush2.msra.mxu0 0.0
  %2367 = vmatprep.subr.mxu0 0.0
  %2368 = vmatpush2.msra.mxu0 0.0
  %2369 = vmatprep.subr.mxu0 0.0
  %2370 = vmatpush2.msra.mxu0 0.0
  %2371 = vmatprep.subr.mxu0 0.0
  %2372 = vmatpush2.msra.mxu0 0.0
  %2373 = vmatprep.subr.mxu0 0.0
  %2374 = vmatpush2.msra.mxu0 0.0
  %2375 = vmatprep.subr.mxu0 0.0
  %2376 = vmatpush2.msra.mxu0 0.0
  %2377 = vmatprep.subr.mxu0 0.0
  %2378 = vmatpush2.msra.mxu0 0.0
  %2379 = vmatprep.subr.mxu0 0.0
  %2380 = vmatpush2.msra.mxu0 0.0
  %2381 = vmatprep.subr.mxu0 0.0
  %2382 = vmatpush2.msra.mxu0 0.0
  %2383 = vmatprep.subr.mxu0 0.0
  %2384 = vmatpush2.msra.mxu0 0.0
  %2385 = vmatprep.subr.mxu0 0.0
  %2386 = vmatpush2.msra.mxu0 0.0
  %2387 = vmatprep.mubr.f32.mxu0 0.0
  %2388 = vmatmul.mubr.f32.gmra.mxu0 %v2321
  %v2389 = vpop.f32.mrf.mxu0
  %v2390 = vadd.f32 0.0, %v2389
  %v2391 = vpop.f32.mrf.mxu0
  %2392 = vdwg.mxu0
  %2394 = vrot.lane.b32.xlu0 %v2390, 8
  %v2395 = vpop.permute.xlu0 %2394
  %2397 = vst.msk [vmem:[#allocation2] sm:$0xff] %vm572, %v2395
  %2398 = vrot.lane.b32.xlu0 %v2055, 112
  %v2399 = vpop.permute.xlu0 %2398
  %2400 = vrot.lane.b32.xlu0 %v2055, 80
  %v2401 = vpop.permute.xlu0 %2400
  %v2402 = vsel %vm240, %v2399, 0
  %v2404 = vsel %vm240, %v2401, 0
  %2406 = vmatprep.subr.mxu0 0.0
  %2407 = vmatpush1.xpose.msra.mxu0 0.0
  %2408 = vmatprep.subr.mxu0 0.0
  %2409 = vmatpush1.xpose.msra.mxu0 0.0
  %2410 = vmatprep.subr.mxu0 0.0
  %2411 = vmatpush1.xpose.msra.mxu0 0.0
  %2412 = vmatprep.subr.mxu0 0.0
  %2413 = vmatpush1.xpose.msra.mxu0 0.0
  %2414 = vmatprep.subr.mxu0 0.0
  %2415 = vmatpush1.xpose.msra.mxu0 0.0
  %2416 = vmatprep.subr.mxu0 0.0
  %2417 = vmatpush1.xpose.msra.mxu0 0.0
  %2418 = vmatprep.subr.mxu0 0.0
  %2419 = vmatpush1.xpose.msra.mxu0 0.0
  %2420 = vmatprep.subr.mxu0 0.0
  %2421 = vmatpush1.xpose.msra.mxu0 0.0
  %2422 = vmatprep.subr.mxu0 0.0
  %2423 = vmatpush1.xpose.msra.mxu0 0.0
  %2424 = vmatprep.subr.mxu0 0.0
  %2425 = vmatpush1.xpose.msra.mxu0 0.0
  %2426 = vmatprep.subr.mxu0 0.0
  %2427 = vmatpush1.xpose.msra.mxu0 0.0
  %2428 = vmatprep.subr.mxu0 0.0
  %2429 = vmatpush1.xpose.msra.mxu0 0.0
  %2430 = vmatprep.subr.mxu0 0.0
  %2431 = vmatpush1.xpose.msra.mxu0 0.0
  %2432 = vmatprep.subr.mxu0 0.0
  %2433 = vmatpush1.xpose.msra.mxu0 0.0
  %2434 = vmatprep.subr.mxu0 0.0
  %2435 = vmatpush1.xpose.msra.mxu0 0.0
  %2436 = vmatprep.subr.mxu0 0.0
  %2437 = vmatpush1.xpose.msra.mxu0 %v2404
  %2438 = vmatprep.subr.mxu0 0.0
  %2439 = vmatpush2.xpose.msra.mxu0 0.0
  %2440 = vmatprep.subr.mxu0 0.0
  %2441 = vmatpush2.xpose.msra.mxu0 0.0
  %2442 = vmatprep.subr.mxu0 0.0
  %2443 = vmatpush2.xpose.msra.mxu0 0.0
  %2444 = vmatprep.subr.mxu0 0.0
  %2445 = vmatpush2.xpose.msra.mxu0 0.0
  %2446 = vmatprep.subr.mxu0 0.0
  %2447 = vmatpush2.xpose.msra.mxu0 0.0
  %2448 = vmatprep.subr.mxu0 0.0
  %2449 = vmatpush2.xpose.msra.mxu0 0.0
  %2450 = vmatprep.subr.mxu0 0.0
  %2451 = vmatpush2.xpose.msra.mxu0 0.0
  %2452 = vmatprep.subr.mxu0 0.0
  %2453 = vmatpush2.xpose.msra.mxu0 0.0
  %2454 = vmatprep.subr.mxu0 0.0
  %2455 = vmatpush2.xpose.msra.mxu0 0.0
  %2456 = vmatprep.subr.mxu0 0.0
  %2457 = vmatpush2.xpose.msra.mxu0 0.0
  %2458 = vmatprep.subr.mxu0 0.0
  %2459 = vmatpush2.xpose.msra.mxu0 0.0
  %2460 = vmatprep.subr.mxu0 0.0
  %2461 = vmatpush2.xpose.msra.mxu0 0.0
  %2462 = vmatprep.subr.mxu0 0.0
  %2463 = vmatpush2.xpose.msra.mxu0 0.0
  %2464 = vmatprep.subr.mxu0 0.0
  %2465 = vmatpush2.xpose.msra.mxu0 0.0
  %2466 = vmatprep.subr.mxu0 0.0
  %2467 = vmatpush2.xpose.msra.mxu0 0.0
  %2468 = vmatprep.subr.mxu0 0.0
  %2469 = vmatpush2.xpose.msra.mxu0 0.0
  %2470 = vmatprep.mubr.f32.mxu0 0.0
  %2471 = vmatmul.mubr.f32.gmra.mxu0 %v2402
  %v2472 = vpop.f32.mrf.mxu0
  %v2473 = vadd.f32 0.0, %v2472
  %v2474 = vpop.f32.mrf.mxu0
  %2475 = vdwg.mxu0
  %v2476 = vsel %vm240, %v2473, -inf
  %2477 = vmax.xlane.f32.xlu0 %v2476
  %v2478 = vpop.xlane.xlu0 %2477
  %v2479 = vsub.f32 %v2473, %v2478
  %v2480 = vmul.f32 %v2479, 1.442695
  %v2481 = vpow.pop %v2480
  %v2482 = vsel %vm240, %v2481, 0.0
  %2483 = vadd.xlane.f32.xlu0 %v2482
  %v2484 = vpop.xlane.xlu0 %2483
  %v2485 = vrcp.pop %v2484
  %v2486 = vmul.f32 %v2481, %v2485
  %2487 = vrot.lane.b32.xlu0 %v2055, 48
  %v2488 = vpop.permute.xlu0 %2487
  %v2491 = vsel %vm240, %v2486, 0
  %2493 = vmatprep.subr.mxu0 0.0
  %2494 = vmatpush1.msra.mxu0 0.0
  %2495 = vmatprep.subr.mxu0 0.0
  %2496 = vmatpush1.msra.mxu0 0.0
  %2497 = vmatprep.subr.mxu0 0.0
  %2498 = vmatpush1.msra.mxu0 0.0
  %2499 = vmatprep.subr.mxu0 0.0
  %2500 = vmatpush1.msra.mxu0 0.0
  %2501 = vmatprep.subr.mxu0 0.0
  %2502 = vmatpush1.msra.mxu0 0.0
  %2503 = vmatprep.subr.mxu0 0.0
  %2504 = vmatpush1.msra.mxu0 0.0
  %2505 = vmatprep.subr.mxu0 0.0
  %2506 = vmatpush1.msra.mxu0 0.0
  %2507 = vmatprep.subr.mxu0 0.0
  %2508 = vmatpush1.msra.mxu0 0.0
  %2509 = vmatprep.subr.mxu0 0.0
  %2510 = vmatpush1.msra.mxu0 0.0
  %2511 = vmatprep.subr.mxu0 0.0
  %2512 = vmatpush1.msra.mxu0 0.0
  %2513 = vmatprep.subr.mxu0 0.0
  %2514 = vmatpush1.msra.mxu0 0.0
  %2515 = vmatprep.subr.mxu0 0.0
  %2516 = vmatpush1.msra.mxu0 0.0
  %2517 = vmatprep.subr.mxu0 0.0
  %2518 = vmatpush1.msra.mxu0 0.0
  %2519 = vmatprep.subr.mxu0 0.0
  %2520 = vmatpush1.msra.mxu0 0.0
  %2521 = vmatprep.subr.mxu0 0.0
  %2522 = vmatpush1.msra.mxu0 0.0
  %2523 = vmatprep.subr.mxu0 0.0
  %2524 = vmatpush1.msra.mxu0 %v2488
  %2525 = vmatprep.subr.mxu0 0.0
  %2526 = vmatpush2.msra.mxu0 0.0
  %2527 = vmatprep.subr.mxu0 0.0
  %2528 = vmatpush2.msra.mxu0 0.0
  %2529 = vmatprep.subr.mxu0 0.0
  %2530 = vmatpush2.msra.mxu0 0.0
  %2531 = vmatprep.subr.mxu0 0.0
  %2532 = vmatpush2.msra.mxu0 0.0
  %2533 = vmatprep.subr.mxu0 0.0
  %2534 = vmatpush2.msra.mxu0 0.0
  %2535 = vmatprep.subr.mxu0 0.0
  %2536 = vmatpush2.msra.mxu0 0.0
  %2537 = vmatprep.subr.mxu0 0.0
  %2538 = vmatpush2.msra.mxu0 0.0
  %2539 = vmatprep.subr.mxu0 0.0
  %2540 = vmatpush2.msra.mxu0 0.0
  %2541 = vmatprep.subr.mxu0 0.0
  %2542 = vmatpush2.msra.mxu0 0.0
  %2543 = vmatprep.subr.mxu0 0.0
  %2544 = vmatpush2.msra.mxu0 0.0
  %2545 = vmatprep.subr.mxu0 0.0
  %2546 = vmatpush2.msra.mxu0 0.0
  %2547 = vmatprep.subr.mxu0 0.0
  %2548 = vmatpush2.msra.mxu0 0.0
  %2549 = vmatprep.subr.mxu0 0.0
  %2550 = vmatpush2.msra.mxu0 0.0
  %2551 = vmatprep.subr.mxu0 0.0
  %2552 = vmatpush2.msra.mxu0 0.0
  %2553 = vmatprep.subr.mxu0 0.0
  %2554 = vmatpush2.msra.mxu0 0.0
  %2555 = vmatprep.subr.mxu0 0.0
  %2556 = vmatpush2.msra.mxu0 0.0
  %2557 = vmatprep.mubr.f32.mxu0 0.0
  %2558 = vmatmul.mubr.f32.gmra.mxu0 %v2491
  %v2559 = vpop.f32.mrf.mxu0
  %v2560 = vadd.f32 0.0, %v2559
  %v2561 = vpop.f32.mrf.mxu0
  %2562 = vdwg.mxu0
  %2564 = vrot.lane.b32.xlu0 %v2560, 16
  %v2565 = vpop.permute.xlu0 %2564
  %2567 = vst.msk [vmem:[#allocation2] sm:$0xff] %vm743, %v2565
  %2568 = vrot.lane.b32.xlu0 %v2055, 104
  %v2569 = vpop.permute.xlu0 %2568
  %2570 = vrot.lane.b32.xlu0 %v2055, 72
  %v2571 = vpop.permute.xlu0 %2570
  %v2572 = vsel %vm240, %v2569, 0
  %v2574 = vsel %vm240, %v2571, 0
  %2576 = vmatprep.subr.mxu0 0.0
  %2577 = vmatpush1.xpose.msra.mxu0 0.0
  %2578 = vmatprep.subr.mxu0 0.0
  %2579 = vmatpush1.xpose.msra.mxu0 0.0
  %2580 = vmatprep.subr.mxu0 0.0
  %2581 = vmatpush1.xpose.msra.mxu0 0.0
  %2582 = vmatprep.subr.mxu0 0.0
  %2583 = vmatpush1.xpose.msra.mxu0 0.0
  %2584 = vmatprep.subr.mxu0 0.0
  %2585 = vmatpush1.xpose.msra.mxu0 0.0
  %2586 = vmatprep.subr.mxu0 0.0
  %2587 = vmatpush1.xpose.msra.mxu0 0.0
  %2588 = vmatprep.subr.mxu0 0.0
  %2589 = vmatpush1.xpose.msra.mxu0 0.0
  %2590 = vmatprep.subr.mxu0 0.0
  %2591 = vmatpush1.xpose.msra.mxu0 0.0
  %2592 = vmatprep.subr.mxu0 0.0
  %2593 = vmatpush1.xpose.msra.mxu0 0.0
  %2594 = vmatprep.subr.mxu0 0.0
  %2595 = vmatpush1.xpose.msra.mxu0 0.0
  %2596 = vmatprep.subr.mxu0 0.0
  %2597 = vmatpush1.xpose.msra.mxu0 0.0
  %2598 = vmatprep.subr.mxu0 0.0
  %2599 = vmatpush1.xpose.msra.mxu0 0.0
  %2600 = vmatprep.subr.mxu0 0.0
  %2601 = vmatpush1.xpose.msra.mxu0 0.0
  %2602 = vmatprep.subr.mxu0 0.0
  %2603 = vmatpush1.xpose.msra.mxu0 0.0
  %2604 = vmatprep.subr.mxu0 0.0
  %2605 = vmatpush1.xpose.msra.mxu0 0.0
  %2606 = vmatprep.subr.mxu0 0.0
  %2607 = vmatpush1.xpose.msra.mxu0 %v2574
  %2608 = vmatprep.subr.mxu0 0.0
  %2609 = vmatpush2.xpose.msra.mxu0 0.0
  %2610 = vmatprep.subr.mxu0 0.0
  %2611 = vmatpush2.xpose.msra.mxu0 0.0
  %2612 = vmatprep.subr.mxu0 0.0
  %2613 = vmatpush2.xpose.msra.mxu0 0.0
  %2614 = vmatprep.subr.mxu0 0.0
  %2615 = vmatpush2.xpose.msra.mxu0 0.0
  %2616 = vmatprep.subr.mxu0 0.0
  %2617 = vmatpush2.xpose.msra.mxu0 0.0
  %2618 = vmatprep.subr.mxu0 0.0
  %2619 = vmatpush2.xpose.msra.mxu0 0.0
  %2620 = vmatprep.subr.mxu0 0.0
  %2621 = vmatpush2.xpose.msra.mxu0 0.0
  %2622 = vmatprep.subr.mxu0 0.0
  %2623 = vmatpush2.xpose.msra.mxu0 0.0
  %2624 = vmatprep.subr.mxu0 0.0
  %2625 = vmatpush2.xpose.msra.mxu0 0.0
  %2626 = vmatprep.subr.mxu0 0.0
  %2627 = vmatpush2.xpose.msra.mxu0 0.0
  %2628 = vmatprep.subr.mxu0 0.0
  %2629 = vmatpush2.xpose.msra.mxu0 0.0
  %2630 = vmatprep.subr.mxu0 0.0
  %2631 = vmatpush2.xpose.msra.mxu0 0.0
  %2632 = vmatprep.subr.mxu0 0.0
  %2633 = vmatpush2.xpose.msra.mxu0 0.0
  %2634 = vmatprep.subr.mxu0 0.0
  %2635 = vmatpush2.xpose.msra.mxu0 0.0
  %2636 = vmatprep.subr.mxu0 0.0
  %2637 = vmatpush2.xpose.msra.mxu0 0.0
  %2638 = vmatprep.subr.mxu0 0.0
  %2639 = vmatpush2.xpose.msra.mxu0 0.0
  %2640 = vmatprep.mubr.f32.mxu0 0.0
  %2641 = vmatmul.mubr.f32.gmra.mxu0 %v2572
  %v2642 = vpop.f32.mrf.mxu0
  %v2643 = vadd.f32 0.0, %v2642
  %v2644 = vpop.f32.mrf.mxu0
  %2645 = vdwg.mxu0
  %v2646 = vsel %vm240, %v2643, -inf
  %2647 = vmax.xlane.f32.xlu0 %v2646
  %v2648 = vpop.xlane.xlu0 %2647
  %v2649 = vsub.f32 %v2643, %v2648
  %v2650 = vmul.f32 %v2649, 1.442695
  %v2651 = vpow.pop %v2650
  %v2652 = vsel %vm240, %v2651, 0.0
  %2653 = vadd.xlane.f32.xlu0 %v2652
  %v2654 = vpop.xlane.xlu0 %2653
  %v2655 = vrcp.pop %v2654
  %v2656 = vmul.f32 %v2651, %v2655
  %2657 = vrot.lane.b32.xlu0 %v2055, 40
  %v2658 = vpop.permute.xlu0 %2657
  %v2661 = vsel %vm240, %v2656, 0
  %2663 = vmatprep.subr.mxu0 0.0
  %2664 = vmatpush1.msra.mxu0 0.0
  %2665 = vmatprep.subr.mxu0 0.0
  %2666 = vmatpush1.msra.mxu0 0.0
  %2667 = vmatprep.subr.mxu0 0.0
  %2668 = vmatpush1.msra.mxu0 0.0
  %2669 = vmatprep.subr.mxu0 0.0
  %2670 = vmatpush1.msra.mxu0 0.0
  %2671 = vmatprep.subr.mxu0 0.0
  %2672 = vmatpush1.msra.mxu0 0.0
  %2673 = vmatprep.subr.mxu0 0.0
  %2674 = vmatpush1.msra.mxu0 0.0
  %2675 = vmatprep.subr.mxu0 0.0
  %2676 = vmatpush1.msra.mxu0 0.0
  %2677 = vmatprep.subr.mxu0 0.0
  %2678 = vmatpush1.msra.mxu0 0.0
  %2679 = vmatprep.subr.mxu0 0.0
  %2680 = vmatpush1.msra.mxu0 0.0
  %2681 = vmatprep.subr.mxu0 0.0
  %2682 = vmatpush1.msra.mxu0 0.0
  %2683 = vmatprep.subr.mxu0 0.0
  %2684 = vmatpush1.msra.mxu0 0.0
  %2685 = vmatprep.subr.mxu0 0.0
  %2686 = vmatpush1.msra.mxu0 0.0
  %2687 = vmatprep.subr.mxu0 0.0
  %2688 = vmatpush1.msra.mxu0 0.0
  %2689 = vmatprep.subr.mxu0 0.0
  %2690 = vmatpush1.msra.mxu0 0.0
  %2691 = vmatprep.subr.mxu0 0.0
  %2692 = vmatpush1.msra.mxu0 0.0
  %2693 = vmatprep.subr.mxu0 0.0
  %2694 = vmatpush1.msra.mxu0 %v2658
  %2695 = vmatprep.subr.mxu0 0.0
  %2696 = vmatpush2.msra.mxu0 0.0
  %2697 = vmatprep.subr.mxu0 0.0
  %2698 = vmatpush2.msra.mxu0 0.0
  %2699 = vmatprep.subr.mxu0 0.0
  %2700 = vmatpush2.msra.mxu0 0.0
  %2701 = vmatprep.subr.mxu0 0.0
  %2702 = vmatpush2.msra.mxu0 0.0
  %2703 = vmatprep.subr.mxu0 0.0
  %2704 = vmatpush2.msra.mxu0 0.0
  %2705 = vmatprep.subr.mxu0 0.0
  %2706 = vmatpush2.msra.mxu0 0.0
  %2707 = vmatprep.subr.mxu0 0.0
  %2708 = vmatpush2.msra.mxu0 0.0
  %2709 = vmatprep.subr.mxu0 0.0
  %2710 = vmatpush2.msra.mxu0 0.0
  %2711 = vmatprep.subr.mxu0 0.0
  %2712 = vmatpush2.msra.mxu0 0.0
  %2713 = vmatprep.subr.mxu0 0.0
  %2714 = vmatpush2.msra.mxu0 0.0
  %2715 = vmatprep.subr.mxu0 0.0
  %2716 = vmatpush2.msra.mxu0 0.0
  %2717 = vmatprep.subr.mxu0 0.0
  %2718 = vmatpush2.msra.mxu0 0.0
  %2719 = vmatprep.subr.mxu0 0.0
  %2720 = vmatpush2.msra.mxu0 0.0
  %2721 = vmatprep.subr.mxu0 0.0
  %2722 = vmatpush2.msra.mxu0 0.0
  %2723 = vmatprep.subr.mxu0 0.0
  %2724 = vmatpush2.msra.mxu0 0.0
  %2725 = vmatprep.subr.mxu0 0.0
  %2726 = vmatpush2.msra.mxu0 0.0
  %2727 = vmatprep.mubr.f32.mxu0 0.0
  %2728 = vmatmul.mubr.f32.gmra.mxu0 %v2661
  %v2729 = vpop.f32.mrf.mxu0
  %v2730 = vadd.f32 0.0, %v2729
  %v2731 = vpop.f32.mrf.mxu0
  %2732 = vdwg.mxu0
  %2734 = vrot.lane.b32.xlu0 %v2730, 24
  %v2735 = vpop.permute.xlu0 %2734
  %2737 = vst.msk [vmem:[#allocation2] sm:$0xff] %vm914, %v2735
  %2739 = vrot.lane.b32.xlu0 %v2060, 96
  %v2740 = vpop.permute.xlu0 %2739
  %v2741 = vsel %vm240, %v2060, 0
  %v2743 = vsel %vm240, %v2740, 0
  %2745 = vmatprep.subr.mxu0 0.0
  %2746 = vmatpush1.xpose.msra.mxu0 0.0
  %2747 = vmatprep.subr.mxu0 0.0
  %2748 = vmatpush1.xpose.msra.mxu0 0.0
  %2749 = vmatprep.subr.mxu0 0.0
  %2750 = vmatpush1.xpose.msra.mxu0 0.0
  %2751 = vmatprep.subr.mxu0 0.0
  %2752 = vmatpush1.xpose.msra.mxu0 0.0
  %2753 = vmatprep.subr.mxu0 0.0
  %2754 = vmatpush1.xpose.msra.mxu0 0.0
  %2755 = vmatprep.subr.mxu0 0.0
  %2756 = vmatpush1.xpose.msra.mxu0 0.0
  %2757 = vmatprep.subr.mxu0 0.0
  %2758 = vmatpush1.xpose.msra.mxu0 0.0
  %2759 = vmatprep.subr.mxu0 0.0
  %2760 = vmatpush1.xpose.msra.mxu0 0.0
  %2761 = vmatprep.subr.mxu0 0.0
  %2762 = vmatpush1.xpose.msra.mxu0 0.0
  %2763 = vmatprep.subr.mxu0 0.0
  %2764 = vmatpush1.xpose.msra.mxu0 0.0
  %2765 = vmatprep.subr.mxu0 0.0
  %2766 = vmatpush1.xpose.msra.mxu0 0.0
  %2767 = vmatprep.subr.mxu0 0.0
  %2768 = vmatpush1.xpose.msra.mxu0 0.0
  %2769 = vmatprep.subr.mxu0 0.0
  %2770 = vmatpush1.xpose.msra.mxu0 0.0
  %2771 = vmatprep.subr.mxu0 0.0
  %2772 = vmatpush1.xpose.msra.mxu0 0.0
  %2773 = vmatprep.subr.mxu0 0.0
  %2774 = vmatpush1.xpose.msra.mxu0 0.0
  %2775 = vmatprep.subr.mxu0 0.0
  %2776 = vmatpush1.xpose.msra.mxu0 %v2743
  %2777 = vmatprep.subr.mxu0 0.0
  %2778 = vmatpush2.xpose.msra.mxu0 0.0
  %2779 = vmatprep.subr.mxu0 0.0
  %2780 = vmatpush2.xpose.msra.mxu0 0.0
  %2781 = vmatprep.subr.mxu0 0.0
  %2782 = vmatpush2.xpose.msra.mxu0 0.0
  %2783 = vmatprep.subr.mxu0 0.0
  %2784 = vmatpush2.xpose.msra.mxu0 0.0
  %2785 = vmatprep.subr.mxu0 0.0
  %2786 = vmatpush2.xpose.msra.mxu0 0.0
  %2787 = vmatprep.subr.mxu0 0.0
  %2788 = vmatpush2.xpose.msra.mxu0 0.0
  %2789 = vmatprep.subr.mxu0 0.0
  %2790 = vmatpush2.xpose.msra.mxu0 0.0
  %2791 = vmatprep.subr.mxu0 0.0
  %2792 = vmatpush2.xpose.msra.mxu0 0.0
  %2793 = vmatprep.subr.mxu0 0.0
  %2794 = vmatpush2.xpose.msra.mxu0 0.0
  %2795 = vmatprep.subr.mxu0 0.0
  %2796 = vmatpush2.xpose.msra.mxu0 0.0
  %2797 = vmatprep.subr.mxu0 0.0
  %2798 = vmatpush2.xpose.msra.mxu0 0.0
  %2799 = vmatprep.subr.mxu0 0.0
  %2800 = vmatpush2.xpose.msra.mxu0 0.0
  %2801 = vmatprep.subr.mxu0 0.0
  %2802 = vmatpush2.xpose.msra.mxu0 0.0
  %2803 = vmatprep.subr.mxu0 0.0
  %2804 = vmatpush2.xpose.msra.mxu0 0.0
  %2805 = vmatprep.subr.mxu0 0.0
  %2806 = vmatpush2.xpose.msra.mxu0 0.0
  %2807 = vmatprep.subr.mxu0 0.0
  %2808 = vmatpush2.xpose.msra.mxu0 0.0
  %2809 = vmatprep.mubr.f32.mxu0 0.0
  %2810 = vmatmul.mubr.f32.gmra.mxu0 %v2741
  %v2811 = vpop.f32.mrf.mxu0
  %v2812 = vadd.f32 0.0, %v2811
  %v2813 = vpop.f32.mrf.mxu0
  %2814 = vdwg.mxu0
  %v2815 = vsel %vm240, %v2812, -inf
  %2816 = vmax.xlane.f32.xlu0 %v2815
  %v2817 = vpop.xlane.xlu0 %2816
  %v2818 = vsub.f32 %v2812, %v2817
  %v2819 = vmul.f32 %v2818, 1.442695
  %v2820 = vpow.pop %v2819
  %v2821 = vsel %vm240, %v2820, 0.0
  %2822 = vadd.xlane.f32.xlu0 %v2821
  %v2823 = vpop.xlane.xlu0 %2822
  %v2824 = vrcp.pop %v2823
  %v2825 = vmul.f32 %v2820, %v2824
  %2826 = vrot.lane.b32.xlu0 %v2060, 64
  %v2827 = vpop.permute.xlu0 %2826
  %v2830 = vsel %vm240, %v2825, 0
  %2832 = vmatprep.subr.mxu0 0.0
  %2833 = vmatpush1.msra.mxu0 0.0
  %2834 = vmatprep.subr.mxu0 0.0
  %2835 = vmatpush1.msra.mxu0 0.0
  %2836 = vmatprep.subr.mxu0 0.0
  %2837 = vmatpush1.msra.mxu0 0.0
  %2838 = vmatprep.subr.mxu0 0.0
  %2839 = vmatpush1.msra.mxu0 0.0
  %2840 = vmatprep.subr.mxu0 0.0
  %2841 = vmatpush1.msra.mxu0 0.0
  %2842 = vmatprep.subr.mxu0 0.0
  %2843 = vmatpush1.msra.mxu0 0.0
  %2844 = vmatprep.subr.mxu0 0.0
  %2845 = vmatpush1.msra.mxu0 0.0
  %2846 = vmatprep.subr.mxu0 0.0
  %2847 = vmatpush1.msra.mxu0 0.0
  %2848 = vmatprep.subr.mxu0 0.0
  %2849 = vmatpush1.msra.mxu0 0.0
  %2850 = vmatprep.subr.mxu0 0.0
  %2851 = vmatpush1.msra.mxu0 0.0
  %2852 = vmatprep.subr.mxu0 0.0
  %2853 = vmatpush1.msra.mxu0 0.0
  %2854 = vmatprep.subr.mxu0 0.0
  %2855 = vmatpush1.msra.mxu0 0.0
  %2856 = vmatprep.subr.mxu0 0.0
  %2857 = vmatpush1.msra.mxu0 0.0
  %2858 = vmatprep.subr.mxu0 0.0
  %2859 = vmatpush1.msra.mxu0 0.0
  %2860 = vmatprep.subr.mxu0 0.0
  %2861 = vmatpush1.msra.mxu0 0.0
  %2862 = vmatprep.subr.mxu0 0.0
  %2863 = vmatpush1.msra.mxu0 %v2827
  %2864 = vmatprep.subr.mxu0 0.0
  %2865 = vmatpush2.msra.mxu0 0.0
  %2866 = vmatprep.subr.mxu0 0.0
  %2867 = vmatpush2.msra.mxu0 0.0
  %2868 = vmatprep.subr.mxu0 0.0
  %2869 = vmatpush2.msra.mxu0 0.0
  %2870 = vmatprep.subr.mxu0 0.0
  %2871 = vmatpush2.msra.mxu0 0.0
  %2872 = vmatprep.subr.mxu0 0.0
  %2873 = vmatpush2.msra.mxu0 0.0
  %2874 = vmatprep.subr.mxu0 0.0
  %2875 = vmatpush2.msra.mxu0 0.0
  %2876 = vmatprep.subr.mxu0 0.0
  %2877 = vmatpush2.msra.mxu0 0.0
  %2878 = vmatprep.subr.mxu0 0.0
  %2879 = vmatpush2.msra.mxu0 0.0
  %2880 = vmatprep.subr.mxu0 0.0
  %2881 = vmatpush2.msra.mxu0 0.0
  %2882 = vmatprep.subr.mxu0 0.0
  %2883 = vmatpush2.msra.mxu0 0.0
  %2884 = vmatprep.subr.mxu0 0.0
  %2885 = vmatpush2.msra.mxu0 0.0
  %2886 = vmatprep.subr.mxu0 0.0
  %2887 = vmatpush2.msra.mxu0 0.0
  %2888 = vmatprep.subr.mxu0 0.0
  %2889 = vmatpush2.msra.mxu0 0.0
  %2890 = vmatprep.subr.mxu0 0.0
  %2891 = vmatpush2.msra.mxu0 0.0
  %2892 = vmatprep.subr.mxu0 0.0
  %2893 = vmatpush2.msra.mxu0 0.0
  %2894 = vmatprep.subr.mxu0 0.0
  %2895 = vmatpush2.msra.mxu0 0.0
  %2896 = vmatprep.mubr.f32.mxu0 0.0
  %2897 = vmatmul.mubr.f32.gmra.mxu0 %v2830
  %v2898 = vpop.f32.mrf.mxu0
  %v2899 = vadd.f32 0.0, %v2898
  %v2900 = vpop.f32.mrf.mxu0
  %2901 = vdwg.mxu0
  %2902 = vst.msk [vmem:[#allocation2 + $0x8] sm:$0xff] %vm240, %v2899
  %2903 = vrot.lane.b32.xlu0 %v2060, 120
  %v2904 = vpop.permute.xlu0 %2903
  %2905 = vrot.lane.b32.xlu0 %v2060, 88
  %v2906 = vpop.permute.xlu0 %2905
  %v2907 = vsel %vm240, %v2904, 0
  %v2909 = vsel %vm240, %v2906, 0
  %2911 = vmatprep.subr.mxu0 0.0
  %2912 = vmatpush1.xpose.msra.mxu0 0.0
  %2913 = vmatprep.subr.mxu0 0.0
  %2914 = vmatpush1.xpose.msra.mxu0 0.0
  %2915 = vmatprep.subr.mxu0 0.0
  %2916 = vmatpush1.xpose.msra.mxu0 0.0
  %2917 = vmatprep.subr.mxu0 0.0
  %2918 = vmatpush1.xpose.msra.mxu0 0.0
  %2919 = vmatprep.subr.mxu0 0.0
  %2920 = vmatpush1.xpose.msra.mxu0 0.0
  %2921 = vmatprep.subr.mxu0 0.0
  %2922 = vmatpush1.xpose.msra.mxu0 0.0
  %2923 = vmatprep.subr.mxu0 0.0
  %2924 = vmatpush1.xpose.msra.mxu0 0.0
  %2925 = vmatprep.subr.mxu0 0.0
  %2926 = vmatpush1.xpose.msra.mxu0 0.0
  %2927 = vmatprep.subr.mxu0 0.0
  %2928 = vmatpush1.xpose.msra.mxu0 0.0
  %2929 = vmatprep.subr.mxu0 0.0
  %2930 = vmatpush1.xpose.msra.mxu0 0.0
  %2931 = vmatprep.subr.mxu0 0.0
  %2932 = vmatpush1.xpose.msra.mxu0 0.0
  %2933 = vmatprep.subr.mxu0 0.0
  %2934 = vmatpush1.xpose.msra.mxu0 0.0
  %2935 = vmatprep.subr.mxu0 0.0
  %2936 = vmatpush1.xpose.msra.mxu0 0.0
  %2937 = vmatprep.subr.mxu0 0.0
  %2938 = vmatpush1.xpose.msra.mxu0 0.0
  %2939 = vmatprep.subr.mxu0 0.0
  %2940 = vmatpush1.xpose.msra.mxu0 0.0
  %2941 = vmatprep.subr.mxu0 0.0
  %2942 = vmatpush1.xpose.msra.mxu0 %v2909
  %2943 = vmatprep.subr.mxu0 0.0
  %2944 = vmatpush2.xpose.msra.mxu0 0.0
  %2945 = vmatprep.subr.mxu0 0.0
  %2946 = vmatpush2.xpose.msra.mxu0 0.0
  %2947 = vmatprep.subr.mxu0 0.0
  %2948 = vmatpush2.xpose.msra.mxu0 0.0
  %2949 = vmatprep.subr.mxu0 0.0
  %2950 = vmatpush2.xpose.msra.mxu0 0.0
  %2951 = vmatprep.subr.mxu0 0.0
  %2952 = vmatpush2.xpose.msra.mxu0 0.0
  %2953 = vmatprep.subr.mxu0 0.0
  %2954 = vmatpush2.xpose.msra.mxu0 0.0
  %2955 = vmatprep.subr.mxu0 0.0
  %2956 = vmatpush2.xpose.msra.mxu0 0.0
  %2957 = vmatprep.subr.mxu0 0.0
  %2958 = vmatpush2.xpose.msra.mxu0 0.0
  %2959 = vmatprep.subr.mxu0 0.0
  %2960 = vmatpush2.xpose.msra.mxu0 0.0
  %2961 = vmatprep.subr.mxu0 0.0
  %2962 = vmatpush2.xpose.msra.mxu0 0.0
  %2963 = vmatprep.subr.mxu0 0.0
  %2964 = vmatpush2.xpose.msra.mxu0 0.0
  %2965 = vmatprep.subr.mxu0 0.0
  %2966 = vmatpush2.xpose.msra.mxu0 0.0
  %2967 = vmatprep.subr.mxu0 0.0
  %2968 = vmatpush2.xpose.msra.mxu0 0.0
  %2969 = vmatprep.subr.mxu0 0.0
  %2970 = vmatpush2.xpose.msra.mxu0 0.0
  %2971 = vmatprep.subr.mxu0 0.0
  %2972 = vmatpush2.xpose.msra.mxu0 0.0
  %2973 = vmatprep.subr.mxu0 0.0
  %2974 = vmatpush2.xpose.msra.mxu0 0.0
  %2975 = vmatprep.mubr.f32.mxu0 0.0
  %2976 = vmatmul.mubr.f32.gmra.mxu0 %v2907
  %v2977 = vpop.f32.mrf.mxu0
  %v2978 = vadd.f32 0.0, %v2977
  %v2979 = vpop.f32.mrf.mxu0
  %2980 = vdwg.mxu0
  %v2981 = vsel %vm240, %v2978, -inf
  %2982 = vmax.xlane.f32.xlu0 %v2981
  %v2983 = vpop.xlane.xlu0 %2982
  %v2984 = vsub.f32 %v2978, %v2983
  %v2985 = vmul.f32 %v2984, 1.442695
  %v2986 = vpow.pop %v2985
  %v2987 = vsel %vm240, %v2986, 0.0
  %2988 = vadd.xlane.f32.xlu0 %v2987
  %v2989 = vpop.xlane.xlu0 %2988
  %v2990 = vrcp.pop %v2989
  %v2991 = vmul.f32 %v2986, %v2990
  %2992 = vrot.lane.b32.xlu0 %v2060, 56
  %v2993 = vpop.permute.xlu0 %2992
  %v2996 = vsel %vm240, %v2991, 0
  %2998 = vmatprep.subr.mxu0 0.0
  %2999 = vmatpush1.msra.mxu0 0.0
  %3000 = vmatprep.subr.mxu0 0.0
  %3001 = vmatpush1.msra.mxu0 0.0
  %3002 = vmatprep.subr.mxu0 0.0
  %3003 = vmatpush1.msra.mxu0 0.0
  %3004 = vmatprep.subr.mxu0 0.0
  %3005 = vmatpush1.msra.mxu0 0.0
  %3006 = vmatprep.subr.mxu0 0.0
  %3007 = vmatpush1.msra.mxu0 0.0
  %3008 = vmatprep.subr.mxu0 0.0
  %3009 = vmatpush1.msra.mxu0 0.0
  %3010 = vmatprep.subr.mxu0 0.0
  %3011 = vmatpush1.msra.mxu0 0.0
  %3012 = vmatprep.subr.mxu0 0.0
  %3013 = vmatpush1.msra.mxu0 0.0
  %3014 = vmatprep.subr.mxu0 0.0
  %3015 = vmatpush1.msra.mxu0 0.0
  %3016 = vmatprep.subr.mxu0 0.0
  %3017 = vmatpush1.msra.mxu0 0.0
  %3018 = vmatprep.subr.mxu0 0.0
  %3019 = vmatpush1.msra.mxu0 0.0
  %3020 = vmatprep.subr.mxu0 0.0
  %3021 = vmatpush1.msra.mxu0 0.0
  %3022 = vmatprep.subr.mxu0 0.0
  %3023 = vmatpush1.msra.mxu0 0.0
  %3024 = vmatprep.subr.mxu0 0.0
  %3025 = vmatpush1.msra.mxu0 0.0
  %3026 = vmatprep.subr.mxu0 0.0
  %3027 = vmatpush1.msra.mxu0 0.0
  %3028 = vmatprep.subr.mxu0 0.0
  %3029 = vmatpush1.msra.mxu0 %v2993
  %3030 = vmatprep.subr.mxu0 0.0
  %3031 = vmatpush2.msra.mxu0 0.0
  %3032 = vmatprep.subr.mxu0 0.0
  %3033 = vmatpush2.msra.mxu0 0.0
  %3034 = vmatprep.subr.mxu0 0.0
  %3035 = vmatpush2.msra.mxu0 0.0
  %3036 = vmatprep.subr.mxu0 0.0
  %3037 = vmatpush2.msra.mxu0 0.0
  %3038 = vmatprep.subr.mxu0 0.0
  %3039 = vmatpush2.msra.mxu0 0.0
  %3040 = vmatprep.subr.mxu0 0.0
  %3041 = vmatpush2.msra.mxu0 0.0
  %3042 = vmatprep.subr.mxu0 0.0
  %3043 = vmatpush2.msra.mxu0 0.0
  %3044 = vmatprep.subr.mxu0 0.0
  %3045 = vmatpush2.msra.mxu0 0.0
  %3046 = vmatprep.subr.mxu0 0.0
  %3047 = vmatpush2.msra.mxu0 0.0
  %3048 = vmatprep.subr.mxu0 0.0
  %3049 = vmatpush2.msra.mxu0 0.0
  %3050 = vmatprep.subr.mxu0 0.0
  %3051 = vmatpush2.msra.mxu0 0.0
  %3052 = vmatprep.subr.mxu0 0.0
  %3053 = vmatpush2.msra.mxu0 0.0
  %3054 = vmatprep.subr.mxu0 0.0
  %3055 = vmatpush2.msra.mxu0 0.0
  %3056 = vmatprep.subr.mxu0 0.0
  %3057 = vmatpush2.msra.mxu0 0.0
  %3058 = vmatprep.subr.mxu0 0.0
  %3059 = vmatpush2.msra.mxu0 0.0
  %3060 = vmatprep.subr.mxu0 0.0
  %3061 = vmatpush2.msra.mxu0 0.0
  %3062 = vmatprep.mubr.f32.mxu0 0.0
  %3063 = vmatmul.mubr.f32.gmra.mxu0 %v2996
  %v3064 = vpop.f32.mrf.mxu0
  %v3065 = vadd.f32 0.0, %v3064
  %v3066 = vpop.f32.mrf.mxu0
  %3067 = vdwg.mxu0
  %3069 = vrot.lane.b32.xlu0 %v3065, 8
  %v3070 = vpop.permute.xlu0 %3069
  %3072 = vst.msk [vmem:[#allocation2 + $0x8] sm:$0xff] %vm572, %v3070
  %3073 = vrot.lane.b32.xlu0 %v2060, 112
  %v3074 = vpop.permute.xlu0 %3073
  %3075 = vrot.lane.b32.xlu0 %v2060, 80
  %v3076 = vpop.permute.xlu0 %3075
  %v3077 = vsel %vm240, %v3074, 0
  %v3079 = vsel %vm240, %v3076, 0
  %3081 = vmatprep.subr.mxu0 0.0
  %3082 = vmatpush1.xpose.msra.mxu0 0.0
  %3083 = vmatprep.subr.mxu0 0.0
  %3084 = vmatpush1.xpose.msra.mxu0 0.0
  %3085 = vmatprep.subr.mxu0 0.0
  %3086 = vmatpush1.xpose.msra.mxu0 0.0
  %3087 = vmatprep.subr.mxu0 0.0
  %3088 = vmatpush1.xpose.msra.mxu0 0.0
  %3089 = vmatprep.subr.mxu0 0.0
  %3090 = vmatpush1.xpose.msra.mxu0 0.0
  %3091 = vmatprep.subr.mxu0 0.0
  %3092 = vmatpush1.xpose.msra.mxu0 0.0
  %3093 = vmatprep.subr.mxu0 0.0
  %3094 = vmatpush1.xpose.msra.mxu0 0.0
  %3095 = vmatprep.subr.mxu0 0.0
  %3096 = vmatpush1.xpose.msra.mxu0 0.0
  %3097 = vmatprep.subr.mxu0 0.0
  %3098 = vmatpush1.xpose.msra.mxu0 0.0
  %3099 = vmatprep.subr.mxu0 0.0
  %3100 = vmatpush1.xpose.msra.mxu0 0.0
  %3101 = vmatprep.subr.mxu0 0.0
  %3102 = vmatpush1.xpose.msra.mxu0 0.0
  %3103 = vmatprep.subr.mxu0 0.0
  %3104 = vmatpush1.xpose.msra.mxu0 0.0
  %3105 = vmatprep.subr.mxu0 0.0
  %3106 = vmatpush1.xpose.msra.mxu0 0.0
  %3107 = vmatprep.subr.mxu0 0.0
  %3108 = vmatpush1.xpose.msra.mxu0 0.0
  %3109 = vmatprep.subr.mxu0 0.0
  %3110 = vmatpush1.xpose.msra.mxu0 0.0
  %3111 = vmatprep.subr.mxu0 0.0
  %3112 = vmatpush1.xpose.msra.mxu0 %v3079
  %3113 = vmatprep.subr.mxu0 0.0
  %3114 = vmatpush2.xpose.msra.mxu0 0.0
  %3115 = vmatprep.subr.mxu0 0.0
  %3116 = vmatpush2.xpose.msra.mxu0 0.0
  %3117 = vmatprep.subr.mxu0 0.0
  %3118 = vmatpush2.xpose.msra.mxu0 0.0
  %3119 = vmatprep.subr.mxu0 0.0
  %3120 = vmatpush2.xpose.msra.mxu0 0.0
  %3121 = vmatprep.subr.mxu0 0.0
  %3122 = vmatpush2.xpose.msra.mxu0 0.0
  %3123 = vmatprep.subr.mxu0 0.0
  %3124 = vmatpush2.xpose.msra.mxu0 0.0
  %3125 = vmatprep.subr.mxu0 0.0
  %3126 = vmatpush2.xpose.msra.mxu0 0.0
  %3127 = vmatprep.subr.mxu0 0.0
  %3128 = vmatpush2.xpose.msra.mxu0 0.0
  %3129 = vmatprep.subr.mxu0 0.0
  %3130 = vmatpush2.xpose.msra.mxu0 0.0
  %3131 = vmatprep.subr.mxu0 0.0
  %3132 = vmatpush2.xpose.msra.mxu0 0.0
  %3133 = vmatprep.subr.mxu0 0.0
  %3134 = vmatpush2.xpose.msra.mxu0 0.0
  %3135 = vmatprep.subr.mxu0 0.0
  %3136 = vmatpush2.xpose.msra.mxu0 0.0
  %3137 = vmatprep.subr.mxu0 0.0
  %3138 = vmatpush2.xpose.msra.mxu0 0.0
  %3139 = vmatprep.subr.mxu0 0.0
  %3140 = vmatpush2.xpose.msra.mxu0 0.0
  %3141 = vmatprep.subr.mxu0 0.0
  %3142 = vmatpush2.xpose.msra.mxu0 0.0
  %3143 = vmatprep.subr.mxu0 0.0
  %3144 = vmatpush2.xpose.msra.mxu0 0.0
  %3145 = vmatprep.mubr.f32.mxu0 0.0
  %3146 = vmatmul.mubr.f32.gmra.mxu0 %v3077
  %v3147 = vpop.f32.mrf.mxu0
  %v3148 = vadd.f32 0.0, %v3147
  %v3149 = vpop.f32.mrf.mxu0
  %3150 = vdwg.mxu0
  %v3151 = vsel %vm240, %v3148, -inf
  %3152 = vmax.xlane.f32.xlu0 %v3151
  %v3153 = vpop.xlane.xlu0 %3152
  %v3154 = vsub.f32 %v3148, %v3153
  %v3155 = vmul.f32 %v3154, 1.442695
  %v3156 = vpow.pop %v3155
  %v3157 = vsel %vm240, %v3156, 0.0
  %3158 = vadd.xlane.f32.xlu0 %v3157
  %v3159 = vpop.xlane.xlu0 %3158
  %v3160 = vrcp.pop %v3159
  %v3161 = vmul.f32 %v3156, %v3160
  %3162 = vrot.lane.b32.xlu0 %v2060, 48
  %v3163 = vpop.permute.xlu0 %3162
  %v3166 = vsel %vm240, %v3161, 0
  %3168 = vmatprep.subr.mxu0 0.0
  %3169 = vmatpush1.msra.mxu0 0.0
  %3170 = vmatprep.subr.mxu0 0.0
  %3171 = vmatpush1.msra.mxu0 0.0
  %3172 = vmatprep.subr.mxu0 0.0
  %3173 = vmatpush1.msra.mxu0 0.0
  %3174 = vmatprep.subr.mxu0 0.0
  %3175 = vmatpush1.msra.mxu0 0.0
  %3176 = vmatprep.subr.mxu0 0.0
  %3177 = vmatpush1.msra.mxu0 0.0
  %3178 = vmatprep.subr.mxu0 0.0
  %3179 = vmatpush1.msra.mxu0 0.0
  %3180 = vmatprep.subr.mxu0 0.0
  %3181 = vmatpush1.msra.mxu0 0.0
  %3182 = vmatprep.subr.mxu0 0.0
  %3183 = vmatpush1.msra.mxu0 0.0
  %3184 = vmatprep.subr.mxu0 0.0
  %3185 = vmatpush1.msra.mxu0 0.0
  %3186 = vmatprep.subr.mxu0 0.0
  %3187 = vmatpush1.msra.mxu0 0.0
  %3188 = vmatprep.subr.mxu0 0.0
  %3189 = vmatpush1.msra.mxu0 0.0
  %3190 = vmatprep.subr.mxu0 0.0
  %3191 = vmatpush1.msra.mxu0 0.0
  %3192 = vmatprep.subr.mxu0 0.0
  %3193 = vmatpush1.msra.mxu0 0.0
  %3194 = vmatprep.subr.mxu0 0.0
  %3195 = vmatpush1.msra.mxu0 0.0
  %3196 = vmatprep.subr.mxu0 0.0
  %3197 = vmatpush1.msra.mxu0 0.0
  %3198 = vmatprep.subr.mxu0 0.0
  %3199 = vmatpush1.msra.mxu0 %v3163
  %3200 = vmatprep.subr.mxu0 0.0
  %3201 = vmatpush2.msra.mxu0 0.0
  %3202 = vmatprep.subr.mxu0 0.0
  %3203 = vmatpush2.msra.mxu0 0.0
  %3204 = vmatprep.subr.mxu0 0.0
  %3205 = vmatpush2.msra.mxu0 0.0
  %3206 = vmatprep.subr.mxu0 0.0
  %3207 = vmatpush2.msra.mxu0 0.0
  %3208 = vmatprep.subr.mxu0 0.0
  %3209 = vmatpush2.msra.mxu0 0.0
  %3210 = vmatprep.subr.mxu0 0.0
  %3211 = vmatpush2.msra.mxu0 0.0
  %3212 = vmatprep.subr.mxu0 0.0
  %3213 = vmatpush2.msra.mxu0 0.0
  %3214 = vmatprep.subr.mxu0 0.0
  %3215 = vmatpush2.msra.mxu0 0.0
  %3216 = vmatprep.subr.mxu0 0.0
  %3217 = vmatpush2.msra.mxu0 0.0
  %3218 = vmatprep.subr.mxu0 0.0
  %3219 = vmatpush2.msra.mxu0 0.0
  %3220 = vmatprep.subr.mxu0 0.0
  %3221 = vmatpush2.msra.mxu0 0.0
  %3222 = vmatprep.subr.mxu0 0.0
  %3223 = vmatpush2.msra.mxu0 0.0
  %3224 = vmatprep.subr.mxu0 0.0
  %3225 = vmatpush2.msra.mxu0 0.0
  %3226 = vmatprep.subr.mxu0 0.0
  %3227 = vmatpush2.msra.mxu0 0.0
  %3228 = vmatprep.subr.mxu0 0.0
  %3229 = vmatpush2.msra.mxu0 0.0
  %3230 = vmatprep.subr.mxu0 0.0
  %3231 = vmatpush2.msra.mxu0 0.0
  %3232 = vmatprep.mubr.f32.mxu0 0.0
  %3233 = vmatmul.mubr.f32.gmra.mxu0 %v3166
  %v3234 = vpop.f32.mrf.mxu0
  %v3235 = vadd.f32 0.0, %v3234
  %v3236 = vpop.f32.mrf.mxu0
  %3237 = vdwg.mxu0
  %3239 = vrot.lane.b32.xlu0 %v3235, 16
  %v3240 = vpop.permute.xlu0 %3239
  %3242 = vst.msk [vmem:[#allocation2 + $0x8] sm:$0xff] %vm743, %v3240
  %3243 = vrot.lane.b32.xlu0 %v2060, 104
  %v3244 = vpop.permute.xlu0 %3243
  %3245 = vrot.lane.b32.xlu0 %v2060, 72
  %v3246 = vpop.permute.xlu0 %3245
  %v3247 = vsel %vm240, %v3244, 0
  %v3249 = vsel %vm240, %v3246, 0
  %3251 = vmatprep.subr.mxu0 0.0
  %3252 = vmatpush1.xpose.msra.mxu0 0.0
  %3253 = vmatprep.subr.mxu0 0.0
  %3254 = vmatpush1.xpose.msra.mxu0 0.0
  %3255 = vmatprep.subr.mxu0 0.0
  %3256 = vmatpush1.xpose.msra.mxu0 0.0
  %3257 = vmatprep.subr.mxu0 0.0
  %3258 = vmatpush1.xpose.msra.mxu0 0.0
  %3259 = vmatprep.subr.mxu0 0.0
  %3260 = vmatpush1.xpose.msra.mxu0 0.0
  %3261 = vmatprep.subr.mxu0 0.0
  %3262 = vmatpush1.xpose.msra.mxu0 0.0
  %3263 = vmatprep.subr.mxu0 0.0
  %3264 = vmatpush1.xpose.msra.mxu0 0.0
  %3265 = vmatprep.subr.mxu0 0.0
  %3266 = vmatpush1.xpose.msra.mxu0 0.0
  %3267 = vmatprep.subr.mxu0 0.0
  %3268 = vmatpush1.xpose.msra.mxu0 0.0
  %3269 = vmatprep.subr.mxu0 0.0
  %3270 = vmatpush1.xpose.msra.mxu0 0.0
  %3271 = vmatprep.subr.mxu0 0.0
  %3272 = vmatpush1.xpose.msra.mxu0 0.0
  %3273 = vmatprep.subr.mxu0 0.0
  %3274 = vmatpush1.xpose.msra.mxu0 0.0
  %3275 = vmatprep.subr.mxu0 0.0
  %3276 = vmatpush1.xpose.msra.mxu0 0.0
  %3277 = vmatprep.subr.mxu0 0.0
  %3278 = vmatpush1.xpose.msra.mxu0 0.0
  %3279 = vmatprep.subr.mxu0 0.0
  %3280 = vmatpush1.xpose.msra.mxu0 0.0
  %3281 = vmatprep.subr.mxu0 0.0
  %3282 = vmatpush1.xpose.msra.mxu0 %v3249
  %3283 = vmatprep.subr.mxu0 0.0
  %3284 = vmatpush2.xpose.msra.mxu0 0.0
  %3285 = vmatprep.subr.mxu0 0.0
  %3286 = vmatpush2.xpose.msra.mxu0 0.0
  %3287 = vmatprep.subr.mxu0 0.0
  %3288 = vmatpush2.xpose.msra.mxu0 0.0
  %3289 = vmatprep.subr.mxu0 0.0
  %3290 = vmatpush2.xpose.msra.mxu0 0.0
  %3291 = vmatprep.subr.mxu0 0.0
  %3292 = vmatpush2.xpose.msra.mxu0 0.0
  %3293 = vmatprep.subr.mxu0 0.0
  %3294 = vmatpush2.xpose.msra.mxu0 0.0
  %3295 = vmatprep.subr.mxu0 0.0
  %3296 = vmatpush2.xpose.msra.mxu0 0.0
  %3297 = vmatprep.subr.mxu0 0.0
  %3298 = vmatpush2.xpose.msra.mxu0 0.0
  %3299 = vmatprep.subr.mxu0 0.0
  %3300 = vmatpush2.xpose.msra.mxu0 0.0
  %3301 = vmatprep.subr.mxu0 0.0
  %3302 = vmatpush2.xpose.msra.mxu0 0.0
  %3303 = vmatprep.subr.mxu0 0.0
  %3304 = vmatpush2.xpose.msra.mxu0 0.0
  %3305 = vmatprep.subr.mxu0 0.0
  %3306 = vmatpush2.xpose.msra.mxu0 0.0
  %3307 = vmatprep.subr.mxu0 0.0
  %3308 = vmatpush2.xpose.msra.mxu0 0.0
  %3309 = vmatprep.subr.mxu0 0.0
  %3310 = vmatpush2.xpose.msra.mxu0 0.0
  %3311 = vmatprep.subr.mxu0 0.0
  %3312 = vmatpush2.xpose.msra.mxu0 0.0
  %3313 = vmatprep.subr.mxu0 0.0
  %3314 = vmatpush2.xpose.msra.mxu0 0.0
  %3315 = vmatprep.mubr.f32.mxu0 0.0
  %3316 = vmatmul.mubr.f32.gmra.mxu0 %v3247
  %v3317 = vpop.f32.mrf.mxu0
  %v3318 = vadd.f32 0.0, %v3317
  %v3319 = vpop.f32.mrf.mxu0
  %3320 = vdwg.mxu0
  %v3321 = vsel %vm240, %v3318, -inf
  %3322 = vmax.xlane.f32.xlu0 %v3321
  %v3323 = vpop.xlane.xlu0 %3322
  %v3324 = vsub.f32 %v3318, %v3323
  %v3325 = vmul.f32 %v3324, 1.442695
  %v3326 = vpow.pop %v3325
  %v3327 = vsel %vm240, %v3326, 0.0
  %3328 = vadd.xlane.f32.xlu0 %v3327
  %v3329 = vpop.xlane.xlu0 %3328
  %v3330 = vrcp.pop %v3329
  %v3331 = vmul.f32 %v3326, %v3330
  %3332 = vrot.lane.b32.xlu0 %v2060, 40
  %v3333 = vpop.permute.xlu0 %3332
  %v3336 = vsel %vm240, %v3331, 0
  %3338 = vmatprep.subr.mxu0 0.0
  %3339 = vmatpush1.msra.mxu0 0.0
  %3340 = vmatprep.subr.mxu0 0.0
  %3341 = vmatpush1.msra.mxu0 0.0
  %3342 = vmatprep.subr.mxu0 0.0
  %3343 = vmatpush1.msra.mxu0 0.0
  %3344 = vmatprep.subr.mxu0 0.0
  %3345 = vmatpush1.msra.mxu0 0.0
  %3346 = vmatprep.subr.mxu0 0.0
  %3347 = vmatpush1.msra.mxu0 0.0
  %3348 = vmatprep.subr.mxu0 0.0
  %3349 = vmatpush1.msra.mxu0 0.0
  %3350 = vmatprep.subr.mxu0 0.0
  %3351 = vmatpush1.msra.mxu0 0.0
  %3352 = vmatprep.subr.mxu0 0.0
  %3353 = vmatpush1.msra.mxu0 0.0
  %3354 = vmatprep.subr.mxu0 0.0
  %3355 = vmatpush1.msra.mxu0 0.0
  %3356 = vmatprep.subr.mxu0 0.0
  %3357 = vmatpush1.msra.mxu0 0.0
  %3358 = vmatprep.subr.mxu0 0.0
  %3359 = vmatpush1.msra.mxu0 0.0
  %3360 = vmatprep.subr.mxu0 0.0
  %3361 = vmatpush1.msra.mxu0 0.0
  %3362 = vmatprep.subr.mxu0 0.0
  %3363 = vmatpush1.msra.mxu0 0.0
  %3364 = vmatprep.subr.mxu0 0.0
  %3365 = vmatpush1.msra.mxu0 0.0
  %3366 = vmatprep.subr.mxu0 0.0
  %3367 = vmatpush1.msra.mxu0 0.0
  %3368 = vmatprep.subr.mxu0 0.0
  %3369 = vmatpush1.msra.mxu0 %v3333
  %3370 = vmatprep.subr.mxu0 0.0
  %3371 = vmatpush2.msra.mxu0 0.0
  %3372 = vmatprep.subr.mxu0 0.0
  %3373 = vmatpush2.msra.mxu0 0.0
  %3374 = vmatprep.subr.mxu0 0.0
  %3375 = vmatpush2.msra.mxu0 0.0
  %3376 = vmatprep.subr.mxu0 0.0
  %3377 = vmatpush2.msra.mxu0 0.0
  %3378 = vmatprep.subr.mxu0 0.0
  %3379 = vmatpush2.msra.mxu0 0.0
  %3380 = vmatprep.subr.mxu0 0.0
  %3381 = vmatpush2.msra.mxu0 0.0
  %3382 = vmatprep.subr.mxu0 0.0
  %3383 = vmatpush2.msra.mxu0 0.0
  %3384 = vmatprep.subr.mxu0 0.0
  %3385 = vmatpush2.msra.mxu0 0.0
  %3386 = vmatprep.subr.mxu0 0.0
  %3387 = vmatpush2.msra.mxu0 0.0
  %3388 = vmatprep.subr.mxu0 0.0
  %3389 = vmatpush2.msra.mxu0 0.0
  %3390 = vmatprep.subr.mxu0 0.0
  %3391 = vmatpush2.msra.mxu0 0.0
  %3392 = vmatprep.subr.mxu0 0.0
  %3393 = vmatpush2.msra.mxu0 0.0
  %3394 = vmatprep.subr.mxu0 0.0
  %3395 = vmatpush2.msra.mxu0 0.0
  %3396 = vmatprep.subr.mxu0 0.0
  %3397 = vmatpush2.msra.mxu0 0.0
  %3398 = vmatprep.subr.mxu0 0.0
  %3399 = vmatpush2.msra.mxu0 0.0
  %3400 = vmatprep.subr.mxu0 0.0
  %3401 = vmatpush2.msra.mxu0 0.0
  %3402 = vmatprep.mubr.f32.mxu0 0.0
  %3403 = vmatmul.mubr.f32.gmra.mxu0 %v3336
  %v3404 = vpop.f32.mrf.mxu0
  %v3405 = vadd.f32 0.0, %v3404
  %v3406 = vpop.f32.mrf.mxu0
  %3407 = vdwg.mxu0
  %3409 = vrot.lane.b32.xlu0 %v3405, 24
  %v3410 = vpop.permute.xlu0 %3409
  %3412 = vst.msk [vmem:[#allocation2 + $0x8] sm:$0xff] %vm914, %v3410
  %v3413 = vld [vmem:[#allocation2] sm:$0xff]
  %v3414 = vld [vmem:[#allocation2 + $0x8] sm:$0xff]
  %s3415 = scalar_lea.vmem %s5, 32
  %v3416 = vld [vmem:[%s3415] sm:$0xff]
  %v3417 = vld [vmem:[%s3415 + $0x8] sm:$0xff]
  %v3418 = vld [vmem:[%s3415 + $0x10] sm:$0xff]
  %v3419 = vld [vmem:[%s3415 + $0x18] sm:$0xff]
  %s3420 = scalar_lea.vmem %s6, 1
  %v3421 = vld [vmem:[%s3420] sm:$0x1]
  %v3423 = vlaneseq
  %v3424 = vshrl.u32 %v3423, 7
  %v3425 = vsub.s32 0, %v3424
  %v3426 = vrot.slane %v3421, %v3425
  %v3429 = vsel %vm155, %v3413, 0
  %v3432 = vsel %vm155, %v3414, 0
  %3434 = vmatprep.subr.mxu0 0.0
  %3435 = vmatpush1.msra.mxu0 0.0
  %3436 = vmatprep.subr.mxu0 0.0
  %3437 = vmatpush1.msra.mxu0 0.0
  %3438 = vmatprep.subr.mxu0 0.0
  %3439 = vmatpush1.msra.mxu0 0.0
  %3440 = vmatprep.subr.mxu0 0.0
  %3441 = vmatpush1.msra.mxu0 0.0
  %3442 = vmatprep.subr.mxu0 0.0
  %3443 = vmatpush1.msra.mxu0 0.0
  %3444 = vmatprep.subr.mxu0 0.0
  %3445 = vmatpush1.msra.mxu0 0.0
  %3446 = vmatprep.subr.mxu0 0.0
  %3447 = vmatpush1.msra.mxu0 0.0
  %3448 = vmatprep.subr.mxu0 0.0
  %3449 = vmatpush1.msra.mxu0 0.0
  %3450 = vmatprep.subr.mxu0 0.0
  %3451 = vmatpush1.msra.mxu0 0.0
  %3452 = vmatprep.subr.mxu0 0.0
  %3453 = vmatpush1.msra.mxu0 0.0
  %3454 = vmatprep.subr.mxu0 0.0
  %3455 = vmatpush1.msra.mxu0 0.0
  %3456 = vmatprep.subr.mxu0 0.0
  %3457 = vmatpush1.msra.mxu0 0.0
  %3458 = vmatprep.subr.mxu0 0.0
  %3459 = vmatpush1.msra.mxu0 %v3419
  %3460 = vmatprep.subr.mxu0 0.0
  %3461 = vmatpush1.msra.mxu0 %v3418
  %3462 = vmatprep.subr.mxu0 0.0
  %3463 = vmatpush1.msra.mxu0 %v3417
  %3464 = vmatprep.subr.mxu0 0.0
  %3465 = vmatpush1.msra.mxu0 %v3416
  %3466 = vmatprep.subr.mxu0 0.0
  %3467 = vmatpush2.msra.mxu0 0.0
  %3468 = vmatprep.subr.mxu0 0.0
  %3469 = vmatpush2.msra.mxu0 0.0
  %3470 = vmatprep.subr.mxu0 0.0
  %3471 = vmatpush2.msra.mxu0 0.0
  %3472 = vmatprep.subr.mxu0 0.0
  %3473 = vmatpush2.msra.mxu0 0.0
  %3474 = vmatprep.subr.mxu0 0.0
  %3475 = vmatpush2.msra.mxu0 0.0
  %3476 = vmatprep.subr.mxu0 0.0
  %3477 = vmatpush2.msra.mxu0 0.0
  %3478 = vmatprep.subr.mxu0 0.0
  %3479 = vmatpush2.msra.mxu0 0.0
  %3480 = vmatprep.subr.mxu0 0.0
  %3481 = vmatpush2.msra.mxu0 0.0
  %3482 = vmatprep.subr.mxu0 0.0
  %3483 = vmatpush2.msra.mxu0 0.0
  %3484 = vmatprep.subr.mxu0 0.0
  %3485 = vmatpush2.msra.mxu0 0.0
  %3486 = vmatprep.subr.mxu0 0.0
  %3487 = vmatpush2.msra.mxu0 0.0
  %3488 = vmatprep.subr.mxu0 0.0
  %3489 = vmatpush2.msra.mxu0 0.0
  %3490 = vmatprep.subr.mxu0 0.0
  %3491 = vmatpush2.msra.mxu0 0.0
  %3492 = vmatprep.subr.mxu0 0.0
  %3493 = vmatpush2.msra.mxu0 0.0
  %3494 = vmatprep.subr.mxu0 0.0
  %3495 = vmatpush2.msra.mxu0 0.0
  %3496 = vmatprep.subr.mxu0 0.0
  %3497 = vmatpush2.msra.mxu0 0.0
  %3498 = vmatprep.mubr.f32.mxu0 0.0
  %3499 = vmatmul.mubr.f32.gmra.mxu0 %v3429
  %v3500 = vpop.f32.mrf.mxu0
  %v3501 = vadd.f32 %v3426, %v3500
  %v3502 = vpop.f32.mrf.mxu0
  %3503 = vmatprep.mubr.f32.mxu0 0.0
  %3504 = vmatmul.mubr.f32.gmra.mxu0 %v3432
  %v3505 = vpop.f32.mrf.mxu0
  %v3506 = vadd.f32 %v3426, %v3505
  %v3507 = vpop.f32.mrf.mxu0
  %3508 = vdwg.mxu0
  %v3509 = vadd.f32 %v1967, %v3501
  %v3510 = vadd.f32 %v1968, %v3506
  %s3511 = scalar_lea.vmem %s7, 1
  %v3512 = vld [vmem:[%s3511] sm:$0x1]
  %s3513 = scalar_lea.vmem %s8, 1
  %v3514 = vld [vmem:[%s3513] sm:$0x1]
  %v3515 = vsel %vm155, %v3509, 0.0
  %3516 = vadd.xlane.f32.xlu0 %v3515
  %v3517 = vpop.xlane.xlu0 %3516
  %v3518 = vsel %vm155, %v3510, 0.0
  %3519 = vadd.xlane.f32.xlu0 %v3518
  %v3520 = vpop.xlane.xlu0 %3519
  %v3521 = vmul.f32 %v3517, %v1695
  %v3522 = vmul.f32 %v3520, %v1695
  %v3523 = vsub.f32 %v3509, %v3521
  %v3524 = vsub.f32 %v3510, %v3522
  %v3525 = vmul.f32 %v3523, %v3523
  %v3526 = vmul.f32 %v3524, %v3524
  %v3527 = vsel %vm155, %v3525, 0.0
  %3528 = vadd.xlane.f32.xlu0 %v3527
  %v3529 = vpop.xlane.xlu0 %3528
  %v3530 = vsel %vm155, %v3526, 0.0
  %3531 = vadd.xlane.f32.xlu0 %v3530
  %v3532 = vpop.xlane.xlu0 %3531
  %v3533 = vmul.f32 %v3529, %v1695
  %v3534 = vmul.f32 %v3532, %v1695
  %v3535 = vadd.f32 %v3533, 1e-05
  %v3536 = vadd.f32 %v3534, 1e-05
  %v3537 = vrsqrt.pop %v3535
  %v3538 = vrsqrt.pop %v3536
  %v3539 = vmul.f32 %v3523, %v3537
  %v3540 = vmul.f32 %v3524, %v3538
  %v3542 = vlaneseq
  %v3543 = vshrl.u32 %v3542, 7
  %v3544 = vsub.s32 0, %v3543
  %v3545 = vrot.slane %v3512, %v3544
  %v3547 = vmul.f32 %v3539, %v3545
  %v3548 = vmul.f32 %v3540, %v3545
  %v3550 = vlaneseq
  %v3551 = vshrl.u32 %v3550, 7
  %v3552 = vsub.s32 0, %v3551
  %v3553 = vrot.slane %v3514, %v3552
  %v3555 = vadd.f32 %v3547, %v3553
  %v3556 = vadd.f32 %v3548, %v3553
  %s3557 = scalar_lea.vmem %s9, 32
  %v3558 = vld [vmem:[%s3557] sm:$0xff]
  %v3559 = vld [vmem:[%s3557 + $0x8] sm:$0xff]
  %v3560 = vld [vmem:[%s3557 + $0x10] sm:$0xff]
  %v3561 = vld [vmem:[%s3557 + $0x18] sm:$0xff]
  %s3562 = scalar_lea.vmem %s10, 1
  %v3563 = vld [vmem:[%s3562] sm:$0x1]
  %v3565 = vlaneseq
  %v3566 = vshrl.u32 %v3565, 7
  %v3567 = vsub.s32 0, %v3566
  %v3568 = vrot.slane %v3563, %v3567
  %v3571 = vsel %vm155, %v3555, 0
  %v3574 = vsel %vm155, %v3556, 0
  %3576 = vmatprep.subr.mxu0 0.0
  %3577 = vmatpush1.msra.mxu0 0.0
  %3578 = vmatprep.subr.mxu0 0.0
  %3579 = vmatpush1.msra.mxu0 0.0
  %3580 = vmatprep.subr.mxu0 0.0
  %3581 = vmatpush1.msra.mxu0 0.0
  %3582 = vmatprep.subr.mxu0 0.0
  %3583 = vmatpush1.msra.mxu0 0.0
  %3584 = vmatprep.subr.mxu0 0.0
  %3585 = vmatpush1.msra.mxu0 0.0
  %3586 = vmatprep.subr.mxu0 0.0
  %3587 = vmatpush1.msra.mxu0 0.0
  %3588 = vmatprep.subr.mxu0 0.0
  %3589 = vmatpush1.msra.mxu0 0.0
  %3590 = vmatprep.subr.mxu0 0.0
  %3591 = vmatpush1.msra.mxu0 0.0
  %3592 = vmatprep.subr.mxu0 0.0
  %3593 = vmatpush1.msra.mxu0 0.0
  %3594 = vmatprep.subr.mxu0 0.0
  %3595 = vmatpush1.msra.mxu0 0.0
  %3596 = vmatprep.subr.mxu0 0.0
  %3597 = vmatpush1.msra.mxu0 0.0
  %3598 = vmatprep.subr.mxu0 0.0
  %3599 = vmatpush1.msra.mxu0 0.0
  %3600 = vmatprep.subr.mxu0 0.0
  %3601 = vmatpush1.msra.mxu0 %v3561
  %3602 = vmatprep.subr.mxu0 0.0
  %3603 = vmatpush1.msra.mxu0 %v3560
  %3604 = vmatprep.subr.mxu0 0.0
  %3605 = vmatpush1.msra.mxu0 %v3559
  %3606 = vmatprep.subr.mxu0 0.0
  %3607 = vmatpush1.msra.mxu0 %v3558
  %3608 = vmatprep.subr.mxu0 0.0
  %3609 = vmatpush2.msra.mxu0 0.0
  %3610 = vmatprep.subr.mxu0 0.0
  %3611 = vmatpush2.msra.mxu0 0.0
  %3612 = vmatprep.subr.mxu0 0.0
  %3613 = vmatpush2.msra.mxu0 0.0
  %3614 = vmatprep.subr.mxu0 0.0
  %3615 = vmatpush2.msra.mxu0 0.0
  %3616 = vmatprep.subr.mxu0 0.0
  %3617 = vmatpush2.msra.mxu0 0.0
  %3618 = vmatprep.subr.mxu0 0.0
  %3619 = vmatpush2.msra.mxu0 0.0
  %3620 = vmatprep.subr.mxu0 0.0
  %3621 = vmatpush2.msra.mxu0 0.0
  %3622 = vmatprep.subr.mxu0 0.0
  %3623 = vmatpush2.msra.mxu0 0.0
  %3624 = vmatprep.subr.mxu0 0.0
  %3625 = vmatpush2.msra.mxu0 0.0
  %3626 = vmatprep.subr.mxu0 0.0
  %3627 = vmatpush2.msra.mxu0 0.0
  %3628 = vmatprep.subr.mxu0 0.0
  %3629 = vmatpush2.msra.mxu0 0.0
  %3630 = vmatprep.subr.mxu0 0.0
  %3631 = vmatpush2.msra.mxu0 0.0
  %3632 = vmatprep.subr.mxu0 0.0
  %3633 = vmatpush2.msra.mxu0 0.0
  %3634 = vmatprep.subr.mxu0 0.0
  %3635 = vmatpush2.msra.mxu0 0.0
  %3636 = vmatprep.subr.mxu0 0.0
  %3637 = vmatpush2.msra.mxu0 0.0
  %3638 = vmatprep.subr.mxu0 0.0
  %3639 = vmatpush2.msra.mxu0 0.0
  %3640 = vmatprep.mubr.f32.mxu0 0.0
  %3641 = vmatmul.mubr.f32.gmra.mxu0 %v3571
  %v3642 = vpop.f32.mrf.mxu0
  %v3643 = vadd.f32 %v3568, %v3642
  %v3644 = vpop.f32.mrf.mxu0
  %3645 = vmatprep.mubr.f32.mxu0 0.0
  %3646 = vmatmul.mubr.f32.gmra.mxu0 %v3574
  %v3647 = vpop.f32.mrf.mxu0
  %v3648 = vadd.f32 %v3568, %v3647
  %v3649 = vpop.f32.mrf.mxu0
  %3650 = vdwg.mxu0
  %v3651 = vmax.f32 %v3643, 0.0
  %v3652 = vmax.f32 %v3648, 0.0
  %s3653 = scalar_lea.vmem %s11, 64
  %v3654 = vld [vmem:[%s3653] sm:$0xff]
  %v3655 = vld [vmem:[%s3653 + $0x8] sm:$0xff]
  %v3656 = vld [vmem:[%s3653 + $0x10] sm:$0xff]
  %v3657 = vld [vmem:[%s3653 + $0x18] sm:$0xff]
  %v3658 = vld [vmem:[%s3653 + $0x20] sm:$0xff]
  %v3659 = vld [vmem:[%s3653 + $0x28] sm:$0xff]
  %v3660 = vld [vmem:[%s3653 + $0x30] sm:$0xff]
  %v3661 = vld [vmem:[%s3653 + $0x38] sm:$0xff]
  %s3662 = scalar_lea.vmem %s12, 1
  %v3663 = vld [vmem:[%s3662] sm:$0x1]
  %v3665 = vlaneseq
  %v3666 = vshrl.u32 %v3665, 7
  %v3667 = vsub.s32 0, %v3666
  %v3668 = vrot.slane %v3663, %v3667
  %v3671 = vsel %vm1841, %v3651, 0
  %v3674 = vsel %vm1841, %v3652, 0
  %3676 = vmatprep.subr.mxu0 0.0
  %3677 = vmatpush1.msra.mxu0 0.0
  %3678 = vmatprep.subr.mxu0 0.0
  %3679 = vmatpush1.msra.mxu0 0.0
  %3680 = vmatprep.subr.mxu0 0.0
  %3681 = vmatpush1.msra.mxu0 0.0
  %3682 = vmatprep.subr.mxu0 0.0
  %3683 = vmatpush1.msra.mxu0 0.0
  %3684 = vmatprep.subr.mxu0 0.0
  %3685 = vmatpush1.msra.mxu0 0.0
  %3686 = vmatprep.subr.mxu0 0.0
  %3687 = vmatpush1.msra.mxu0 0.0
  %3688 = vmatprep.subr.mxu0 0.0
  %3689 = vmatpush1.msra.mxu0 0.0
  %3690 = vmatprep.subr.mxu0 0.0
  %3691 = vmatpush1.msra.mxu0 0.0
  %3692 = vmatprep.subr.mxu0 0.0
  %3693 = vmatpush1.msra.mxu0 %v3661
  %3694 = vmatprep.subr.mxu0 0.0
  %3695 = vmatpush1.msra.mxu0 %v3660
  %3696 = vmatprep.subr.mxu0 0.0
  %3697 = vmatpush1.msra.mxu0 %v3659
  %3698 = vmatprep.subr.mxu0 0.0
  %3699 = vmatpush1.msra.mxu0 %v3658
  %3700 = vmatprep.subr.mxu0 0.0
  %3701 = vmatpush1.msra.mxu0 %v3657
  %3702 = vmatprep.subr.mxu0 0.0
  %3703 = vmatpush1.msra.mxu0 %v3656
  %3704 = vmatprep.subr.mxu0 0.0
  %3705 = vmatpush1.msra.mxu0 %v3655
  %3706 = vmatprep.subr.mxu0 0.0
  %3707 = vmatpush1.msra.mxu0 %v3654
  %3708 = vmatprep.subr.mxu0 0.0
  %3709 = vmatpush2.msra.mxu0 0.0
  %3710 = vmatprep.subr.mxu0 0.0
  %3711 = vmatpush2.msra.mxu0 0.0
  %3712 = vmatprep.subr.mxu0 0.0
  %3713 = vmatpush2.msra.mxu0 0.0
  %3714 = vmatprep.subr.mxu0 0.0
  %3715 = vmatpush2.msra.mxu0 0.0
  %3716 = vmatprep.subr.mxu0 0.0
  %3717 = vmatpush2.msra.mxu0 0.0
  %3718 = vmatprep.subr.mxu0 0.0
  %3719 = vmatpush2.msra.mxu0 0.0
  %3720 = vmatprep.subr.mxu0 0.0
  %3721 = vmatpush2.msra.mxu0 0.0
  %3722 = vmatprep.subr.mxu0 0.0
  %3723 = vmatpush2.msra.mxu0 0.0
  %3724 = vmatprep.subr.mxu0 0.0
  %3725 = vmatpush2.msra.mxu0 0.0
  %3726 = vmatprep.subr.mxu0 0.0
  %3727 = vmatpush2.msra.mxu0 0.0
  %3728 = vmatprep.subr.mxu0 0.0
  %3729 = vmatpush2.msra.mxu0 0.0
  %3730 = vmatprep.subr.mxu0 0.0
  %3731 = vmatpush2.msra.mxu0 0.0
  %3732 = vmatprep.subr.mxu0 0.0
  %3733 = vmatpush2.msra.mxu0 0.0
  %3734 = vmatprep.subr.mxu0 0.0
  %3735 = vmatpush2.msra.mxu0 0.0
  %3736 = vmatprep.subr.mxu0 0.0
  %3737 = vmatpush2.msra.mxu0 0.0
  %3738 = vmatprep.subr.mxu0 0.0
  %3739 = vmatpush2.msra.mxu0 0.0
  %3740 = vmatprep.mubr.f32.mxu0 0.0
  %3741 = vmatmul.mubr.f32.gmra.mxu0 %v3671
  %v3742 = vpop.f32.mrf.mxu0
  %v3743 = vadd.f32 %v3668, %v3742
  %v3744 = vpop.f32.mrf.mxu0
  %3745 = vmatprep.mubr.f32.mxu0 0.0
  %3746 = vmatmul.mubr.f32.gmra.mxu0 %v3674
  %v3747 = vpop.f32.mrf.mxu0
  %v3748 = vadd.f32 %v3668, %v3747
  %v3749 = vpop.f32.mrf.mxu0
  %3750 = vdwg.mxu0
  %v3751 = vadd.f32 %v3555, %v3743
  %v3752 = vadd.f32 %v3556, %v3748
  %s3753 = scalar_lea.vmem %s13, 1
  %v3754 = vld [vmem:[%s3753] sm:$0x1]
  %s3755 = scalar_lea.vmem %s14, 1
  %v3756 = vld [vmem:[%s3755] sm:$0x1]
  %v3757 = vsel %vm155, %v3751, 0.0
  %3758 = vadd.xlane.f32.xlu0 %v3757
  %v3759 = vpop.xlane.xlu0 %3758
  %v3760 = vsel %vm155, %v3752, 0.0
  %3761 = vadd.xlane.f32.xlu0 %v3760
  %v3762 = vpop.xlane.xlu0 %3761
  %v3763 = vmul.f32 %v3759, %v1695
  %v3764 = vmul.f32 %v3762, %v1695
  %v3765 = vsub.f32 %v3751, %v3763
  %v3766 = vsub.f32 %v3752, %v3764
  %v3767 = vmul.f32 %v3765, %v3765
  %v3768 = vmul.f32 %v3766, %v3766
  %v3769 = vsel %vm155, %v3767, 0.0
  %3770 = vadd.xlane.f32.xlu0 %v3769
  %v3771 = vpop.xlane.xlu0 %3770
  %v3772 = vsel %vm155, %v3768, 0.0
  %3773 = vadd.xlane.f32.xlu0 %v3772
  %v3774 = vpop.xlane.xlu0 %3773
  %v3775 = vmul.f32 %v3771, %v1695
  %v3776 = vmul.f32 %v3774, %v1695
  %v3777 = vadd.f32 %v3775, 1e-05
  %v3778 = vadd.f32 %v3776, 1e-05
  %v3779 = vrsqrt.pop %v3777
  %v3780 = vrsqrt.pop %v3778
  %v3781 = vmul.f32 %v3765, %v3779
  %v3782 = vmul.f32 %v3766, %v3780
  %v3784 = vlaneseq
  %v3785 = vshrl.u32 %v3784, 7
  %v3786 = vsub.s32 0, %v3785
  %v3787 = vrot.slane %v3754, %v3786
  %v3789 = vmul.f32 %v3781, %v3787
  %v3790 = vmul.f32 %v3782, %v3787
  %v3792 = vlaneseq
  %v3793 = vshrl.u32 %v3792, 7
  %v3794 = vsub.s32 0, %v3793
  %v3795 = vrot.slane %v3756, %v3794
  %v3797 = vadd.f32 %v3789, %v3795
  %v3798 = vadd.f32 %v3790, %v3795
  %v3799 = vld [vmem:[%s15] sm:$0xff]
  %v3800 = vld [vmem:[%s15 + $0x8] sm:$0xff]
  %v3801 = vld [vmem:[%s15 + $0x10] sm:$0xff]
  %v3802 = vld [vmem:[%s15 + $0x18] sm:$0xff]
  %v3804 = vsel %vm155, %v3797, 0
  %v3807 = vsel %vm155, %v3798, 0
  %3809 = vmatprep.subr.mxu0 0.0
  %3810 = vmatpush1.msra.mxu0 0.0
  %3811 = vmatprep.subr.mxu0 0.0
  %3812 = vmatpush1.msra.mxu0 0.0
  %3813 = vmatprep.subr.mxu0 0.0
  %3814 = vmatpush1.msra.mxu0 0.0
  %3815 = vmatprep.subr.mxu0 0.0
  %3816 = vmatpush1.msra.mxu0 0.0
  %3817 = vmatprep.subr.mxu0 0.0
  %3818 = vmatpush1.msra.mxu0 0.0
  %3819 = vmatprep.subr.mxu0 0.0
  %3820 = vmatpush1.msra.mxu0 0.0
  %3821 = vmatprep.subr.mxu0 0.0
  %3822 = vmatpush1.msra.mxu0 0.0
  %3823 = vmatprep.subr.mxu0 0.0
  %3824 = vmatpush1.msra.mxu0 0.0
  %3825 = vmatprep.subr.mxu0 0.0
  %3826 = vmatpush1.msra.mxu0 0.0
  %3827 = vmatprep.subr.mxu0 0.0
  %3828 = vmatpush1.msra.mxu0 0.0
  %3829 = vmatprep.subr.mxu0 0.0
  %3830 = vmatpush1.msra.mxu0 0.0
  %3831 = vmatprep.subr.mxu0 0.0
  %3832 = vmatpush1.msra.mxu0 0.0
  %3833 = vmatprep.subr.mxu0 0.0
  %3834 = vmatpush1.msra.mxu0 %v3802
  %3835 = vmatprep.subr.mxu0 0.0
  %3836 = vmatpush1.msra.mxu0 %v3801
  %3837 = vmatprep.subr.mxu0 0.0
  %3838 = vmatpush1.msra.mxu0 %v3800
  %3839 = vmatprep.subr.mxu0 0.0
  %3840 = vmatpush1.msra.mxu0 %v3799
  %3841 = vmatprep.subr.mxu0 0.0
  %3842 = vmatpush2.msra.mxu0 0.0
  %3843 = vmatprep.subr.mxu0 0.0
  %3844 = vmatpush2.msra.mxu0 0.0
  %3845 = vmatprep.subr.mxu0 0.0
  %3846 = vmatpush2.msra.mxu0 0.0
  %3847 = vmatprep.subr.mxu0 0.0
  %3848 = vmatpush2.msra.mxu0 0.0
  %3849 = vmatprep.subr.mxu0 0.0
  %3850 = vmatpush2.msra.mxu0 0.0
  %3851 = vmatprep.subr.mxu0 0.0
  %3852 = vmatpush2.msra.mxu0 0.0
  %3853 = vmatprep.subr.mxu0 0.0
  %3854 = vmatpush2.msra.mxu0 0.0
  %3855 = vmatprep.subr.mxu0 0.0
  %3856 = vmatpush2.msra.mxu0 0.0
  %3857 = vmatprep.subr.mxu0 0.0
  %3858 = vmatpush2.msra.mxu0 0.0
  %3859 = vmatprep.subr.mxu0 0.0
  %3860 = vmatpush2.msra.mxu0 0.0
  %3861 = vmatprep.subr.mxu0 0.0
  %3862 = vmatpush2.msra.mxu0 0.0
  %3863 = vmatprep.subr.mxu0 0.0
  %3864 = vmatpush2.msra.mxu0 0.0
  %3865 = vmatprep.subr.mxu0 0.0
  %3866 = vmatpush2.msra.mxu0 0.0
  %3867 = vmatprep.subr.mxu0 0.0
  %3868 = vmatpush2.msra.mxu0 0.0
  %3869 = vmatprep.subr.mxu0 0.0
  %3870 = vmatpush2.msra.mxu0 0.0
  %3871 = vmatprep.subr.mxu0 0.0
  %3872 = vmatpush2.msra.mxu0 0.0
  %3873 = vmatprep.mubr.f32.mxu0 0.0
  %3874 = vmatmul.mubr.f32.gmra.mxu0 %v3804
  %v3875 = vpop.f32.mrf.mxu0
  %v3876 = vadd.f32 0.0, %v3875
  %v3877 = vpop.f32.mrf.mxu0
  %3878 = vmatprep.mubr.f32.mxu0 0.0
  %3879 = vmatmul.mubr.f32.gmra.mxu0 %v3807
  %v3880 = vpop.f32.mrf.mxu0
  %v3881 = vadd.f32 0.0, %v3880
  %v3882 = vpop.f32.mrf.mxu0
  %3883 = vdwg.mxu0
  %vm3884 = vcmask 15360
  %3885 = vst.msk [vmem:[%s16] sm:$0xff] %vm3884, %v3876
  %3886 = vst.msk [vmem:[%s16 + $0x8] sm:$0xff] %vm3884, %v3881
  // Predicated region
  $region66: #{discriminator_forward.1} parent=0 // pred_check
    _
  $region67: #{discriminator_forward.1} parent=0 // pred_check_branch
    %3888 = sbr.rel (0) target = $region69
  $region68: #{discriminator_forward.1} parent=0 // pred_region
    _
  $region69: #{discriminator_forward.1} parent=0 // pred_fallthru
    _
  // Predicated region
  $region70: #{discriminator_forward.1} parent=0 // pred_check
    _
  $region71: #{discriminator_forward.1} parent=0 // pred_check_branch
    %3890 = sbr.rel (0) target = $region73
  $region72: #{discriminator_forward.1} parent=0 // pred_region
    _
  $region73: #{discriminator_forward.1} parent=0 // pred_fallthru
    _

</llo_original>
